<compile_context>
chip_gen: v5e
topology: v5e:2x2
jax: 0.10.0
libtpu: 0.0.40
codegen_flags: <defaults>
</compile_context>

<pallas_src>
import jax
import jax.numpy as jnp
from jax import lax
from jax.experimental import pallas as pl
from jax.experimental.pallas import tpu as pltpu

D_INPUT = 3
D_FILTER = 128
N_LAYERS = 2          # => one (3->128) layer + one (128->128) layer
D_OUT = 4             # no viewdirs branch -> Linear(d_filter, 4)
SUB_TM = 256          # inner sub-chunk: (256,128) f32 activations = 32 vregs


def nerf_kernel(x_ref, w0_ref, b0_ref, w1_ref, b1_ref, wot_ref, bo_ref, o_ref):
    tm = x_ref.shape[0]
    n_sub = tm // SUB_TM

    # Loop-invariant loads, hoisted out of the unrolled inner loop.
    b0 = b0_ref[...]                                   # (1, 128) f32
    w0 = w0_ref[...]                                   # (3, 128) f32
    w0_rows = [w0[r:r + 1, :] for r in range(D_INPUT)]  # 3 x (1, 128)
    w1 = w1_ref[...]                                   # (128, 128) bf16
    b1 = b1_ref[...]                                   # (1, 128) f32
    wot = wot_ref[...]                                 # (4, 128) f32 (= wo.T)
    bo = bo_ref[...]                                   # (1, 4) f32

    def body(c, carry):
        start = pl.multiple_of(c * SUB_TM, SUB_TM)
        rows = pl.ds(start, SUB_TM)
        x = x_ref[rows, :]                             # (SUB_TM, 3)

        # Layer 0 (K=3): VPU lane-broadcast multiplies, keep the MXU free.
        h = b0
        for r in range(D_INPUT):
            h = h + x[:, r:r + 1] * w0_rows[r]         # (SUB_TM,1)*(1,128)
        h = jnp.maximum(h, 0.0)                        # ReLU (layer 0)

        # Layer 1 (128x128): the only MXU matmul, bf16 operands, f32 accumulate.
        h = jnp.dot(h.astype(jnp.bfloat16), w1,
                    preferred_element_type=jnp.float32)
        h = jnp.maximum(h + b1, 0.0)                   # ReLU (layer 1)

        # Output layer (N=4): VPU multiplies + XLU lane reductions (MXU would
        # pay full result-pop cost at 4/128 lane utilization).
        cols = [jnp.sum(h * wot[j:j + 1, :], axis=-1, keepdims=True)
                for j in range(D_OUT)]
        out = jnp.concatenate(cols, axis=-1) + bo      # (SUB_TM, 4)
        o_ref[rows, :] = out.astype(o_ref.dtype)       # no activation on output
        return carry

    lax.fori_loop(0, n_sub, body, 0, unroll=True)


def nerf_forward(x, params, *, tm=1024):
    """x: (N, 3) float32. params: dict of f32 weights/biases. Returns (N, 4)."""
    N, d_in = x.shape
    assert d_in == D_INPUT

    # Keep the grid >= 2 steps when possible (v7x megacore) while keeping the
    # tile a multiple of SUB_TM; ragged batches are zero-padded to the tile.
    tm = max(SUB_TM, min(tm, pl.cdiv(N, 2 * SUB_TM) * SUB_TM))
    assert tm % SUB_TM == 0

    n_pad = pl.cdiv(N, tm) * tm
    if n_pad != N:
        x = jnp.pad(x, ((0, n_pad - N), (0, 0)))

    w0 = params["w0"].astype(jnp.float32)              # (3, 128)
    b0 = params["b0"].astype(jnp.float32)              # (1, 128)
    w1 = params["w1"].astype(jnp.bfloat16)             # (128, 128) bf16 operand
    b1 = params["b1"].astype(jnp.float32)              # (1, 128)
    wo_t = params["wo"].T.astype(jnp.float32)          # (4, 128) lane-dense rows
    bo = params["bo"].astype(jnp.float32)              # (1, 4)

    grid = (n_pad // tm,)
    out = pl.pallas_call(
        nerf_kernel,
        out_shape=jax.ShapeDtypeStruct((n_pad, D_OUT), x.dtype),
        grid_spec=pl.GridSpec(
            grid=grid,
            in_specs=[
                pl.BlockSpec((tm, D_INPUT), lambda i: (i, 0)),          # x tile
                pl.BlockSpec((D_INPUT, D_FILTER), lambda i: (0, 0)),    # w0
                pl.BlockSpec((1, D_FILTER), lambda i: (0, 0)),          # b0
                pl.BlockSpec((D_FILTER, D_FILTER), lambda i: (0, 0)),   # w1 (bf16)
                pl.BlockSpec((1, D_FILTER), lambda i: (0, 0)),          # b1
                pl.BlockSpec((D_OUT, D_FILTER), lambda i: (0, 0)),      # wo.T
                pl.BlockSpec((1, D_OUT), lambda i: (0, 0)),             # bo
            ],
            out_specs=pl.BlockSpec((tm, D_OUT), lambda i: (i, 0)),
        ),
        compiler_params=pltpu.CompilerParams(
            dimension_semantics=("parallel",)),
    )(x, w0, b0, w1, b1, wo_t, bo)
    return out[:N]


def nerf_reference(x, params):
    h = jnp.maximum(x @ params["w0"] + params["b0"], 0.0)
    h = jnp.maximum(h @ params["w1"] + params["b1"], 0.0)
    return h @ params["wo"] + params["bo"]


def init_params(key):
    k0, k1, k2, k3, k4, k5 = jax.random.split(key, 6)
    # Deterministic synthetic init (scaled normals); shapes follow the module.
    return {
        "w0": jax.random.normal(k0, (D_INPUT, D_FILTER), jnp.float32) * 0.1,
        "b0": jax.random.normal(k1, (1, D_FILTER), jnp.float32) * 0.01,
        "w1": jax.random.normal(k2, (D_FILTER, D_FILTER), jnp.float32) * 0.1,
        "b1": jax.random.normal(k3, (1, D_FILTER), jnp.float32) * 0.01,
        "wo": jax.random.normal(k4, (D_FILTER, D_OUT), jnp.float32) * 0.1,
        "bo": jax.random.normal(k5, (1, D_OUT), jnp.float32) * 0.01,
    }


if __name__ == "__main__":
    key = jax.random.PRNGKey(0)
    kx, kp = jax.random.split(key)

    # Small, ragged batch (not a multiple of the tile) to exercise padding;
    # shrinks to tm=1024 -> grid of 2 steps.
    N = 2000
    x = jax.random.normal(kx, (N, D_INPUT), jnp.float32)
    params = init_params(kp)

    out = nerf_forward(x, params)
    out = jax.block_until_ready(out)

    ref = nerf_reference(x, params)
    assert out.shape == (N, D_OUT)
    # bf16 operands on the middle matmul (f32 accumulation) -> relaxed tolerance.
    assert jnp.allclose(out, ref, atol=2e-2, rtol=2e-2)

    print("KERNEL_OK")
</pallas_src>

<mosaic_0001>
module attributes {stable_mosaic.version = 11 : i64} {
  func.func @nerf_kernel(%arg0: i32, %arg1: memref<1024x3xf32, #tpu.memory_space<vmem>>, %arg2: memref<3x128xf32, #tpu.memory_space<vmem>>, %arg3: memref<1x128xf32, #tpu.memory_space<vmem>>, %arg4: memref<128x128xbf16, #tpu.memory_space<vmem>>, %arg5: memref<1x128xf32, #tpu.memory_space<vmem>>, %arg6: memref<4x128xf32, #tpu.memory_space<vmem>>, %arg7: memref<1x4xf32, #tpu.memory_space<vmem>>, %arg8: memref<1024x4xf32, #tpu.memory_space<vmem>>) attributes {dimension_semantics = [#tpu.dimension_semantics<parallel>], iteration_bounds = array<i64: 2>, scalar_prefetch = 0 : i64, scratch_operands = 0 : i64, tpu.core_type = #tpu.core_type<tc>, window_params = [{transform_indices = @transform_0, window_bounds = array<i64: 1024, 3>}, {pipeline_mode = #tpu.pipeline_mode<synchronous>, transform_indices = @transform_1, window_bounds = array<i64: 3, 128>}, {pipeline_mode = #tpu.pipeline_mode<synchronous>, transform_indices = @transform_2, window_bounds = array<i64: 1, 128>}, {pipeline_mode = #tpu.pipeline_mode<synchronous>, transform_indices = @transform_3, window_bounds = array<i64: 128, 128>}, {pipeline_mode = #tpu.pipeline_mode<synchronous>, transform_indices = @transform_4, window_bounds = array<i64: 1, 128>}, {pipeline_mode = #tpu.pipeline_mode<synchronous>, transform_indices = @transform_5, window_bounds = array<i64: 4, 128>}, {pipeline_mode = #tpu.pipeline_mode<synchronous>, transform_indices = @transform_6, window_bounds = array<i64: 1, 4>}, {transform_indices = @transform_7, window_bounds = array<i64: 1024, 4>}]} {
    %c0 = arith.constant 0 : index
    %c0_0 = arith.constant 0 : index
    %0 = vector.load %arg3[%c0, %c0_0] : memref<1x128xf32, #tpu.memory_space<vmem>>, vector<1x128xf32>
    %c0_1 = arith.constant 0 : index
    %c0_2 = arith.constant 0 : index
    %1 = vector.load %arg2[%c0_1, %c0_2] : memref<3x128xf32, #tpu.memory_space<vmem>>, vector<3x128xf32>
    %2 = vector.extract_strided_slice %1 {offsets = [0, 0], sizes = [1, 128], strides = [1, 1]} : vector<3x128xf32> to vector<1x128xf32>
    %3 = vector.extract_strided_slice %1 {offsets = [1, 0], sizes = [1, 128], strides = [1, 1]} : vector<3x128xf32> to vector<1x128xf32>
    %4 = vector.extract_strided_slice %1 {offsets = [2, 0], sizes = [1, 128], strides = [1, 1]} : vector<3x128xf32> to vector<1x128xf32>
    %c0_3 = arith.constant 0 : index
    %c0_4 = arith.constant 0 : index
    %5 = vector.load %arg4[%c0_3, %c0_4] : memref<128x128xbf16, #tpu.memory_space<vmem>>, vector<128x128xbf16>
    %c0_5 = arith.constant 0 : index
    %c0_6 = arith.constant 0 : index
    %6 = vector.load %arg5[%c0_5, %c0_6] : memref<1x128xf32, #tpu.memory_space<vmem>>, vector<1x128xf32>
    %c0_7 = arith.constant 0 : index
    %c0_8 = arith.constant 0 : index
    %7 = vector.load %arg6[%c0_7, %c0_8] : memref<4x128xf32, #tpu.memory_space<vmem>>, vector<4x128xf32>
    %c0_9 = arith.constant 0 : index
    %c0_10 = arith.constant 0 : index
    %8 = vector.load %arg7[%c0_9, %c0_10] : memref<1x4xf32, #tpu.memory_space<vmem>>, vector<1x4xf32>
    %c0_i32 = arith.constant 0 : i32
    %c256_i32 = arith.constant 256 : i32
    %9 = arith.muli %c0_i32, %c256_i32 : i32
    %10 = tpu.assume_multiple %9, 256 : i32
    %11 = arith.index_cast %10 : i32 to index
    %c0_11 = arith.constant 0 : index
    %12 = vector.load %arg1[%11, %c0_11] : memref<1024x3xf32, #tpu.memory_space<vmem>>, vector<256x3xf32>
    %13 = vector.extract_strided_slice %12 {offsets = [0, 0], sizes = [256, 1], strides = [1, 1]} : vector<256x3xf32> to vector<256x1xf32>
    %14 = vector.broadcast %13 : vector<256x1xf32> to vector<256x128xf32>
    %15 = vector.broadcast %2 : vector<1x128xf32> to vector<256x128xf32>
    %16 = arith.mulf %14, %15 : vector<256x128xf32>
    %17 = vector.broadcast %0 : vector<1x128xf32> to vector<256x128xf32>
    %18 = arith.addf %17, %16 : vector<256x128xf32>
    %19 = vector.extract_strided_slice %12 {offsets = [0, 1], sizes = [256, 1], strides = [1, 1]} : vector<256x3xf32> to vector<256x1xf32>
    %20 = vector.broadcast %19 : vector<256x1xf32> to vector<256x128xf32>
    %21 = vector.broadcast %3 : vector<1x128xf32> to vector<256x128xf32>
    %22 = arith.mulf %20, %21 : vector<256x128xf32>
    %23 = arith.addf %18, %22 : vector<256x128xf32>
    %24 = vector.extract_strided_slice %12 {offsets = [0, 2], sizes = [256, 1], strides = [1, 1]} : vector<256x3xf32> to vector<256x1xf32>
    %25 = vector.broadcast %24 : vector<256x1xf32> to vector<256x128xf32>
    %26 = vector.broadcast %4 : vector<1x128xf32> to vector<256x128xf32>
    %27 = arith.mulf %25, %26 : vector<256x128xf32>
    %28 = arith.addf %23, %27 : vector<256x128xf32>
    %cst = arith.constant 0.000000e+00 : f32
    %29 = vector.broadcast %cst : f32 to vector<256x128xf32>
    %30 = arith.maximumf %28, %29 : vector<256x128xf32>
    %31 = arith.truncf %30 : vector<256x128xf32> to vector<256x128xbf16>
    %cst_12 = arith.constant dense<0.000000e+00> : vector<256x128xf32>
    %32 = tpu.matmul %31, %5, %cst_12 {dimension_numbers = #tpu.dot_dimension_numbers<[1], [0], [0], [1], [0, 0, 1, 1], [], []>} : vector<256x128xbf16>, vector<128x128xbf16>, vector<256x128xf32> -> vector<256x128xf32>
    %33 = vector.broadcast %6 : vector<1x128xf32> to vector<256x128xf32>
    %34 = arith.addf %32, %33 : vector<256x128xf32>
    %cst_13 = arith.constant 0.000000e+00 : f32
    %35 = vector.broadcast %cst_13 : f32 to vector<256x128xf32>
    %36 = arith.maximumf %34, %35 : vector<256x128xf32>
    %37 = vector.extract_strided_slice %7 {offsets = [0, 0], sizes = [1, 128], strides = [1, 1]} : vector<4x128xf32> to vector<1x128xf32>
    %38 = vector.broadcast %37 : vector<1x128xf32> to vector<256x128xf32>
    %39 = arith.mulf %36, %38 : vector<256x128xf32>
    %cst_14 = arith.constant dense<0.000000e+00> : vector<256xf32>
    %40 = vector.multi_reduction <add>, %39, %cst_14 [1] : vector<256x128xf32> to vector<256xf32>
    %41 = vector.shape_cast %40 : vector<256xf32> to vector<256x1xf32>
    %42 = vector.extract_strided_slice %7 {offsets = [1, 0], sizes = [1, 128], strides = [1, 1]} : vector<4x128xf32> to vector<1x128xf32>
    %43 = vector.broadcast %42 : vector<1x128xf32> to vector<256x128xf32>
    %44 = arith.mulf %36, %43 : vector<256x128xf32>
    %cst_15 = arith.constant dense<0.000000e+00> : vector<256xf32>
    %45 = vector.multi_reduction <add>, %44, %cst_15 [1] : vector<256x128xf32> to vector<256xf32>
    %46 = vector.shape_cast %45 : vector<256xf32> to vector<256x1xf32>
    %47 = vector.extract_strided_slice %7 {offsets = [2, 0], sizes = [1, 128], strides = [1, 1]} : vector<4x128xf32> to vector<1x128xf32>
    %48 = vector.broadcast %47 : vector<1x128xf32> to vector<256x128xf32>
    %49 = arith.mulf %36, %48 : vector<256x128xf32>
    %cst_16 = arith.constant dense<0.000000e+00> : vector<256xf32>
    %50 = vector.multi_reduction <add>, %49, %cst_16 [1] : vector<256x128xf32> to vector<256xf32>
    %51 = vector.shape_cast %50 : vector<256xf32> to vector<256x1xf32>
    %52 = vector.extract_strided_slice %7 {offsets = [3, 0], sizes = [1, 128], strides = [1, 1]} : vector<4x128xf32> to vector<1x128xf32>
    %53 = vector.broadcast %52 : vector<1x128xf32> to vector<256x128xf32>
    %54 = arith.mulf %36, %53 : vector<256x128xf32>
    %cst_17 = arith.constant dense<0.000000e+00> : vector<256xf32>
    %55 = vector.multi_reduction <add>, %54, %cst_17 [1] : vector<256x128xf32> to vector<256xf32>
    %56 = vector.shape_cast %55 : vector<256xf32> to vector<256x1xf32>
    %57 = tpu.concatenate %41, %46, %51, %56 in 1 : vector<256x1xf32>, vector<256x1xf32>, vector<256x1xf32>, vector<256x1xf32> -> vector<256x4xf32>
    %58 = vector.broadcast %8 : vector<1x4xf32> to vector<256x4xf32>
    %59 = arith.addf %57, %58 : vector<256x4xf32>
    %60 = arith.index_cast %10 : i32 to index
    %c0_18 = arith.constant 0 : index
    %61 = vector.load %arg8[%60, %c0_18] : memref<1024x4xf32, #tpu.memory_space<vmem>>, vector<256x4xf32>
    tpu.vector_store %arg8[%60, %c0_18], %59 {strides = array<i32>} : memref<1024x4xf32, #tpu.memory_space<vmem>>, vector<256x4xf32>,
    %c1_i32 = arith.constant 1 : i32
    %c256_i32_19 = arith.constant 256 : i32
    %62 = arith.muli %c1_i32, %c256_i32_19 : i32
    %63 = tpu.assume_multiple %62, 256 : i32
    %64 = arith.index_cast %63 : i32 to index
    %c0_20 = arith.constant 0 : index
    %65 = vector.load %arg1[%64, %c0_20] : memref<1024x3xf32, #tpu.memory_space<vmem>>, vector<256x3xf32>
    %66 = vector.extract_strided_slice %65 {offsets = [0, 0], sizes = [256, 1], strides = [1, 1]} : vector<256x3xf32> to vector<256x1xf32>
    %67 = vector.broadcast %66 : vector<256x1xf32> to vector<256x128xf32>
    %68 = vector.broadcast %2 : vector<1x128xf32> to vector<256x128xf32>
    %69 = arith.mulf %67, %68 : vector<256x128xf32>
    %70 = vector.broadcast %0 : vector<1x128xf32> to vector<256x128xf32>
    %71 = arith.addf %70, %69 : vector<256x128xf32>
    %72 = vector.extract_strided_slice %65 {offsets = [0, 1], sizes = [256, 1], strides = [1, 1]} : vector<256x3xf32> to vector<256x1xf32>
    %73 = vector.broadcast %72 : vector<256x1xf32> to vector<256x128xf32>
    %74 = vector.broadcast %3 : vector<1x128xf32> to vector<256x128xf32>
    %75 = arith.mulf %73, %74 : vector<256x128xf32>
    %76 = arith.addf %71, %75 : vector<256x128xf32>
    %77 = vector.extract_strided_slice %65 {offsets = [0, 2], sizes = [256, 1], strides = [1, 1]} : vector<256x3xf32> to vector<256x1xf32>
    %78 = vector.broadcast %77 : vector<256x1xf32> to vector<256x128xf32>
    %79 = vector.broadcast %4 : vector<1x128xf32> to vector<256x128xf32>
    %80 = arith.mulf %78, %79 : vector<256x128xf32>
    %81 = arith.addf %76, %80 : vector<256x128xf32>
    %cst_21 = arith.constant 0.000000e+00 : f32
    %82 = vector.broadcast %cst_21 : f32 to vector<256x128xf32>
    %83 = arith.maximumf %81, %82 : vector<256x128xf32>
    %84 = arith.truncf %83 : vector<256x128xf32> to vector<256x128xbf16>
    %cst_22 = arith.constant dense<0.000000e+00> : vector<256x128xf32>
    %85 = tpu.matmul %84, %5, %cst_22 {dimension_numbers = #tpu.dot_dimension_numbers<[1], [0], [0], [1], [0, 0, 1, 1], [], []>} : vector<256x128xbf16>, vector<128x128xbf16>, vector<256x128xf32> -> vector<256x128xf32>
    %86 = vector.broadcast %6 : vector<1x128xf32> to vector<256x128xf32>
    %87 = arith.addf %85, %86 : vector<256x128xf32>
    %cst_23 = arith.constant 0.000000e+00 : f32
    %88 = vector.broadcast %cst_23 : f32 to vector<256x128xf32>
    %89 = arith.maximumf %87, %88 : vector<256x128xf32>
    %90 = vector.extract_strided_slice %7 {offsets = [0, 0], sizes = [1, 128], strides = [1, 1]} : vector<4x128xf32> to vector<1x128xf32>
    %91 = vector.broadcast %90 : vector<1x128xf32> to vector<256x128xf32>
    %92 = arith.mulf %89, %91 : vector<256x128xf32>
    %cst_24 = arith.constant dense<0.000000e+00> : vector<256xf32>
    %93 = vector.multi_reduction <add>, %92, %cst_24 [1] : vector<256x128xf32> to vector<256xf32>
    %94 = vector.shape_cast %93 : vector<256xf32> to vector<256x1xf32>
    %95 = vector.extract_strided_slice %7 {offsets = [1, 0], sizes = [1, 128], strides = [1, 1]} : vector<4x128xf32> to vector<1x128xf32>
    %96 = vector.broadcast %95 : vector<1x128xf32> to vector<256x128xf32>
    %97 = arith.mulf %89, %96 : vector<256x128xf32>
    %cst_25 = arith.constant dense<0.000000e+00> : vector<256xf32>
    %98 = vector.multi_reduction <add>, %97, %cst_25 [1] : vector<256x128xf32> to vector<256xf32>
    %99 = vector.shape_cast %98 : vector<256xf32> to vector<256x1xf32>
    %100 = vector.extract_strided_slice %7 {offsets = [2, 0], sizes = [1, 128], strides = [1, 1]} : vector<4x128xf32> to vector<1x128xf32>
    %101 = vector.broadcast %100 : vector<1x128xf32> to vector<256x128xf32>
    %102 = arith.mulf %89, %101 : vector<256x128xf32>
    %cst_26 = arith.constant dense<0.000000e+00> : vector<256xf32>
    %103 = vector.multi_reduction <add>, %102, %cst_26 [1] : vector<256x128xf32> to vector<256xf32>
    %104 = vector.shape_cast %103 : vector<256xf32> to vector<256x1xf32>
    %105 = vector.extract_strided_slice %7 {offsets = [3, 0], sizes = [1, 128], strides = [1, 1]} : vector<4x128xf32> to vector<1x128xf32>
    %106 = vector.broadcast %105 : vector<1x128xf32> to vector<256x128xf32>
    %107 = arith.mulf %89, %106 : vector<256x128xf32>
    %cst_27 = arith.constant dense<0.000000e+00> : vector<256xf32>
    %108 = vector.multi_reduction <add>, %107, %cst_27 [1] : vector<256x128xf32> to vector<256xf32>
    %109 = vector.shape_cast %108 : vector<256xf32> to vector<256x1xf32>
    %110 = tpu.concatenate %94, %99, %104, %109 in 1 : vector<256x1xf32>, vector<256x1xf32>, vector<256x1xf32>, vector<256x1xf32> -> vector<256x4xf32>
    %111 = vector.broadcast %8 : vector<1x4xf32> to vector<256x4xf32>
    %112 = arith.addf %110, %111 : vector<256x4xf32>
    %113 = arith.index_cast %63 : i32 to index
    %c0_28 = arith.constant 0 : index
    %114 = vector.load %arg8[%113, %c0_28] : memref<1024x4xf32, #tpu.memory_space<vmem>>, vector<256x4xf32>
    tpu.vector_store %arg8[%113, %c0_28], %112 {strides = array<i32>} : memref<1024x4xf32, #tpu.memory_space<vmem>>, vector<256x4xf32>,
    %c2_i32 = arith.constant 2 : i32
    %c256_i32_29 = arith.constant 256 : i32
    %115 = arith.muli %c2_i32, %c256_i32_29 : i32
    %116 = tpu.assume_multiple %115, 256 : i32
    %117 = arith.index_cast %116 : i32 to index
    %c0_30 = arith.constant 0 : index
    %118 = vector.load %arg1[%117, %c0_30] : memref<1024x3xf32, #tpu.memory_space<vmem>>, vector<256x3xf32>
    %119 = vector.extract_strided_slice %118 {offsets = [0, 0], sizes = [256, 1], strides = [1, 1]} : vector<256x3xf32> to vector<256x1xf32>
    %120 = vector.broadcast %119 : vector<256x1xf32> to vector<256x128xf32>
    %121 = vector.broadcast %2 : vector<1x128xf32> to vector<256x128xf32>
    %122 = arith.mulf %120, %121 : vector<256x128xf32>
    %123 = vector.broadcast %0 : vector<1x128xf32> to vector<256x128xf32>
    %124 = arith.addf %123, %122 : vector<256x128xf32>
    %125 = vector.extract_strided_slice %118 {offsets = [0, 1], sizes = [256, 1], strides = [1, 1]} : vector<256x3xf32> to vector<256x1xf32>
    %126 = vector.broadcast %125 : vector<256x1xf32> to vector<256x128xf32>
    %127 = vector.broadcast %3 : vector<1x128xf32> to vector<256x128xf32>
    %128 = arith.mulf %126, %127 : vector<256x128xf32>
    %129 = arith.addf %124, %128 : vector<256x128xf32>
    %130 = vector.extract_strided_slice %118 {offsets = [0, 2], sizes = [256, 1], strides = [1, 1]} : vector<256x3xf32> to vector<256x1xf32>
    %131 = vector.broadcast %130 : vector<256x1xf32> to vector<256x128xf32>
    %132 = vector.broadcast %4 : vector<1x128xf32> to vector<256x128xf32>
    %133 = arith.mulf %131, %132 : vector<256x128xf32>
    %134 = arith.addf %129, %133 : vector<256x128xf32>
    %cst_31 = arith.constant 0.000000e+00 : f32
    %135 = vector.broadcast %cst_31 : f32 to vector<256x128xf32>
    %136 = arith.maximumf %134, %135 : vector<256x128xf32>
    %137 = arith.truncf %136 : vector<256x128xf32> to vector<256x128xbf16>
    %cst_32 = arith.constant dense<0.000000e+00> : vector<256x128xf32>
    %138 = tpu.matmul %137, %5, %cst_32 {dimension_numbers = #tpu.dot_dimension_numbers<[1], [0], [0], [1], [0, 0, 1, 1], [], []>} : vector<256x128xbf16>, vector<128x128xbf16>, vector<256x128xf32> -> vector<256x128xf32>
    %139 = vector.broadcast %6 : vector<1x128xf32> to vector<256x128xf32>
    %140 = arith.addf %138, %139 : vector<256x128xf32>
    %cst_33 = arith.constant 0.000000e+00 : f32
    %141 = vector.broadcast %cst_33 : f32 to vector<256x128xf32>
    %142 = arith.maximumf %140, %141 : vector<256x128xf32>
    %143 = vector.extract_strided_slice %7 {offsets = [0, 0], sizes = [1, 128], strides = [1, 1]} : vector<4x128xf32> to vector<1x128xf32>
    %144 = vector.broadcast %143 : vector<1x128xf32> to vector<256x128xf32>
    %145 = arith.mulf %142, %144 : vector<256x128xf32>
    %cst_34 = arith.constant dense<0.000000e+00> : vector<256xf32>
    %146 = vector.multi_reduction <add>, %145, %cst_34 [1] : vector<256x128xf32> to vector<256xf32>
    %147 = vector.shape_cast %146 : vector<256xf32> to vector<256x1xf32>
    %148 = vector.extract_strided_slice %7 {offsets = [1, 0], sizes = [1, 128], strides = [1, 1]} : vector<4x128xf32> to vector<1x128xf32>
    %149 = vector.broadcast %148 : vector<1x128xf32> to vector<256x128xf32>
    %150 = arith.mulf %142, %149 : vector<256x128xf32>
    %cst_35 = arith.constant dense<0.000000e+00> : vector<256xf32>
    %151 = vector.multi_reduction <add>, %150, %cst_35 [1] : vector<256x128xf32> to vector<256xf32>
    %152 = vector.shape_cast %151 : vector<256xf32> to vector<256x1xf32>
    %153 = vector.extract_strided_slice %7 {offsets = [2, 0], sizes = [1, 128], strides = [1, 1]} : vector<4x128xf32> to vector<1x128xf32>
    %154 = vector.broadcast %153 : vector<1x128xf32> to vector<256x128xf32>
    %155 = arith.mulf %142, %154 : vector<256x128xf32>
    %cst_36 = arith.constant dense<0.000000e+00> : vector<256xf32>
    %156 = vector.multi_reduction <add>, %155, %cst_36 [1] : vector<256x128xf32> to vector<256xf32>
    %157 = vector.shape_cast %156 : vector<256xf32> to vector<256x1xf32>
    %158 = vector.extract_strided_slice %7 {offsets = [3, 0], sizes = [1, 128], strides = [1, 1]} : vector<4x128xf32> to vector<1x128xf32>
    %159 = vector.broadcast %158 : vector<1x128xf32> to vector<256x128xf32>
    %160 = arith.mulf %142, %159 : vector<256x128xf32>
    %cst_37 = arith.constant dense<0.000000e+00> : vector<256xf32>
    %161 = vector.multi_reduction <add>, %160, %cst_37 [1] : vector<256x128xf32> to vector<256xf32>
    %162 = vector.shape_cast %161 : vector<256xf32> to vector<256x1xf32>
    %163 = tpu.concatenate %147, %152, %157, %162 in 1 : vector<256x1xf32>, vector<256x1xf32>, vector<256x1xf32>, vector<256x1xf32> -> vector<256x4xf32>
    %164 = vector.broadcast %8 : vector<1x4xf32> to vector<256x4xf32>
    %165 = arith.addf %163, %164 : vector<256x4xf32>
    %166 = arith.index_cast %116 : i32 to index
    %c0_38 = arith.constant 0 : index
    %167 = vector.load %arg8[%166, %c0_38] : memref<1024x4xf32, #tpu.memory_space<vmem>>, vector<256x4xf32>
    tpu.vector_store %arg8[%166, %c0_38], %165 {strides = array<i32>} : memref<1024x4xf32, #tpu.memory_space<vmem>>, vector<256x4xf32>,
    %c3_i32 = arith.constant 3 : i32
    %c256_i32_39 = arith.constant 256 : i32
    %168 = arith.muli %c3_i32, %c256_i32_39 : i32
    %169 = tpu.assume_multiple %168, 256 : i32
    %170 = arith.index_cast %169 : i32 to index
    %c0_40 = arith.constant 0 : index
    %171 = vector.load %arg1[%170, %c0_40] : memref<1024x3xf32, #tpu.memory_space<vmem>>, vector<256x3xf32>
    %172 = vector.extract_strided_slice %171 {offsets = [0, 0], sizes = [256, 1], strides = [1, 1]} : vector<256x3xf32> to vector<256x1xf32>
    %173 = vector.broadcast %172 : vector<256x1xf32> to vector<256x128xf32>
    %174 = vector.broadcast %2 : vector<1x128xf32> to vector<256x128xf32>
    %175 = arith.mulf %173, %174 : vector<256x128xf32>
    %176 = vector.broadcast %0 : vector<1x128xf32> to vector<256x128xf32>
    %177 = arith.addf %176, %175 : vector<256x128xf32>
    %178 = vector.extract_strided_slice %171 {offsets = [0, 1], sizes = [256, 1], strides = [1, 1]} : vector<256x3xf32> to vector<256x1xf32>
    %179 = vector.broadcast %178 : vector<256x1xf32> to vector<256x128xf32>
    %180 = vector.broadcast %3 : vector<1x128xf32> to vector<256x128xf32>
    %181 = arith.mulf %179, %180 : vector<256x128xf32>
    %182 = arith.addf %177, %181 : vector<256x128xf32>
    %183 = vector.extract_strided_slice %171 {offsets = [0, 2], sizes = [256, 1], strides = [1, 1]} : vector<256x3xf32> to vector<256x1xf32>
    %184 = vector.broadcast %183 : vector<256x1xf32> to vector<256x128xf32>
    %185 = vector.broadcast %4 : vector<1x128xf32> to vector<256x128xf32>
    %186 = arith.mulf %184, %185 : vector<256x128xf32>
    %187 = arith.addf %182, %186 : vector<256x128xf32>
    %cst_41 = arith.constant 0.000000e+00 : f32
    %188 = vector.broadcast %cst_41 : f32 to vector<256x128xf32>
    %189 = arith.maximumf %187, %188 : vector<256x128xf32>
    %190 = arith.truncf %189 : vector<256x128xf32> to vector<256x128xbf16>
    %cst_42 = arith.constant dense<0.000000e+00> : vector<256x128xf32>
    %191 = tpu.matmul %190, %5, %cst_42 {dimension_numbers = #tpu.dot_dimension_numbers<[1], [0], [0], [1], [0, 0, 1, 1], [], []>} : vector<256x128xbf16>, vector<128x128xbf16>, vector<256x128xf32> -> vector<256x128xf32>
    %192 = vector.broadcast %6 : vector<1x128xf32> to vector<256x128xf32>
    %193 = arith.addf %191, %192 : vector<256x128xf32>
    %cst_43 = arith.constant 0.000000e+00 : f32
    %194 = vector.broadcast %cst_43 : f32 to vector<256x128xf32>
    %195 = arith.maximumf %193, %194 : vector<256x128xf32>
    %196 = vector.extract_strided_slice %7 {offsets = [0, 0], sizes = [1, 128], strides = [1, 1]} : vector<4x128xf32> to vector<1x128xf32>
    %197 = vector.broadcast %196 : vector<1x128xf32> to vector<256x128xf32>
    %198 = arith.mulf %195, %197 : vector<256x128xf32>
    %cst_44 = arith.constant dense<0.000000e+00> : vector<256xf32>
    %199 = vector.multi_reduction <add>, %198, %cst_44 [1] : vector<256x128xf32> to vector<256xf32>
    %200 = vector.shape_cast %199 : vector<256xf32> to vector<256x1xf32>
    %201 = vector.extract_strided_slice %7 {offsets = [1, 0], sizes = [1, 128], strides = [1, 1]} : vector<4x128xf32> to vector<1x128xf32>
    %202 = vector.broadcast %201 : vector<1x128xf32> to vector<256x128xf32>
    %203 = arith.mulf %195, %202 : vector<256x128xf32>
    %cst_45 = arith.constant dense<0.000000e+00> : vector<256xf32>
    %204 = vector.multi_reduction <add>, %203, %cst_45 [1] : vector<256x128xf32> to vector<256xf32>
    %205 = vector.shape_cast %204 : vector<256xf32> to vector<256x1xf32>
    %206 = vector.extract_strided_slice %7 {offsets = [2, 0], sizes = [1, 128], strides = [1, 1]} : vector<4x128xf32> to vector<1x128xf32>
    %207 = vector.broadcast %206 : vector<1x128xf32> to vector<256x128xf32>
    %208 = arith.mulf %195, %207 : vector<256x128xf32>
    %cst_46 = arith.constant dense<0.000000e+00> : vector<256xf32>
    %209 = vector.multi_reduction <add>, %208, %cst_46 [1] : vector<256x128xf32> to vector<256xf32>
    %210 = vector.shape_cast %209 : vector<256xf32> to vector<256x1xf32>
    %211 = vector.extract_strided_slice %7 {offsets = [3, 0], sizes = [1, 128], strides = [1, 1]} : vector<4x128xf32> to vector<1x128xf32>
    %212 = vector.broadcast %211 : vector<1x128xf32> to vector<256x128xf32>
    %213 = arith.mulf %195, %212 : vector<256x128xf32>
    %cst_47 = arith.constant dense<0.000000e+00> : vector<256xf32>
    %214 = vector.multi_reduction <add>, %213, %cst_47 [1] : vector<256x128xf32> to vector<256xf32>
    %215 = vector.shape_cast %214 : vector<256xf32> to vector<256x1xf32>
    %216 = tpu.concatenate %200, %205, %210, %215 in 1 : vector<256x1xf32>, vector<256x1xf32>, vector<256x1xf32>, vector<256x1xf32> -> vector<256x4xf32>
    %217 = vector.broadcast %8 : vector<1x4xf32> to vector<256x4xf32>
    %218 = arith.addf %216, %217 : vector<256x4xf32>
    %219 = arith.index_cast %169 : i32 to index
    %c0_48 = arith.constant 0 : index
    %220 = vector.load %arg8[%219, %c0_48] : memref<1024x4xf32, #tpu.memory_space<vmem>>, vector<256x4xf32>
    tpu.vector_store %arg8[%219, %c0_48], %218 {strides = array<i32>} : memref<1024x4xf32, #tpu.memory_space<vmem>>, vector<256x4xf32>,
    %c4_i32 = arith.constant 4 : i32
    return
  }
  func.func @transform_0(%arg0: i32) -> (i32, i32) {
    %c0_i32 = arith.constant 0 : i32
    %c0_i32_0 = arith.constant 0 : i32
    return %arg0, %c0_i32 : i32, i32
  }
  func.func @transform_1(%arg0: i32) -> (i32, i32) {
    %c0_i32 = arith.constant 0 : i32
    %c0_i32_0 = arith.constant 0 : i32
    %c0_i32_1 = arith.constant 0 : i32
    return %c0_i32, %c0_i32_0 : i32, i32
  }
  func.func @transform_2(%arg0: i32) -> (i32, i32) {
    %c0_i32 = arith.constant 0 : i32
    %c0_i32_0 = arith.constant 0 : i32
    %c0_i32_1 = arith.constant 0 : i32
    return %c0_i32, %c0_i32_0 : i32, i32
  }
  func.func @transform_3(%arg0: i32) -> (i32, i32) {
    %c0_i32 = arith.constant 0 : i32
    %c0_i32_0 = arith.constant 0 : i32
    %c0_i32_1 = arith.constant 0 : i32
    return %c0_i32, %c0_i32_0 : i32, i32
  }
  func.func @transform_4(%arg0: i32) -> (i32, i32) {
    %c0_i32 = arith.constant 0 : i32
    %c0_i32_0 = arith.constant 0 : i32
    %c0_i32_1 = arith.constant 0 : i32
    return %c0_i32, %c0_i32_0 : i32, i32
  }
  func.func @transform_5(%arg0: i32) -> (i32, i32) {
    %c0_i32 = arith.constant 0 : i32
    %c0_i32_0 = arith.constant 0 : i32
    %c0_i32_1 = arith.constant 0 : i32
    return %c0_i32, %c0_i32_0 : i32, i32
  }
  func.func @transform_6(%arg0: i32) -> (i32, i32) {
    %c0_i32 = arith.constant 0 : i32
    %c0_i32_0 = arith.constant 0 : i32
    %c0_i32_1 = arith.constant 0 : i32
    return %c0_i32, %c0_i32_0 : i32, i32
  }
  func.func @transform_7(%arg0: i32) -> (i32, i32) {
    %c0_i32 = arith.constant 0 : i32
    %c0_i32_0 = arith.constant 0 : i32
    return %arg0, %c0_i32 : i32, i32
  }
}

</mosaic_0001>

<llo_original>
// kernel: tpu_custom_call.1
$region0: #{tpu_custom_call.1}
  #allocation0 [shape = 'u32[]', space=smem, size = 0x4, offset = 0x4, fixed_abs, tag = 'smem constant byte address 0x4 - core index']
  #allocation1 [shape = 'u32[72,128]{1,0:T(1,128)}', space=vmem, size = 0x9000, scoped, tag = 'internal scratch']
  %s0 = inlined_call_operand.vmem [shape: f32[2048,3], index: 0, kind: input, shape index: {}]
  %s1 = inlined_call_operand.vmem [shape: f32[3,128], index: 1, kind: input, shape index: {}]
  %s2 = inlined_call_operand.vmem [shape: f32[1,128], index: 2, kind: input, shape index: {}]
  %s3 = inlined_call_operand.vmem [shape: bf16[128,128], index: 3, kind: input, shape index: {}]
  %s4 = inlined_call_operand.vmem [shape: f32[1,128], index: 4, kind: input, shape index: {}]
  %s5 = inlined_call_operand.vmem [shape: f32[4,128], index: 5, kind: input, shape index: {}]
  %s6 = inlined_call_operand.vmem [shape: f32[1,4], index: 6, kind: input, shape index: {}]
  %s7 = inlined_call_operand.vmem [shape: f32[2048,4], index: 7, kind: output, shape index: {}]
  %s8 = sld [smem:[#allocation0]]
  $region61: #{tpu_custom_call.1} parent=0
    _
  %s10 = ssub.s32 1, %s8
  %s11 = scalar_select 0, %s10, %s8
  loop: start=0, step=1, limit=4
  $region2: #{tpu_custom_call.1} parent=0 // loop_pre_header
    _
  $region3: #{tpu_custom_call.1} parent=0 // loop_header
    %s13 = sphi 0, %s17
    %p14 = scmp.ge.s32.totalorder %s13, 4
    %s23 = sphi 0, %s25
    %s26 = sphi 0, %s23
    %s27 = sphi 0, %s26
    %s43 = sphi 0, %s27
    %s47 = sphi 0, %s47
    %s49 = sphi 0, %s47
    %s50 = sphi 0, %s49
    %s64 = sphi 0, %s50
    %s68 = sphi 0, %s68
    %s70 = sphi 0, %s68
    %s71 = sphi 0, %s70
    %s85 = sphi 0, %s71
    %s89 = sphi 0, %s89
    %s91 = sphi 0, %s89
    %s92 = sphi 0, %s91
    %s106 = sphi 0, %s92
    %s110 = sphi 0, %s110
    %s112 = sphi 0, %s110
    %s113 = sphi 0, %s112
    %s127 = sphi 0, %s113
    %s131 = sphi 0, %s131
    %s133 = sphi 0, %s131
    %s134 = sphi 0, %s133
    %s148 = sphi 0, %s134
    %s152 = sphi 0, %s152
    %s154 = sphi 0, %s152
    %s155 = sphi 0, %s154
    %s169 = sphi 0, %s155
    %s175 = sphi 0, %s177
    %s178 = sphi 0, %s175
    %s179 = sphi 0, %s178
    %s195 = sphi 0, %s179
  $region4: #{tpu_custom_call.1} parent=0 // loop_header_branch
    %16 = sbr.rel (%p14) target = $region8
  $region5: #{tpu_custom_call.1} parent=0 // loop_body
    %s18 = ssub.s32 %s13, 1
    %s19 = ssub.s32 %s13, 2
    %s20 = sadd.s32 %s13, 1
    %s21 = ssub.s32 %s13, %s20
    %p22 = scmp.eq.s32.totalorder %s21, 0
    %s24 = sadd.s32 %s23, 1
    %s25 = scalar_select %p22, %s23, %s24
    %p28 = pneg %p22
    %p29 = scmp.eq.s32.totalorder %s13, 1
    %p30 = por %p28, %p29
    %p31 = scmp.ne.s32.totalorder %s23, %s26
    %p32 = scmp.eq.s32.totalorder %s13, 0
    %p33 = por %p31, %p32
    %p34 = scmp.ne.s32.totalorder %s23, %s26
    %p35 = scmp.eq.s32.totalorder %s18, 1
    %p36 = por %p34, %p35
    %p37 = scmp.ne.s32.totalorder %s26, %s27
    %p38 = scmp.eq.s32.totalorder %s18, 0
    %p39 = por %p37, %p38
    %p40 = scmp.ne.s32.totalorder %s26, %s27
    %p41 = scmp.eq.s32.totalorder %s19, 1
    %p42 = por %p40, %p41
    %p44 = scmp.ne.s32.totalorder %s27, %s43
    %p45 = scmp.eq.s32.totalorder %s19, 0
    %p46 = por %p44, %p45
    %s48 = sadd.s32 %s47, 1
    %p51 = scmp.eq.s32.totalorder %s13, 1
    %p52 = scmp.ne.s32.totalorder %s47, %s49
    %p53 = scmp.eq.s32.totalorder %s13, 0
    %p54 = por %p52, %p53
    %p55 = scmp.ne.s32.totalorder %s47, %s49
    %p56 = scmp.eq.s32.totalorder %s18, 1
    %p57 = por %p55, %p56
    %p58 = scmp.ne.s32.totalorder %s49, %s50
    %p59 = scmp.eq.s32.totalorder %s18, 0
    %p60 = por %p58, %p59
    %p61 = scmp.ne.s32.totalorder %s49, %s50
    %p62 = scmp.eq.s32.totalorder %s19, 1
    %p63 = por %p61, %p62
    %p65 = scmp.ne.s32.totalorder %s50, %s64
    %p66 = scmp.eq.s32.totalorder %s19, 0
    %p67 = por %p65, %p66
    %s69 = sadd.s32 %s68, 1
    %p72 = scmp.eq.s32.totalorder %s13, 1
    %p73 = scmp.ne.s32.totalorder %s68, %s70
    %p74 = scmp.eq.s32.totalorder %s13, 0
    %p75 = por %p73, %p74
    %p76 = scmp.ne.s32.totalorder %s68, %s70
    %p77 = scmp.eq.s32.totalorder %s18, 1
    %p78 = por %p76, %p77
    %p79 = scmp.ne.s32.totalorder %s70, %s71
    %p80 = scmp.eq.s32.totalorder %s18, 0
    %p81 = por %p79, %p80
    %p82 = scmp.ne.s32.totalorder %s70, %s71
    %p83 = scmp.eq.s32.totalorder %s19, 1
    %p84 = por %p82, %p83
    %p86 = scmp.ne.s32.totalorder %s71, %s85
    %p87 = scmp.eq.s32.totalorder %s19, 0
    %p88 = por %p86, %p87
    %s90 = sadd.s32 %s89, 1
    %p93 = scmp.eq.s32.totalorder %s13, 1
    %p94 = scmp.ne.s32.totalorder %s89, %s91
    %p95 = scmp.eq.s32.totalorder %s13, 0
    %p96 = por %p94, %p95
    %p97 = scmp.ne.s32.totalorder %s89, %s91
    %p98 = scmp.eq.s32.totalorder %s18, 1
    %p99 = por %p97, %p98
    %p100 = scmp.ne.s32.totalorder %s91, %s92
    %p101 = scmp.eq.s32.totalorder %s18, 0
    %p102 = por %p100, %p101
    %p103 = scmp.ne.s32.totalorder %s91, %s92
    %p104 = scmp.eq.s32.totalorder %s19, 1
    %p105 = por %p103, %p104
    %p107 = scmp.ne.s32.totalorder %s92, %s106
    %p108 = scmp.eq.s32.totalorder %s19, 0
    %p109 = por %p107, %p108
    %s111 = sadd.s32 %s110, 1
    %p114 = scmp.eq.s32.totalorder %s13, 1
    %p115 = scmp.ne.s32.totalorder %s110, %s112
    %p116 = scmp.eq.s32.totalorder %s13, 0
    %p117 = por %p115, %p116
    %p118 = scmp.ne.s32.totalorder %s110, %s112
    %p119 = scmp.eq.s32.totalorder %s18, 1
    %p120 = por %p118, %p119
    %p121 = scmp.ne.s32.totalorder %s112, %s113
    %p122 = scmp.eq.s32.totalorder %s18, 0
    %p123 = por %p121, %p122
    %p124 = scmp.ne.s32.totalorder %s112, %s113
    %p125 = scmp.eq.s32.totalorder %s19, 1
    %p126 = por %p124, %p125
    %p128 = scmp.ne.s32.totalorder %s113, %s127
    %p129 = scmp.eq.s32.totalorder %s19, 0
    %p130 = por %p128, %p129
    %s132 = sadd.s32 %s131, 1
    %p135 = scmp.eq.s32.totalorder %s13, 1
    %p136 = scmp.ne.s32.totalorder %s131, %s133
    %p137 = scmp.eq.s32.totalorder %s13, 0
    %p138 = por %p136, %p137
    %p139 = scmp.ne.s32.totalorder %s131, %s133
    %p140 = scmp.eq.s32.totalorder %s18, 1
    %p141 = por %p139, %p140
    %p142 = scmp.ne.s32.totalorder %s133, %s134
    %p143 = scmp.eq.s32.totalorder %s18, 0
    %p144 = por %p142, %p143
    %p145 = scmp.ne.s32.totalorder %s133, %s134
    %p146 = scmp.eq.s32.totalorder %s19, 1
    %p147 = por %p145, %p146
    %p149 = scmp.ne.s32.totalorder %s134, %s148
    %p150 = scmp.eq.s32.totalorder %s19, 0
    %p151 = por %p149, %p150
    %s153 = sadd.s32 %s152, 1
    %p156 = scmp.eq.s32.totalorder %s13, 1
    %p157 = scmp.ne.s32.totalorder %s152, %s154
    %p158 = scmp.eq.s32.totalorder %s13, 0
    %p159 = por %p157, %p158
    %p160 = scmp.ne.s32.totalorder %s152, %s154
    %p161 = scmp.eq.s32.totalorder %s18, 1
    %p162 = por %p160, %p161
    %p163 = scmp.ne.s32.totalorder %s154, %s155
    %p164 = scmp.eq.s32.totalorder %s18, 0
    %p165 = por %p163, %p164
    %p166 = scmp.ne.s32.totalorder %s154, %s155
    %p167 = scmp.eq.s32.totalorder %s19, 1
    %p168 = por %p166, %p167
    %p170 = scmp.ne.s32.totalorder %s155, %s169
    %p171 = scmp.eq.s32.totalorder %s19, 0
    %p172 = por %p170, %p171
    %s173 = ssub.s32 %s13, %s20
    %p174 = scmp.eq.s32.totalorder %s173, 0
    %s176 = sadd.s32 %s175, 1
    %s177 = scalar_select %p174, %s175, %s176
    %p180 = pneg %p174
    %p181 = scmp.eq.s32.totalorder %s13, 1
    %p182 = por %p180, %p181
    %p183 = scmp.ne.s32.totalorder %s175, %s178
    %p184 = scmp.eq.s32.totalorder %s13, 0
    %p185 = por %p183, %p184
    %p186 = scmp.ne.s32.totalorder %s175, %s178
    %p187 = scmp.eq.s32.totalorder %s18, 1
    %p188 = por %p186, %p187
    %p189 = scmp.ne.s32.totalorder %s178, %s179
    %p190 = scmp.eq.s32.totalorder %s18, 0
    %p191 = por %p189, %p190
    %p192 = scmp.ne.s32.totalorder %s178, %s179
    %p193 = scmp.eq.s32.totalorder %s19, 1
    %p194 = por %p192, %p193
    %p196 = scmp.ne.s32.totalorder %s179, %s195
    %p197 = scmp.eq.s32.totalorder %s19, 0
    %p198 = por %p196, %p197
    %p199 = scmp.le.s32.totalorder 1, %s13
    %p200 = scmp.lt.s32.totalorder %s13, 3
    %p201 = pnand %p199, %p200
    %p202 = pneg %p201
    // Predicated region
    $region9: #{tpu_custom_call.1} parent=5 // pred_check
      _
    $region10: #{tpu_custom_call.1} parent=5 // pred_check_branch
      %204 = sbr.rel (%p201) target = $region12
    $region11: #{tpu_custom_call.1} parent=5 // pred_region
      %s205 = ssub.s32 %s13, 1
      // Predicated region
      $region13: #{tpu_custom_call.1} parent=11 // pred_check
        %p206 = pneg %p60
      $region14: #{tpu_custom_call.1} parent=11 // pred_check_branch
        %208 = sbr.rel (%p206) target = $region16
      $region15: #{tpu_custom_call.1} parent=11 // pred_region
        _
      $region16: #{tpu_custom_call.1} parent=11 // pred_fallthru
        _
      // Predicated region
      $region17: #{tpu_custom_call.1} parent=11 // pred_check
        %p209 = pneg %p81
      $region18: #{tpu_custom_call.1} parent=11 // pred_check_branch
        %211 = sbr.rel (%p209) target = $region20
      $region19: #{tpu_custom_call.1} parent=11 // pred_region
        _
      $region20: #{tpu_custom_call.1} parent=11 // pred_fallthru
        _
      // Predicated region
      $region21: #{tpu_custom_call.1} parent=11 // pred_check
        %p212 = pneg %p102
      $region22: #{tpu_custom_call.1} parent=11 // pred_check_branch
        %214 = sbr.rel (%p212) target = $region24
      $region23: #{tpu_custom_call.1} parent=11 // pred_region
        _
      $region24: #{tpu_custom_call.1} parent=11 // pred_fallthru
        _
      // Predicated region
      $region25: #{tpu_custom_call.1} parent=11 // pred_check
        %p215 = pneg %p123
      $region26: #{tpu_custom_call.1} parent=11 // pred_check_branch
        %217 = sbr.rel (%p215) target = $region28
      $region27: #{tpu_custom_call.1} parent=11 // pred_region
        _
      $region28: #{tpu_custom_call.1} parent=11 // pred_fallthru
        _
      // Predicated region
      $region29: #{tpu_custom_call.1} parent=11 // pred_check
        %p218 = pneg %p144
      $region30: #{tpu_custom_call.1} parent=11 // pred_check_branch
        %220 = sbr.rel (%p218) target = $region32
      $region31: #{tpu_custom_call.1} parent=11 // pred_region
        _
      $region32: #{tpu_custom_call.1} parent=11 // pred_fallthru
        _
      // Predicated region
      $region33: #{tpu_custom_call.1} parent=11 // pred_check
        %p221 = pneg %p165
      $region34: #{tpu_custom_call.1} parent=11 // pred_check_branch
        %223 = sbr.rel (%p221) target = $region36
      $region35: #{tpu_custom_call.1} parent=11 // pred_region
        _
      $region36: #{tpu_custom_call.1} parent=11 // pred_fallthru
        _
    $region12: #{tpu_custom_call.1} parent=5 // pred_fallthru
      _
    %p224 = scmp.lt.s32.totalorder %s13, 2
    // Predicated region
    $region37: #{tpu_custom_call.1} parent=5 // pred_check
      %p225 = pneg %p224
    $region38: #{tpu_custom_call.1} parent=5 // pred_check_branch
      %227 = sbr.rel (%p225) target = $region40
    $region39: #{tpu_custom_call.1} parent=5 // pred_region
      // Predicated region
      $region41: #{tpu_custom_call.1} parent=39 // pred_check
        %p228 = pneg %p33
      $region42: #{tpu_custom_call.1} parent=39 // pred_check_branch
        %230 = sbr.rel (%p228) target = $region44
      $region43: #{tpu_custom_call.1} parent=39 // pred_region
        %s231 = smul.u32 128, %s13
        %p232 = scmp.lt.s32.totalorder %s231, 255
        %s233 = scalar_select %p232, %s231, 255
        %s234 = smul.addr %s233, 8
        %s235 = scalar_lea.vmem %s0, %s234
        %s236 = smul.u32 128, %s13
      $region44: #{tpu_custom_call.1} parent=39 // pred_fallthru
        _
    $region40: #{tpu_custom_call.1} parent=5 // pred_fallthru
      _
    %p237 = scmp.le.s32.totalorder 1, %s13
    %p238 = scmp.lt.s32.totalorder %s13, 3
    %p239 = pnand %p237, %p238
    %p240 = pneg %p239
    // Predicated region
    $region45: #{tpu_custom_call.1} parent=5 // pred_check
      _
    $region46: #{tpu_custom_call.1} parent=5 // pred_check_branch
      %242 = sbr.rel (%p239) target = $region48
    $region47: #{tpu_custom_call.1} parent=5 // pred_region
      %s243 = ssub.s32 %s13, 1
      %s244 = smul.u32 128, %s18
      %p245 = scmp.lt.s32.totalorder %s244, 255
      %s246 = scalar_select %p245, %s244, 255
      %s247 = smul.addr %s246, 8
      %s248 = scalar_lea.vmem %s0, %s247
      %p249 = pneg %p39
      %p250 = pneg %p36
      %p251 = pneg %p60
      %p252 = pneg %p57
      %p253 = pneg %p81
      %p254 = pneg %p78
      %p255 = pneg %p102
      %p256 = pneg %p99
      %p257 = pneg %p123
      %p258 = pneg %p120
      %p259 = pneg %p144
      %p260 = pneg %p141
      %p261 = pneg %p165
      %p262 = pneg %p162
      %p263 = pneg %p191
      %p264 = pneg %p188
      %s265 = smul.u32 128, %s18
      %p266 = scmp.lt.s32.totalorder %s265, 255
      %s267 = scalar_select %p266, %s265, 255
      %s268 = smul.addr %s267, 8
      %s269 = scalar_lea.vmem %s7, %s268
      %s270 = smul.u32 128, %s18
      %p271 = scmp.lt.s32.totalorder %s270, 255
      %s272 = scalar_select %p271, %s270, 255
      %s273 = smul.addr %s272, 8
      %s274 = scalar_lea.vmem %s0, %s273
      %s275 = smul.u32 128, %s18
      %s276 = smul.u32 128, %s18
      %p277 = scmp.lt.s32.totalorder %s276, 255
      %s278 = scalar_select %p277, %s276, 255
      %s279 = smul.addr %s278, 8
      %s280 = scalar_lea.vmem %s7, %s279
      %s281 = smul.u32 128, %s18
      %v282 = vld [vmem:[%s2] sm:$0x1]
      %v283 = vld [vmem:[%s1] sm:$0x7]
      %v284 = vld [vmem:[%s3] sm:$0xf]
      %v285 = vld [vmem:[%s3 + $0x4] sm:$0xf]
      %v286 = vld [vmem:[%s3 + $0x8] sm:$0xf]
      %v287 = vld [vmem:[%s3 + $0xc] sm:$0xf]
      %v288 = vld [vmem:[%s3 + $0x10] sm:$0xf]
      %v289 = vld [vmem:[%s3 + $0x14] sm:$0xf]
      %v290 = vld [vmem:[%s3 + $0x18] sm:$0xf]
      %v291 = vld [vmem:[%s3 + $0x1c] sm:$0xf]
      %v292 = vld [vmem:[%s3 + $0x20] sm:$0xf]
      %v293 = vld [vmem:[%s3 + $0x24] sm:$0xf]
      %v294 = vld [vmem:[%s3 + $0x28] sm:$0xf]
      %v295 = vld [vmem:[%s3 + $0x2c] sm:$0xf]
      %v296 = vld [vmem:[%s3 + $0x30] sm:$0xf]
      %v297 = vld [vmem:[%s3 + $0x34] sm:$0xf]
      %v298 = vld [vmem:[%s3 + $0x38] sm:$0xf]
      %v299 = vld [vmem:[%s3 + $0x3c] sm:$0xf]
      %v300 = vld [vmem:[%s4] sm:$0x1]
      %v301 = vld [vmem:[%s5] sm:$0xf]
      %v302 = vld [vmem:[%s6] sm:$0x1]
      %v303 = vld [vmem:[%s274] sm:$0xff]
      %v304 = vld [vmem:[%s274 + $0x8] sm:$0xff]
      %v305 = vld [vmem:[%s274 + $0x10] sm:$0xff]
      %v306 = vld [vmem:[%s274 + $0x18] sm:$0xff]
      %v307 = vld [vmem:[%s274 + $0x20] sm:$0xff]
      %v308 = vld [vmem:[%s274 + $0x28] sm:$0xff]
      %v309 = vld [vmem:[%s274 + $0x30] sm:$0xff]
      %v310 = vld [vmem:[%s274 + $0x38] sm:$0xff]
      %v311 = vld [vmem:[%s274 + $0x40] sm:$0xff]
      %v312 = vld [vmem:[%s274 + $0x48] sm:$0xff]
      %v313 = vld [vmem:[%s274 + $0x50] sm:$0xff]
      %v314 = vld [vmem:[%s274 + $0x58] sm:$0xff]
      %v315 = vld [vmem:[%s274 + $0x60] sm:$0xff]
      %v316 = vld [vmem:[%s274 + $0x68] sm:$0xff]
      %v317 = vld [vmem:[%s274 + $0x70] sm:$0xff]
      %v318 = vld [vmem:[%s274 + $0x78] sm:$0xff]
      %v319 = vld [vmem:[%s274 + $0x80] sm:$0xff]
      %v320 = vld [vmem:[%s274 + $0x88] sm:$0xff]
      %v321 = vld [vmem:[%s274 + $0x90] sm:$0xff]
      %v322 = vld [vmem:[%s274 + $0x98] sm:$0xff]
      %v323 = vld [vmem:[%s274 + $0xa0] sm:$0xff]
      %v324 = vld [vmem:[%s274 + $0xa8] sm:$0xff]
      %v325 = vld [vmem:[%s274 + $0xb0] sm:$0xff]
      %v326 = vld [vmem:[%s274 + $0xb8] sm:$0xff]
      %v327 = vld [vmem:[%s274 + $0xc0] sm:$0xff]
      %v328 = vld [vmem:[%s274 + $0xc8] sm:$0xff]
      %v329 = vld [vmem:[%s274 + $0xd0] sm:$0xff]
      %v330 = vld [vmem:[%s274 + $0xd8] sm:$0xff]
      %v331 = vld [vmem:[%s274 + $0xe0] sm:$0xff]
      %v332 = vld [vmem:[%s274 + $0xe8] sm:$0xff]
      %v333 = vld [vmem:[%s274 + $0xf0] sm:$0xff]
      %v334 = vld [vmem:[%s274 + $0xf8] sm:$0xff]
      %336 = vset.pattern.permute.xlu0 0
      %337 = vperm.xlu0 %336, %v303
      %v338 = vpop.permute.xlu0 %337
      %341 = vset.pattern.permute.xlu0 0
      %342 = vperm.xlu0 %341, %v304
      %v343 = vpop.permute.xlu0 %342
      %346 = vset.pattern.permute.xlu0 0
      %347 = vperm.xlu0 %346, %v305
      %v348 = vpop.permute.xlu0 %347
      %351 = vset.pattern.permute.xlu0 0
      %352 = vperm.xlu0 %351, %v306
      %v353 = vpop.permute.xlu0 %352
      %356 = vset.pattern.permute.xlu0 0
      %357 = vperm.xlu0 %356, %v307
      %v358 = vpop.permute.xlu0 %357
      %361 = vset.pattern.permute.xlu0 0
      %362 = vperm.xlu0 %361, %v308
      %v363 = vpop.permute.xlu0 %362
      %366 = vset.pattern.permute.xlu0 0
      %367 = vperm.xlu0 %366, %v309
      %v368 = vpop.permute.xlu0 %367
      %371 = vset.pattern.permute.xlu0 0
      %372 = vperm.xlu0 %371, %v310
      %v373 = vpop.permute.xlu0 %372
      %376 = vset.pattern.permute.xlu0 0
      %377 = vperm.xlu0 %376, %v311
      %v378 = vpop.permute.xlu0 %377
      %381 = vset.pattern.permute.xlu0 0
      %382 = vperm.xlu0 %381, %v312
      %v383 = vpop.permute.xlu0 %382
      %386 = vset.pattern.permute.xlu0 0
      %387 = vperm.xlu0 %386, %v313
      %v388 = vpop.permute.xlu0 %387
      %391 = vset.pattern.permute.xlu0 0
      %392 = vperm.xlu0 %391, %v314
      %v393 = vpop.permute.xlu0 %392
      %396 = vset.pattern.permute.xlu0 0
      %397 = vperm.xlu0 %396, %v315
      %v398 = vpop.permute.xlu0 %397
      %401 = vset.pattern.permute.xlu0 0
      %402 = vperm.xlu0 %401, %v316
      %v403 = vpop.permute.xlu0 %402
      %406 = vset.pattern.permute.xlu0 0
      %407 = vperm.xlu0 %406, %v317
      %v408 = vpop.permute.xlu0 %407
      %411 = vset.pattern.permute.xlu0 0
      %412 = vperm.xlu0 %411, %v318
      %v413 = vpop.permute.xlu0 %412
      %416 = vset.pattern.permute.xlu0 0
      %417 = vperm.xlu0 %416, %v319
      %v418 = vpop.permute.xlu0 %417
      %421 = vset.pattern.permute.xlu0 0
      %422 = vperm.xlu0 %421, %v320
      %v423 = vpop.permute.xlu0 %422
      %426 = vset.pattern.permute.xlu0 0
      %427 = vperm.xlu0 %426, %v321
      %v428 = vpop.permute.xlu0 %427
      %431 = vset.pattern.permute.xlu0 0
      %432 = vperm.xlu0 %431, %v322
      %v433 = vpop.permute.xlu0 %432
      %436 = vset.pattern.permute.xlu0 0
      %437 = vperm.xlu0 %436, %v323
      %v438 = vpop.permute.xlu0 %437
      %441 = vset.pattern.permute.xlu0 0
      %442 = vperm.xlu0 %441, %v324
      %v443 = vpop.permute.xlu0 %442
      %446 = vset.pattern.permute.xlu0 0
      %447 = vperm.xlu0 %446, %v325
      %v448 = vpop.permute.xlu0 %447
      %451 = vset.pattern.permute.xlu0 0
      %452 = vperm.xlu0 %451, %v326
      %v453 = vpop.permute.xlu0 %452
      %456 = vset.pattern.permute.xlu0 0
      %457 = vperm.xlu0 %456, %v327
      %v458 = vpop.permute.xlu0 %457
      %461 = vset.pattern.permute.xlu0 0
      %462 = vperm.xlu0 %461, %v328
      %v463 = vpop.permute.xlu0 %462
      %466 = vset.pattern.permute.xlu0 0
      %467 = vperm.xlu0 %466, %v329
      %v468 = vpop.permute.xlu0 %467
      %471 = vset.pattern.permute.xlu0 0
      %472 = vperm.xlu0 %471, %v330
      %v473 = vpop.permute.xlu0 %472
      %476 = vset.pattern.permute.xlu0 0
      %477 = vperm.xlu0 %476, %v331
      %v478 = vpop.permute.xlu0 %477
      %481 = vset.pattern.permute.xlu0 0
      %482 = vperm.xlu0 %481, %v332
      %v483 = vpop.permute.xlu0 %482
      %486 = vset.pattern.permute.xlu0 0
      %487 = vperm.xlu0 %486, %v333
      %v488 = vpop.permute.xlu0 %487
      %491 = vset.pattern.permute.xlu0 0
      %492 = vperm.xlu0 %491, %v334
      %v493 = vpop.permute.xlu0 %492
      %v495 = vperm.slane %v283, 0
      %v496 = vmul.f32 %v338, %v495
      %v497 = vmul.f32 %v343, %v495
      %v498 = vmul.f32 %v348, %v495
      %v499 = vmul.f32 %v353, %v495
      %v500 = vmul.f32 %v358, %v495
      %v501 = vmul.f32 %v363, %v495
      %v502 = vmul.f32 %v368, %v495
      %v503 = vmul.f32 %v373, %v495
      %v504 = vmul.f32 %v378, %v495
      %v505 = vmul.f32 %v383, %v495
      %v506 = vmul.f32 %v388, %v495
      %v507 = vmul.f32 %v393, %v495
      %v508 = vmul.f32 %v398, %v495
      %v509 = vmul.f32 %v403, %v495
      %v510 = vmul.f32 %v408, %v495
      %v511 = vmul.f32 %v413, %v495
      %v512 = vmul.f32 %v418, %v495
      %v513 = vmul.f32 %v423, %v495
      %v514 = vmul.f32 %v428, %v495
      %v515 = vmul.f32 %v433, %v495
      %v516 = vmul.f32 %v438, %v495
      %v517 = vmul.f32 %v443, %v495
      %v518 = vmul.f32 %v448, %v495
      %v519 = vmul.f32 %v453, %v495
      %v520 = vmul.f32 %v458, %v495
      %v521 = vmul.f32 %v463, %v495
      %v522 = vmul.f32 %v468, %v495
      %v523 = vmul.f32 %v473, %v495
      %v524 = vmul.f32 %v478, %v495
      %v525 = vmul.f32 %v483, %v495
      %v526 = vmul.f32 %v488, %v495
      %v527 = vmul.f32 %v493, %v495
      %v529 = vperm.slane %v282, 0
      %v531 = vadd.f32 %v529, %v496
      %v532 = vadd.f32 %v529, %v497
      %v533 = vadd.f32 %v529, %v498
      %v534 = vadd.f32 %v529, %v499
      %v535 = vadd.f32 %v529, %v500
      %v536 = vadd.f32 %v529, %v501
      %v537 = vadd.f32 %v529, %v502
      %v538 = vadd.f32 %v529, %v503
      %v539 = vadd.f32 %v529, %v504
      %v540 = vadd.f32 %v529, %v505
      %v541 = vadd.f32 %v529, %v506
      %v542 = vadd.f32 %v529, %v507
      %v543 = vadd.f32 %v529, %v508
      %v544 = vadd.f32 %v529, %v509
      %v545 = vadd.f32 %v529, %v510
      %v546 = vadd.f32 %v529, %v511
      %v547 = vadd.f32 %v529, %v512
      %v548 = vadd.f32 %v529, %v513
      %v549 = vadd.f32 %v529, %v514
      %v550 = vadd.f32 %v529, %v515
      %v551 = vadd.f32 %v529, %v516
      %v552 = vadd.f32 %v529, %v517
      %v553 = vadd.f32 %v529, %v518
      %v554 = vadd.f32 %v529, %v519
      %v555 = vadd.f32 %v529, %v520
      %v556 = vadd.f32 %v529, %v521
      %v557 = vadd.f32 %v529, %v522
      %v558 = vadd.f32 %v529, %v523
      %v559 = vadd.f32 %v529, %v524
      %v560 = vadd.f32 %v529, %v525
      %v561 = vadd.f32 %v529, %v526
      %v562 = vadd.f32 %v529, %v527
      %563 = vset.pattern.permute.xlu0 1
      %564 = vperm.xlu0 %563, %v303
      %v565 = vpop.permute.xlu0 %564
      %567 = vset.pattern.permute.xlu0 1
      %568 = vperm.xlu0 %567, %v304
      %v569 = vpop.permute.xlu0 %568
      %571 = vset.pattern.permute.xlu0 1
      %572 = vperm.xlu0 %571, %v305
      %v573 = vpop.permute.xlu0 %572
      %575 = vset.pattern.permute.xlu0 1
      %576 = vperm.xlu0 %575, %v306
      %v577 = vpop.permute.xlu0 %576
      %579 = vset.pattern.permute.xlu0 1
      %580 = vperm.xlu0 %579, %v307
      %v581 = vpop.permute.xlu0 %580
      %583 = vset.pattern.permute.xlu0 1
      %584 = vperm.xlu0 %583, %v308
      %v585 = vpop.permute.xlu0 %584
      %587 = vset.pattern.permute.xlu0 1
      %588 = vperm.xlu0 %587, %v309
      %v589 = vpop.permute.xlu0 %588
      %591 = vset.pattern.permute.xlu0 1
      %592 = vperm.xlu0 %591, %v310
      %v593 = vpop.permute.xlu0 %592
      %595 = vset.pattern.permute.xlu0 1
      %596 = vperm.xlu0 %595, %v311
      %v597 = vpop.permute.xlu0 %596
      %599 = vset.pattern.permute.xlu0 1
      %600 = vperm.xlu0 %599, %v312
      %v601 = vpop.permute.xlu0 %600
      %603 = vset.pattern.permute.xlu0 1
      %604 = vperm.xlu0 %603, %v313
      %v605 = vpop.permute.xlu0 %604
      %607 = vset.pattern.permute.xlu0 1
      %608 = vperm.xlu0 %607, %v314
      %v609 = vpop.permute.xlu0 %608
      %611 = vset.pattern.permute.xlu0 1
      %612 = vperm.xlu0 %611, %v315
      %v613 = vpop.permute.xlu0 %612
      %615 = vset.pattern.permute.xlu0 1
      %616 = vperm.xlu0 %615, %v316
      %v617 = vpop.permute.xlu0 %616
      %619 = vset.pattern.permute.xlu0 1
      %620 = vperm.xlu0 %619, %v317
      %v621 = vpop.permute.xlu0 %620
      %623 = vset.pattern.permute.xlu0 1
      %624 = vperm.xlu0 %623, %v318
      %v625 = vpop.permute.xlu0 %624
      %627 = vset.pattern.permute.xlu0 1
      %628 = vperm.xlu0 %627, %v319
      %v629 = vpop.permute.xlu0 %628
      %631 = vset.pattern.permute.xlu0 1
      %632 = vperm.xlu0 %631, %v320
      %v633 = vpop.permute.xlu0 %632
      %635 = vset.pattern.permute.xlu0 1
      %636 = vperm.xlu0 %635, %v321
      %v637 = vpop.permute.xlu0 %636
      %639 = vset.pattern.permute.xlu0 1
      %640 = vperm.xlu0 %639, %v322
      %v641 = vpop.permute.xlu0 %640
      %643 = vset.pattern.permute.xlu0 1
      %644 = vperm.xlu0 %643, %v323
      %v645 = vpop.permute.xlu0 %644
      %647 = vset.pattern.permute.xlu0 1
      %648 = vperm.xlu0 %647, %v324
      %v649 = vpop.permute.xlu0 %648
      %651 = vset.pattern.permute.xlu0 1
      %652 = vperm.xlu0 %651, %v325
      %v653 = vpop.permute.xlu0 %652
      %655 = vset.pattern.permute.xlu0 1
      %656 = vperm.xlu0 %655, %v326
      %v657 = vpop.permute.xlu0 %656
      %659 = vset.pattern.permute.xlu0 1
      %660 = vperm.xlu0 %659, %v327
      %v661 = vpop.permute.xlu0 %660
      %663 = vset.pattern.permute.xlu0 1
      %664 = vperm.xlu0 %663, %v328
      %v665 = vpop.permute.xlu0 %664
      %667 = vset.pattern.permute.xlu0 1
      %668 = vperm.xlu0 %667, %v329
      %v669 = vpop.permute.xlu0 %668
      %671 = vset.pattern.permute.xlu0 1
      %672 = vperm.xlu0 %671, %v330
      %v673 = vpop.permute.xlu0 %672
      %675 = vset.pattern.permute.xlu0 1
      %676 = vperm.xlu0 %675, %v331
      %v677 = vpop.permute.xlu0 %676
      %679 = vset.pattern.permute.xlu0 1
      %680 = vperm.xlu0 %679, %v332
      %v681 = vpop.permute.xlu0 %680
      %683 = vset.pattern.permute.xlu0 1
      %684 = vperm.xlu0 %683, %v333
      %v685 = vpop.permute.xlu0 %684
      %687 = vset.pattern.permute.xlu0 1
      %688 = vperm.xlu0 %687, %v334
      %v689 = vpop.permute.xlu0 %688
      %v691 = vperm.slane %v283, 1
      %v692 = vmul.f32 %v565, %v691
      %v693 = vmul.f32 %v569, %v691
      %v694 = vmul.f32 %v573, %v691
      %v695 = vmul.f32 %v577, %v691
      %v696 = vmul.f32 %v581, %v691
      %v697 = vmul.f32 %v585, %v691
      %v698 = vmul.f32 %v589, %v691
      %v699 = vmul.f32 %v593, %v691
      %v700 = vmul.f32 %v597, %v691
      %v701 = vmul.f32 %v601, %v691
      %v702 = vmul.f32 %v605, %v691
      %v703 = vmul.f32 %v609, %v691
      %v704 = vmul.f32 %v613, %v691
      %v705 = vmul.f32 %v617, %v691
      %v706 = vmul.f32 %v621, %v691
      %v707 = vmul.f32 %v625, %v691
      %v708 = vmul.f32 %v629, %v691
      %v709 = vmul.f32 %v633, %v691
      %v710 = vmul.f32 %v637, %v691
      %v711 = vmul.f32 %v641, %v691
      %v712 = vmul.f32 %v645, %v691
      %v713 = vmul.f32 %v649, %v691
      %v714 = vmul.f32 %v653, %v691
      %v715 = vmul.f32 %v657, %v691
      %v716 = vmul.f32 %v661, %v691
      %v717 = vmul.f32 %v665, %v691
      %v718 = vmul.f32 %v669, %v691
      %v719 = vmul.f32 %v673, %v691
      %v720 = vmul.f32 %v677, %v691
      %v721 = vmul.f32 %v681, %v691
      %v722 = vmul.f32 %v685, %v691
      %v723 = vmul.f32 %v689, %v691
      %v724 = vadd.f32 %v531, %v692
      %v725 = vadd.f32 %v532, %v693
      %v726 = vadd.f32 %v533, %v694
      %v727 = vadd.f32 %v534, %v695
      %v728 = vadd.f32 %v535, %v696
      %v729 = vadd.f32 %v536, %v697
      %v730 = vadd.f32 %v537, %v698
      %v731 = vadd.f32 %v538, %v699
      %v732 = vadd.f32 %v539, %v700
      %v733 = vadd.f32 %v540, %v701
      %v734 = vadd.f32 %v541, %v702
      %v735 = vadd.f32 %v542, %v703
      %v736 = vadd.f32 %v543, %v704
      %v737 = vadd.f32 %v544, %v705
      %v738 = vadd.f32 %v545, %v706
      %v739 = vadd.f32 %v546, %v707
      %v740 = vadd.f32 %v547, %v708
      %v741 = vadd.f32 %v548, %v709
      %v742 = vadd.f32 %v549, %v710
      %v743 = vadd.f32 %v550, %v711
      %v744 = vadd.f32 %v551, %v712
      %v745 = vadd.f32 %v552, %v713
      %v746 = vadd.f32 %v553, %v714
      %v747 = vadd.f32 %v554, %v715
      %v748 = vadd.f32 %v555, %v716
      %v749 = vadd.f32 %v556, %v717
      %v750 = vadd.f32 %v557, %v718
      %v751 = vadd.f32 %v558, %v719
      %v752 = vadd.f32 %v559, %v720
      %v753 = vadd.f32 %v560, %v721
      %v754 = vadd.f32 %v561, %v722
      %v755 = vadd.f32 %v562, %v723
      %756 = vset.pattern.permute.xlu0 2
      %757 = vperm.xlu0 %756, %v303
      %v758 = vpop.permute.xlu0 %757
      %760 = vset.pattern.permute.xlu0 2
      %761 = vperm.xlu0 %760, %v304
      %v762 = vpop.permute.xlu0 %761
      %764 = vset.pattern.permute.xlu0 2
      %765 = vperm.xlu0 %764, %v305
      %v766 = vpop.permute.xlu0 %765
      %768 = vset.pattern.permute.xlu0 2
      %769 = vperm.xlu0 %768, %v306
      %v770 = vpop.permute.xlu0 %769
      %772 = vset.pattern.permute.xlu0 2
      %773 = vperm.xlu0 %772, %v307
      %v774 = vpop.permute.xlu0 %773
      %776 = vset.pattern.permute.xlu0 2
      %777 = vperm.xlu0 %776, %v308
      %v778 = vpop.permute.xlu0 %777
      %780 = vset.pattern.permute.xlu0 2
      %781 = vperm.xlu0 %780, %v309
      %v782 = vpop.permute.xlu0 %781
      %784 = vset.pattern.permute.xlu0 2
      %785 = vperm.xlu0 %784, %v310
      %v786 = vpop.permute.xlu0 %785
      %788 = vset.pattern.permute.xlu0 2
      %789 = vperm.xlu0 %788, %v311
      %v790 = vpop.permute.xlu0 %789
      %792 = vset.pattern.permute.xlu0 2
      %793 = vperm.xlu0 %792, %v312
      %v794 = vpop.permute.xlu0 %793
      %796 = vset.pattern.permute.xlu0 2
      %797 = vperm.xlu0 %796, %v313
      %v798 = vpop.permute.xlu0 %797
      %800 = vset.pattern.permute.xlu0 2
      %801 = vperm.xlu0 %800, %v314
      %v802 = vpop.permute.xlu0 %801
      %804 = vset.pattern.permute.xlu0 2
      %805 = vperm.xlu0 %804, %v315
      %v806 = vpop.permute.xlu0 %805
      %808 = vset.pattern.permute.xlu0 2
      %809 = vperm.xlu0 %808, %v316
      %v810 = vpop.permute.xlu0 %809
      %812 = vset.pattern.permute.xlu0 2
      %813 = vperm.xlu0 %812, %v317
      %v814 = vpop.permute.xlu0 %813
      %816 = vset.pattern.permute.xlu0 2
      %817 = vperm.xlu0 %816, %v318
      %v818 = vpop.permute.xlu0 %817
      %820 = vset.pattern.permute.xlu0 2
      %821 = vperm.xlu0 %820, %v319
      %v822 = vpop.permute.xlu0 %821
      %824 = vset.pattern.permute.xlu0 2
      %825 = vperm.xlu0 %824, %v320
      %v826 = vpop.permute.xlu0 %825
      %828 = vset.pattern.permute.xlu0 2
      %829 = vperm.xlu0 %828, %v321
      %v830 = vpop.permute.xlu0 %829
      %832 = vset.pattern.permute.xlu0 2
      %833 = vperm.xlu0 %832, %v322
      %v834 = vpop.permute.xlu0 %833
      %836 = vset.pattern.permute.xlu0 2
      %837 = vperm.xlu0 %836, %v323
      %v838 = vpop.permute.xlu0 %837
      %840 = vset.pattern.permute.xlu0 2
      %841 = vperm.xlu0 %840, %v324
      %v842 = vpop.permute.xlu0 %841
      %844 = vset.pattern.permute.xlu0 2
      %845 = vperm.xlu0 %844, %v325
      %v846 = vpop.permute.xlu0 %845
      %848 = vset.pattern.permute.xlu0 2
      %849 = vperm.xlu0 %848, %v326
      %v850 = vpop.permute.xlu0 %849
      %852 = vset.pattern.permute.xlu0 2
      %853 = vperm.xlu0 %852, %v327
      %v854 = vpop.permute.xlu0 %853
      %856 = vset.pattern.permute.xlu0 2
      %857 = vperm.xlu0 %856, %v328
      %v858 = vpop.permute.xlu0 %857
      %860 = vset.pattern.permute.xlu0 2
      %861 = vperm.xlu0 %860, %v329
      %v862 = vpop.permute.xlu0 %861
      %864 = vset.pattern.permute.xlu0 2
      %865 = vperm.xlu0 %864, %v330
      %v866 = vpop.permute.xlu0 %865
      %868 = vset.pattern.permute.xlu0 2
      %869 = vperm.xlu0 %868, %v331
      %v870 = vpop.permute.xlu0 %869
      %872 = vset.pattern.permute.xlu0 2
      %873 = vperm.xlu0 %872, %v332
      %v874 = vpop.permute.xlu0 %873
      %876 = vset.pattern.permute.xlu0 2
      %877 = vperm.xlu0 %876, %v333
      %v878 = vpop.permute.xlu0 %877
      %880 = vset.pattern.permute.xlu0 2
      %881 = vperm.xlu0 %880, %v334
      %v882 = vpop.permute.xlu0 %881
      %v884 = vperm.slane %v283, 2
      %v885 = vmul.f32 %v758, %v884
      %v886 = vmul.f32 %v762, %v884
      %v887 = vmul.f32 %v766, %v884
      %v888 = vmul.f32 %v770, %v884
      %v889 = vmul.f32 %v774, %v884
      %v890 = vmul.f32 %v778, %v884
      %v891 = vmul.f32 %v782, %v884
      %v892 = vmul.f32 %v786, %v884
      %v893 = vmul.f32 %v790, %v884
      %v894 = vmul.f32 %v794, %v884
      %v895 = vmul.f32 %v798, %v884
      %v896 = vmul.f32 %v802, %v884
      %v897 = vmul.f32 %v806, %v884
      %v898 = vmul.f32 %v810, %v884
      %v899 = vmul.f32 %v814, %v884
      %v900 = vmul.f32 %v818, %v884
      %v901 = vmul.f32 %v822, %v884
      %v902 = vmul.f32 %v826, %v884
      %v903 = vmul.f32 %v830, %v884
      %v904 = vmul.f32 %v834, %v884
      %v905 = vmul.f32 %v838, %v884
      %v906 = vmul.f32 %v842, %v884
      %v907 = vmul.f32 %v846, %v884
      %v908 = vmul.f32 %v850, %v884
      %v909 = vmul.f32 %v854, %v884
      %v910 = vmul.f32 %v858, %v884
      %v911 = vmul.f32 %v862, %v884
      %v912 = vmul.f32 %v866, %v884
      %v913 = vmul.f32 %v870, %v884
      %v914 = vmul.f32 %v874, %v884
      %v915 = vmul.f32 %v878, %v884
      %v916 = vmul.f32 %v882, %v884
      %v917 = vadd.f32 %v724, %v885
      %v918 = vadd.f32 %v725, %v886
      %v919 = vadd.f32 %v726, %v887
      %v920 = vadd.f32 %v727, %v888
      %v921 = vadd.f32 %v728, %v889
      %v922 = vadd.f32 %v729, %v890
      %v923 = vadd.f32 %v730, %v891
      %v924 = vadd.f32 %v731, %v892
      %v925 = vadd.f32 %v732, %v893
      %v926 = vadd.f32 %v733, %v894
      %v927 = vadd.f32 %v734, %v895
      %v928 = vadd.f32 %v735, %v896
      %v929 = vadd.f32 %v736, %v897
      %v930 = vadd.f32 %v737, %v898
      %v931 = vadd.f32 %v738, %v899
      %v932 = vadd.f32 %v739, %v900
      %v933 = vadd.f32 %v740, %v901
      %v934 = vadd.f32 %v741, %v902
      %v935 = vadd.f32 %v742, %v903
      %v936 = vadd.f32 %v743, %v904
      %v937 = vadd.f32 %v744, %v905
      %v938 = vadd.f32 %v745, %v906
      %v939 = vadd.f32 %v746, %v907
      %v940 = vadd.f32 %v747, %v908
      %v941 = vadd.f32 %v748, %v909
      %v942 = vadd.f32 %v749, %v910
      %v943 = vadd.f32 %v750, %v911
      %v944 = vadd.f32 %v751, %v912
      %v945 = vadd.f32 %v752, %v913
      %v946 = vadd.f32 %v753, %v914
      %v947 = vadd.f32 %v754, %v915
      %v948 = vadd.f32 %v755, %v916
      %v949 = vmax.f32 %v917, 0.0
      %v950 = vmax.f32 %v918, 0.0
      %v951 = vmax.f32 %v919, 0.0
      %v952 = vmax.f32 %v920, 0.0
      %v953 = vmax.f32 %v921, 0.0
      %v954 = vmax.f32 %v922, 0.0
      %v955 = vmax.f32 %v923, 0.0
      %v956 = vmax.f32 %v924, 0.0
      %v957 = vmax.f32 %v925, 0.0
      %v958 = vmax.f32 %v926, 0.0
      %v959 = vmax.f32 %v927, 0.0
      %v960 = vmax.f32 %v928, 0.0
      %v961 = vmax.f32 %v929, 0.0
      %v962 = vmax.f32 %v930, 0.0
      %v963 = vmax.f32 %v931, 0.0
      %v964 = vmax.f32 %v932, 0.0
      %v965 = vmax.f32 %v933, 0.0
      %v966 = vmax.f32 %v934, 0.0
      %v967 = vmax.f32 %v935, 0.0
      %v968 = vmax.f32 %v936, 0.0
      %v969 = vmax.f32 %v937, 0.0
      %v970 = vmax.f32 %v938, 0.0
      %v971 = vmax.f32 %v939, 0.0
      %v972 = vmax.f32 %v940, 0.0
      %v973 = vmax.f32 %v941, 0.0
      %v974 = vmax.f32 %v942, 0.0
      %v975 = vmax.f32 %v943, 0.0
      %v976 = vmax.f32 %v944, 0.0
      %v977 = vmax.f32 %v945, 0.0
      %v978 = vmax.f32 %v946, 0.0
      %v979 = vmax.f32 %v947, 0.0
      %v980 = vmax.f32 %v948, 0.0
      %v981 = vpack.c.bf16 %v950, %v949
      %v982 = vpack.c.bf16 %v952, %v951
      %v983 = vpack.c.bf16 %v954, %v953
      %v984 = vpack.c.bf16 %v956, %v955
      %v985 = vpack.c.bf16 %v958, %v957
      %v986 = vpack.c.bf16 %v960, %v959
      %v987 = vpack.c.bf16 %v962, %v961
      %v988 = vpack.c.bf16 %v964, %v963
      %v989 = vpack.c.bf16 %v966, %v965
      %v990 = vpack.c.bf16 %v968, %v967
      %v991 = vpack.c.bf16 %v970, %v969
      %v992 = vpack.c.bf16 %v972, %v971
      %v993 = vpack.c.bf16 %v974, %v973
      %v994 = vpack.c.bf16 %v976, %v975
      %v995 = vpack.c.bf16 %v978, %v977
      %v996 = vpack.c.bf16 %v980, %v979
      %v998 = vperm.slane %v300, 0
      %v1016 = vunpack.c.l.b16 %v284
      %v1017 = vunpack.c.l.b16 %v285
      %v1018 = vunpack.c.l.b16 %v286
      %v1019 = vunpack.c.l.b16 %v287
      %v1020 = vunpack.c.l.b16 %v288
      %v1021 = vunpack.c.l.b16 %v289
      %v1022 = vunpack.c.l.b16 %v290
      %v1023 = vunpack.c.l.b16 %v291
      %v1024 = vunpack.c.l.b16 %v292
      %v1025 = vunpack.c.l.b16 %v293
      %v1026 = vunpack.c.l.b16 %v294
      %v1027 = vunpack.c.l.b16 %v295
      %v1028 = vunpack.c.l.b16 %v296
      %v1029 = vunpack.c.l.b16 %v297
      %v1030 = vunpack.c.l.b16 %v298
      %v1031 = vunpack.c.l.b16 %v299
      %v1032 = vpack.c.b16 %v1017, %v1016
      %v1033 = vpack.c.b16 %v1019, %v1018
      %v1034 = vpack.c.b16 %v1021, %v1020
      %v1035 = vpack.c.b16 %v1023, %v1022
      %v1036 = vpack.c.b16 %v1025, %v1024
      %v1037 = vpack.c.b16 %v1027, %v1026
      %v1038 = vpack.c.b16 %v1029, %v1028
      %v1039 = vpack.c.b16 %v1031, %v1030
      %1048 = vmatpush.bf16.msra.mxu0 %v1039
      %1049 = vmatpush.bf16.msra.mxu0 %v1038
      %1050 = vmatpush.bf16.msra.mxu0 %v1037
      %1051 = vmatpush.bf16.msra.mxu0 %v1036
      %1052 = vmatpush.bf16.msra.mxu0 %v1035
      %1053 = vmatpush.bf16.msra.mxu0 %v1034
      %1054 = vmatpush.bf16.msra.mxu0 %v1033
      %1055 = vmatpush.bf16.msra.mxu0 %v1032
      %1056 = vmatmul.bf16.gmra.mxu0 %v981
      %v1057 = vpop.f32.mrf.mxu0
      %v1058 = vadd.f32 %v998, %v1057
      %v1059 = vpop.f32.mrf.mxu0
      %v1060 = vadd.f32 %v998, %v1059
      %1061 = vmatmul.bf16.gmra.mxu0 %v982
      %v1062 = vpop.f32.mrf.mxu0
      %v1063 = vadd.f32 %v998, %v1062
      %v1064 = vpop.f32.mrf.mxu0
      %v1065 = vadd.f32 %v998, %v1064
      %1066 = vmatmul.bf16.gmra.mxu0 %v983
      %v1067 = vpop.f32.mrf.mxu0
      %v1068 = vadd.f32 %v998, %v1067
      %v1069 = vpop.f32.mrf.mxu0
      %v1070 = vadd.f32 %v998, %v1069
      %1071 = vmatmul.bf16.gmra.mxu0 %v984
      %v1072 = vpop.f32.mrf.mxu0
      %v1073 = vadd.f32 %v998, %v1072
      %v1074 = vpop.f32.mrf.mxu0
      %v1075 = vadd.f32 %v998, %v1074
      %1076 = vmatmul.bf16.gmra.mxu0 %v985
      %v1077 = vpop.f32.mrf.mxu0
      %v1078 = vadd.f32 %v998, %v1077
      %v1079 = vpop.f32.mrf.mxu0
      %v1080 = vadd.f32 %v998, %v1079
      %1081 = vmatmul.bf16.gmra.mxu0 %v986
      %v1082 = vpop.f32.mrf.mxu0
      %v1083 = vadd.f32 %v998, %v1082
      %v1084 = vpop.f32.mrf.mxu0
      %v1085 = vadd.f32 %v998, %v1084
      %1086 = vmatmul.bf16.gmra.mxu0 %v987
      %v1087 = vpop.f32.mrf.mxu0
      %v1088 = vadd.f32 %v998, %v1087
      %v1089 = vpop.f32.mrf.mxu0
      %v1090 = vadd.f32 %v998, %v1089
      %1091 = vmatmul.bf16.gmra.mxu0 %v988
      %v1092 = vpop.f32.mrf.mxu0
      %v1093 = vadd.f32 %v998, %v1092
      %v1094 = vpop.f32.mrf.mxu0
      %v1095 = vadd.f32 %v998, %v1094
      %1096 = vmatmul.bf16.gmra.mxu0 %v989
      %v1097 = vpop.f32.mrf.mxu0
      %v1098 = vadd.f32 %v998, %v1097
      %v1099 = vpop.f32.mrf.mxu0
      %v1100 = vadd.f32 %v998, %v1099
      %1101 = vmatmul.bf16.gmra.mxu0 %v990
      %v1102 = vpop.f32.mrf.mxu0
      %v1103 = vadd.f32 %v998, %v1102
      %v1104 = vpop.f32.mrf.mxu0
      %v1105 = vadd.f32 %v998, %v1104
      %1106 = vmatmul.bf16.gmra.mxu0 %v991
      %v1107 = vpop.f32.mrf.mxu0
      %v1108 = vadd.f32 %v998, %v1107
      %v1109 = vpop.f32.mrf.mxu0
      %v1110 = vadd.f32 %v998, %v1109
      %1111 = vmatmul.bf16.gmra.mxu0 %v992
      %v1112 = vpop.f32.mrf.mxu0
      %v1113 = vadd.f32 %v998, %v1112
      %v1114 = vpop.f32.mrf.mxu0
      %v1115 = vadd.f32 %v998, %v1114
      %1116 = vmatmul.bf16.gmra.mxu0 %v993
      %v1117 = vpop.f32.mrf.mxu0
      %v1118 = vadd.f32 %v998, %v1117
      %v1119 = vpop.f32.mrf.mxu0
      %v1120 = vadd.f32 %v998, %v1119
      %1121 = vmatmul.bf16.gmra.mxu0 %v994
      %v1122 = vpop.f32.mrf.mxu0
      %v1123 = vadd.f32 %v998, %v1122
      %v1124 = vpop.f32.mrf.mxu0
      %v1125 = vadd.f32 %v998, %v1124
      %1126 = vmatmul.bf16.gmra.mxu0 %v995
      %v1127 = vpop.f32.mrf.mxu0
      %v1128 = vadd.f32 %v998, %v1127
      %v1129 = vpop.f32.mrf.mxu0
      %v1130 = vadd.f32 %v998, %v1129
      %1131 = vmatmul.bf16.gmra.mxu0 %v996
      %v1132 = vpop.f32.mrf.mxu0
      %v1133 = vadd.f32 %v998, %v1132
      %v1134 = vpop.f32.mrf.mxu0
      %v1135 = vadd.f32 %v998, %v1134
      %1136 = vdwg.mxu0
      %v1137 = vmax.f32 %v1058, 0.0
      %v1138 = vmax.f32 %v1060, 0.0
      %v1139 = vmax.f32 %v1063, 0.0
      %v1140 = vmax.f32 %v1065, 0.0
      %v1141 = vmax.f32 %v1068, 0.0
      %v1142 = vmax.f32 %v1070, 0.0
      %v1143 = vmax.f32 %v1073, 0.0
      %v1144 = vmax.f32 %v1075, 0.0
      %v1145 = vmax.f32 %v1078, 0.0
      %v1146 = vmax.f32 %v1080, 0.0
      %v1147 = vmax.f32 %v1083, 0.0
      %v1148 = vmax.f32 %v1085, 0.0
      %v1149 = vmax.f32 %v1088, 0.0
      %v1150 = vmax.f32 %v1090, 0.0
      %v1151 = vmax.f32 %v1093, 0.0
      %v1152 = vmax.f32 %v1095, 0.0
      %v1153 = vmax.f32 %v1098, 0.0
      %v1154 = vmax.f32 %v1100, 0.0
      %v1155 = vmax.f32 %v1103, 0.0
      %v1156 = vmax.f32 %v1105, 0.0
      %v1157 = vmax.f32 %v1108, 0.0
      %v1158 = vmax.f32 %v1110, 0.0
      %v1159 = vmax.f32 %v1113, 0.0
      %v1160 = vmax.f32 %v1115, 0.0
      %v1161 = vmax.f32 %v1118, 0.0
      %v1162 = vmax.f32 %v1120, 0.0
      %v1163 = vmax.f32 %v1123, 0.0
      %v1164 = vmax.f32 %v1125, 0.0
      %v1165 = vmax.f32 %v1128, 0.0
      %v1166 = vmax.f32 %v1130, 0.0
      %v1167 = vmax.f32 %v1133, 0.0
      %v1168 = vmax.f32 %v1135, 0.0
      %v1169 = vperm.slane %v301, 0
      %v1170 = vmul.f32 %v1137, %v1169
      %v1171 = vmul.f32 %v1138, %v1169
      %v1172 = vmul.f32 %v1139, %v1169
      %v1173 = vmul.f32 %v1140, %v1169
      %v1174 = vmul.f32 %v1141, %v1169
      %v1175 = vmul.f32 %v1142, %v1169
      %v1176 = vmul.f32 %v1143, %v1169
      %v1177 = vmul.f32 %v1144, %v1169
      %v1178 = vmul.f32 %v1145, %v1169
      %v1179 = vmul.f32 %v1146, %v1169
      %v1180 = vmul.f32 %v1147, %v1169
      %v1181 = vmul.f32 %v1148, %v1169
      %v1182 = vmul.f32 %v1149, %v1169
      %v1183 = vmul.f32 %v1150, %v1169
      %v1184 = vmul.f32 %v1151, %v1169
      %v1185 = vmul.f32 %v1152, %v1169
      %v1186 = vmul.f32 %v1153, %v1169
      %v1187 = vmul.f32 %v1154, %v1169
      %v1188 = vmul.f32 %v1155, %v1169
      %v1189 = vmul.f32 %v1156, %v1169
      %v1190 = vmul.f32 %v1157, %v1169
      %v1191 = vmul.f32 %v1158, %v1169
      %v1192 = vmul.f32 %v1159, %v1169
      %v1193 = vmul.f32 %v1160, %v1169
      %v1194 = vmul.f32 %v1161, %v1169
      %v1195 = vmul.f32 %v1162, %v1169
      %v1196 = vmul.f32 %v1163, %v1169
      %v1197 = vmul.f32 %v1164, %v1169
      %v1198 = vmul.f32 %v1165, %v1169
      %v1199 = vmul.f32 %v1166, %v1169
      %v1200 = vmul.f32 %v1167, %v1169
      %v1201 = vmul.f32 %v1168, %v1169
      %1202 = vadd.xlane.f32.xlu0 %v1170
      %v1203 = vpop.xlane.xlu0 %1202
      %1204 = vadd.xlane.f32.xlu0 %v1171
      %v1205 = vpop.xlane.xlu0 %1204
      %1206 = vadd.xlane.f32.xlu0 %v1172
      %v1207 = vpop.xlane.xlu0 %1206
      %1208 = vadd.xlane.f32.xlu0 %v1173
      %v1209 = vpop.xlane.xlu0 %1208
      %1210 = vadd.xlane.f32.xlu0 %v1174
      %v1211 = vpop.xlane.xlu0 %1210
      %1212 = vadd.xlane.f32.xlu0 %v1175
      %v1213 = vpop.xlane.xlu0 %1212
      %1214 = vadd.xlane.f32.xlu0 %v1176
      %v1215 = vpop.xlane.xlu0 %1214
      %1216 = vadd.xlane.f32.xlu0 %v1177
      %v1217 = vpop.xlane.xlu0 %1216
      %1218 = vadd.xlane.f32.xlu0 %v1178
      %v1219 = vpop.xlane.xlu0 %1218
      %1220 = vadd.xlane.f32.xlu0 %v1179
      %v1221 = vpop.xlane.xlu0 %1220
      %1222 = vadd.xlane.f32.xlu0 %v1180
      %v1223 = vpop.xlane.xlu0 %1222
      %1224 = vadd.xlane.f32.xlu0 %v1181
      %v1225 = vpop.xlane.xlu0 %1224
      %1226 = vadd.xlane.f32.xlu0 %v1182
      %v1227 = vpop.xlane.xlu0 %1226
      %1228 = vadd.xlane.f32.xlu0 %v1183
      %v1229 = vpop.xlane.xlu0 %1228
      %1230 = vadd.xlane.f32.xlu0 %v1184
      %v1231 = vpop.xlane.xlu0 %1230
      %1232 = vadd.xlane.f32.xlu0 %v1185
      %v1233 = vpop.xlane.xlu0 %1232
      %1234 = vadd.xlane.f32.xlu0 %v1186
      %v1235 = vpop.xlane.xlu0 %1234
      %1236 = vadd.xlane.f32.xlu0 %v1187
      %v1237 = vpop.xlane.xlu0 %1236
      %1238 = vadd.xlane.f32.xlu0 %v1188
      %v1239 = vpop.xlane.xlu0 %1238
      %1240 = vadd.xlane.f32.xlu0 %v1189
      %v1241 = vpop.xlane.xlu0 %1240
      %1242 = vadd.xlane.f32.xlu0 %v1190
      %v1243 = vpop.xlane.xlu0 %1242
      %1244 = vadd.xlane.f32.xlu0 %v1191
      %v1245 = vpop.xlane.xlu0 %1244
      %1246 = vadd.xlane.f32.xlu0 %v1192
      %v1247 = vpop.xlane.xlu0 %1246
      %1248 = vadd.xlane.f32.xlu0 %v1193
      %v1249 = vpop.xlane.xlu0 %1248
      %1250 = vadd.xlane.f32.xlu0 %v1194
      %v1251 = vpop.xlane.xlu0 %1250
      %1252 = vadd.xlane.f32.xlu0 %v1195
      %v1253 = vpop.xlane.xlu0 %1252
      %1254 = vadd.xlane.f32.xlu0 %v1196
      %v1255 = vpop.xlane.xlu0 %1254
      %1256 = vadd.xlane.f32.xlu0 %v1197
      %v1257 = vpop.xlane.xlu0 %1256
      %1258 = vadd.xlane.f32.xlu0 %v1198
      %v1259 = vpop.xlane.xlu0 %1258
      %1260 = vadd.xlane.f32.xlu0 %v1199
      %v1261 = vpop.xlane.xlu0 %1260
      %1262 = vadd.xlane.f32.xlu0 %v1200
      %v1263 = vpop.xlane.xlu0 %1262
      %1264 = vadd.xlane.f32.xlu0 %v1201
      %v1265 = vpop.xlane.xlu0 %1264
      %v1266 = vperm.slane %v301, 1
      %v1267 = vmul.f32 %v1137, %v1266
      %v1268 = vmul.f32 %v1138, %v1266
      %v1269 = vmul.f32 %v1139, %v1266
      %v1270 = vmul.f32 %v1140, %v1266
      %v1271 = vmul.f32 %v1141, %v1266
      %v1272 = vmul.f32 %v1142, %v1266
      %v1273 = vmul.f32 %v1143, %v1266
      %v1274 = vmul.f32 %v1144, %v1266
      %v1275 = vmul.f32 %v1145, %v1266
      %v1276 = vmul.f32 %v1146, %v1266
      %v1277 = vmul.f32 %v1147, %v1266
      %v1278 = vmul.f32 %v1148, %v1266
      %v1279 = vmul.f32 %v1149, %v1266
      %v1280 = vmul.f32 %v1150, %v1266
      %v1281 = vmul.f32 %v1151, %v1266
      %v1282 = vmul.f32 %v1152, %v1266
      %v1283 = vmul.f32 %v1153, %v1266
      %v1284 = vmul.f32 %v1154, %v1266
      %v1285 = vmul.f32 %v1155, %v1266
      %v1286 = vmul.f32 %v1156, %v1266
      %v1287 = vmul.f32 %v1157, %v1266
      %v1288 = vmul.f32 %v1158, %v1266
      %v1289 = vmul.f32 %v1159, %v1266
      %v1290 = vmul.f32 %v1160, %v1266
      %v1291 = vmul.f32 %v1161, %v1266
      %v1292 = vmul.f32 %v1162, %v1266
      %v1293 = vmul.f32 %v1163, %v1266
      %v1294 = vmul.f32 %v1164, %v1266
      %v1295 = vmul.f32 %v1165, %v1266
      %v1296 = vmul.f32 %v1166, %v1266
      %v1297 = vmul.f32 %v1167, %v1266
      %v1298 = vmul.f32 %v1168, %v1266
      %1299 = vadd.xlane.f32.xlu0 %v1267
      %v1300 = vpop.xlane.xlu0 %1299
      %1301 = vadd.xlane.f32.xlu0 %v1268
      %v1302 = vpop.xlane.xlu0 %1301
      %1303 = vadd.xlane.f32.xlu0 %v1269
      %v1304 = vpop.xlane.xlu0 %1303
      %1305 = vadd.xlane.f32.xlu0 %v1270
      %v1306 = vpop.xlane.xlu0 %1305
      %1307 = vadd.xlane.f32.xlu0 %v1271
      %v1308 = vpop.xlane.xlu0 %1307
      %1309 = vadd.xlane.f32.xlu0 %v1272
      %v1310 = vpop.xlane.xlu0 %1309
      %1311 = vadd.xlane.f32.xlu0 %v1273
      %v1312 = vpop.xlane.xlu0 %1311
      %1313 = vadd.xlane.f32.xlu0 %v1274
      %v1314 = vpop.xlane.xlu0 %1313
      %1315 = vadd.xlane.f32.xlu0 %v1275
      %v1316 = vpop.xlane.xlu0 %1315
      %1317 = vadd.xlane.f32.xlu0 %v1276
      %v1318 = vpop.xlane.xlu0 %1317
      %1319 = vadd.xlane.f32.xlu0 %v1277
      %v1320 = vpop.xlane.xlu0 %1319
      %1321 = vadd.xlane.f32.xlu0 %v1278
      %v1322 = vpop.xlane.xlu0 %1321
      %1323 = vadd.xlane.f32.xlu0 %v1279
      %v1324 = vpop.xlane.xlu0 %1323
      %1325 = vadd.xlane.f32.xlu0 %v1280
      %v1326 = vpop.xlane.xlu0 %1325
      %1327 = vadd.xlane.f32.xlu0 %v1281
      %v1328 = vpop.xlane.xlu0 %1327
      %1329 = vadd.xlane.f32.xlu0 %v1282
      %v1330 = vpop.xlane.xlu0 %1329
      %1331 = vadd.xlane.f32.xlu0 %v1283
      %v1332 = vpop.xlane.xlu0 %1331
      %1333 = vadd.xlane.f32.xlu0 %v1284
      %v1334 = vpop.xlane.xlu0 %1333
      %1335 = vadd.xlane.f32.xlu0 %v1285
      %v1336 = vpop.xlane.xlu0 %1335
      %1337 = vadd.xlane.f32.xlu0 %v1286
      %v1338 = vpop.xlane.xlu0 %1337
      %1339 = vadd.xlane.f32.xlu0 %v1287
      %v1340 = vpop.xlane.xlu0 %1339
      %1341 = vadd.xlane.f32.xlu0 %v1288
      %v1342 = vpop.xlane.xlu0 %1341
      %1343 = vadd.xlane.f32.xlu0 %v1289
      %v1344 = vpop.xlane.xlu0 %1343
      %1345 = vadd.xlane.f32.xlu0 %v1290
      %v1346 = vpop.xlane.xlu0 %1345
      %1347 = vadd.xlane.f32.xlu0 %v1291
      %v1348 = vpop.xlane.xlu0 %1347
      %1349 = vadd.xlane.f32.xlu0 %v1292
      %v1350 = vpop.xlane.xlu0 %1349
      %1351 = vadd.xlane.f32.xlu0 %v1293
      %v1352 = vpop.xlane.xlu0 %1351
      %1353 = vadd.xlane.f32.xlu0 %v1294
      %v1354 = vpop.xlane.xlu0 %1353
      %1355 = vadd.xlane.f32.xlu0 %v1295
      %v1356 = vpop.xlane.xlu0 %1355
      %1357 = vadd.xlane.f32.xlu0 %v1296
      %v1358 = vpop.xlane.xlu0 %1357
      %1359 = vadd.xlane.f32.xlu0 %v1297
      %v1360 = vpop.xlane.xlu0 %1359
      %1361 = vadd.xlane.f32.xlu0 %v1298
      %v1362 = vpop.xlane.xlu0 %1361
      %v1363 = vperm.slane %v301, 2
      %v1364 = vmul.f32 %v1137, %v1363
      %v1365 = vmul.f32 %v1138, %v1363
      %v1366 = vmul.f32 %v1139, %v1363
      %v1367 = vmul.f32 %v1140, %v1363
      %v1368 = vmul.f32 %v1141, %v1363
      %v1369 = vmul.f32 %v1142, %v1363
      %v1370 = vmul.f32 %v1143, %v1363
      %v1371 = vmul.f32 %v1144, %v1363
      %v1372 = vmul.f32 %v1145, %v1363
      %v1373 = vmul.f32 %v1146, %v1363
      %v1374 = vmul.f32 %v1147, %v1363
      %v1375 = vmul.f32 %v1148, %v1363
      %v1376 = vmul.f32 %v1149, %v1363
      %v1377 = vmul.f32 %v1150, %v1363
      %v1378 = vmul.f32 %v1151, %v1363
      %v1379 = vmul.f32 %v1152, %v1363
      %v1380 = vmul.f32 %v1153, %v1363
      %v1381 = vmul.f32 %v1154, %v1363
      %v1382 = vmul.f32 %v1155, %v1363
      %v1383 = vmul.f32 %v1156, %v1363
      %v1384 = vmul.f32 %v1157, %v1363
      %v1385 = vmul.f32 %v1158, %v1363
      %v1386 = vmul.f32 %v1159, %v1363
      %v1387 = vmul.f32 %v1160, %v1363
      %v1388 = vmul.f32 %v1161, %v1363
      %v1389 = vmul.f32 %v1162, %v1363
      %v1390 = vmul.f32 %v1163, %v1363
      %v1391 = vmul.f32 %v1164, %v1363
      %v1392 = vmul.f32 %v1165, %v1363
      %v1393 = vmul.f32 %v1166, %v1363
      %v1394 = vmul.f32 %v1167, %v1363
      %v1395 = vmul.f32 %v1168, %v1363
      %1396 = vadd.xlane.f32.xlu0 %v1364
      %v1397 = vpop.xlane.xlu0 %1396
      %1398 = vadd.xlane.f32.xlu0 %v1365
      %v1399 = vpop.xlane.xlu0 %1398
      %1400 = vadd.xlane.f32.xlu0 %v1366
      %v1401 = vpop.xlane.xlu0 %1400
      %1402 = vadd.xlane.f32.xlu0 %v1367
      %v1403 = vpop.xlane.xlu0 %1402
      %1404 = vadd.xlane.f32.xlu0 %v1368
      %v1405 = vpop.xlane.xlu0 %1404
      %1406 = vadd.xlane.f32.xlu0 %v1369
      %v1407 = vpop.xlane.xlu0 %1406
      %1408 = vadd.xlane.f32.xlu0 %v1370
      %v1409 = vpop.xlane.xlu0 %1408
      %1410 = vadd.xlane.f32.xlu0 %v1371
      %v1411 = vpop.xlane.xlu0 %1410
      %1412 = vadd.xlane.f32.xlu0 %v1372
      %v1413 = vpop.xlane.xlu0 %1412
      %1414 = vadd.xlane.f32.xlu0 %v1373
      %v1415 = vpop.xlane.xlu0 %1414
      %1416 = vadd.xlane.f32.xlu0 %v1374
      %v1417 = vpop.xlane.xlu0 %1416
      %1418 = vadd.xlane.f32.xlu0 %v1375
      %v1419 = vpop.xlane.xlu0 %1418
      %1420 = vadd.xlane.f32.xlu0 %v1376
      %v1421 = vpop.xlane.xlu0 %1420
      %1422 = vadd.xlane.f32.xlu0 %v1377
      %v1423 = vpop.xlane.xlu0 %1422
      %1424 = vadd.xlane.f32.xlu0 %v1378
      %v1425 = vpop.xlane.xlu0 %1424
      %1426 = vadd.xlane.f32.xlu0 %v1379
      %v1427 = vpop.xlane.xlu0 %1426
      %1428 = vadd.xlane.f32.xlu0 %v1380
      %v1429 = vpop.xlane.xlu0 %1428
      %1430 = vadd.xlane.f32.xlu0 %v1381
      %v1431 = vpop.xlane.xlu0 %1430
      %1432 = vadd.xlane.f32.xlu0 %v1382
      %v1433 = vpop.xlane.xlu0 %1432
      %1434 = vadd.xlane.f32.xlu0 %v1383
      %v1435 = vpop.xlane.xlu0 %1434
      %1436 = vadd.xlane.f32.xlu0 %v1384
      %v1437 = vpop.xlane.xlu0 %1436
      %1438 = vadd.xlane.f32.xlu0 %v1385
      %v1439 = vpop.xlane.xlu0 %1438
      %1440 = vadd.xlane.f32.xlu0 %v1386
      %v1441 = vpop.xlane.xlu0 %1440
      %1442 = vadd.xlane.f32.xlu0 %v1387
      %v1443 = vpop.xlane.xlu0 %1442
      %1444 = vadd.xlane.f32.xlu0 %v1388
      %v1445 = vpop.xlane.xlu0 %1444
      %1446 = vadd.xlane.f32.xlu0 %v1389
      %v1447 = vpop.xlane.xlu0 %1446
      %1448 = vadd.xlane.f32.xlu0 %v1390
      %v1449 = vpop.xlane.xlu0 %1448
      %1450 = vadd.xlane.f32.xlu0 %v1391
      %v1451 = vpop.xlane.xlu0 %1450
      %1452 = vadd.xlane.f32.xlu0 %v1392
      %v1453 = vpop.xlane.xlu0 %1452
      %1454 = vadd.xlane.f32.xlu0 %v1393
      %v1455 = vpop.xlane.xlu0 %1454
      %1456 = vadd.xlane.f32.xlu0 %v1394
      %v1457 = vpop.xlane.xlu0 %1456
      %1458 = vadd.xlane.f32.xlu0 %v1395
      %v1459 = vpop.xlane.xlu0 %1458
      %v1460 = vperm.slane %v301, 3
      %v1461 = vmul.f32 %v1137, %v1460
      %v1462 = vmul.f32 %v1138, %v1460
      %v1463 = vmul.f32 %v1139, %v1460
      %v1464 = vmul.f32 %v1140, %v1460
      %v1465 = vmul.f32 %v1141, %v1460
      %v1466 = vmul.f32 %v1142, %v1460
      %v1467 = vmul.f32 %v1143, %v1460
      %v1468 = vmul.f32 %v1144, %v1460
      %v1469 = vmul.f32 %v1145, %v1460
      %v1470 = vmul.f32 %v1146, %v1460
      %v1471 = vmul.f32 %v1147, %v1460
      %v1472 = vmul.f32 %v1148, %v1460
      %v1473 = vmul.f32 %v1149, %v1460
      %v1474 = vmul.f32 %v1150, %v1460
      %v1475 = vmul.f32 %v1151, %v1460
      %v1476 = vmul.f32 %v1152, %v1460
      %v1477 = vmul.f32 %v1153, %v1460
      %v1478 = vmul.f32 %v1154, %v1460
      %v1479 = vmul.f32 %v1155, %v1460
      %v1480 = vmul.f32 %v1156, %v1460
      %v1481 = vmul.f32 %v1157, %v1460
      %v1482 = vmul.f32 %v1158, %v1460
      %v1483 = vmul.f32 %v1159, %v1460
      %v1484 = vmul.f32 %v1160, %v1460
      %v1485 = vmul.f32 %v1161, %v1460
      %v1486 = vmul.f32 %v1162, %v1460
      %v1487 = vmul.f32 %v1163, %v1460
      %v1488 = vmul.f32 %v1164, %v1460
      %v1489 = vmul.f32 %v1165, %v1460
      %v1490 = vmul.f32 %v1166, %v1460
      %v1491 = vmul.f32 %v1167, %v1460
      %v1492 = vmul.f32 %v1168, %v1460
      %1493 = vadd.xlane.f32.xlu0 %v1461
      %v1494 = vpop.xlane.xlu0 %1493
      %1495 = vadd.xlane.f32.xlu0 %v1462
      %v1496 = vpop.xlane.xlu0 %1495
      %1497 = vadd.xlane.f32.xlu0 %v1463
      %v1498 = vpop.xlane.xlu0 %1497
      %1499 = vadd.xlane.f32.xlu0 %v1464
      %v1500 = vpop.xlane.xlu0 %1499
      %1501 = vadd.xlane.f32.xlu0 %v1465
      %v1502 = vpop.xlane.xlu0 %1501
      %1503 = vadd.xlane.f32.xlu0 %v1466
      %v1504 = vpop.xlane.xlu0 %1503
      %1505 = vadd.xlane.f32.xlu0 %v1467
      %v1506 = vpop.xlane.xlu0 %1505
      %1507 = vadd.xlane.f32.xlu0 %v1468
      %v1508 = vpop.xlane.xlu0 %1507
      %1509 = vadd.xlane.f32.xlu0 %v1469
      %v1510 = vpop.xlane.xlu0 %1509
      %1511 = vadd.xlane.f32.xlu0 %v1470
      %v1512 = vpop.xlane.xlu0 %1511
      %1513 = vadd.xlane.f32.xlu0 %v1471
      %v1514 = vpop.xlane.xlu0 %1513
      %1515 = vadd.xlane.f32.xlu0 %v1472
      %v1516 = vpop.xlane.xlu0 %1515
      %1517 = vadd.xlane.f32.xlu0 %v1473
      %v1518 = vpop.xlane.xlu0 %1517
      %1519 = vadd.xlane.f32.xlu0 %v1474
      %v1520 = vpop.xlane.xlu0 %1519
      %1521 = vadd.xlane.f32.xlu0 %v1475
      %v1522 = vpop.xlane.xlu0 %1521
      %1523 = vadd.xlane.f32.xlu0 %v1476
      %v1524 = vpop.xlane.xlu0 %1523
      %1525 = vadd.xlane.f32.xlu0 %v1477
      %v1526 = vpop.xlane.xlu0 %1525
      %1527 = vadd.xlane.f32.xlu0 %v1478
      %v1528 = vpop.xlane.xlu0 %1527
      %1529 = vadd.xlane.f32.xlu0 %v1479
      %v1530 = vpop.xlane.xlu0 %1529
      %1531 = vadd.xlane.f32.xlu0 %v1480
      %v1532 = vpop.xlane.xlu0 %1531
      %1533 = vadd.xlane.f32.xlu0 %v1481
      %v1534 = vpop.xlane.xlu0 %1533
      %1535 = vadd.xlane.f32.xlu0 %v1482
      %v1536 = vpop.xlane.xlu0 %1535
      %1537 = vadd.xlane.f32.xlu0 %v1483
      %v1538 = vpop.xlane.xlu0 %1537
      %1539 = vadd.xlane.f32.xlu0 %v1484
      %v1540 = vpop.xlane.xlu0 %1539
      %1541 = vadd.xlane.f32.xlu0 %v1485
      %v1542 = vpop.xlane.xlu0 %1541
      %1543 = vadd.xlane.f32.xlu0 %v1486
      %v1544 = vpop.xlane.xlu0 %1543
      %1545 = vadd.xlane.f32.xlu0 %v1487
      %v1546 = vpop.xlane.xlu0 %1545
      %1547 = vadd.xlane.f32.xlu0 %v1488
      %v1548 = vpop.xlane.xlu0 %1547
      %1549 = vadd.xlane.f32.xlu0 %v1489
      %v1550 = vpop.xlane.xlu0 %1549
      %1551 = vadd.xlane.f32.xlu0 %v1490
      %v1552 = vpop.xlane.xlu0 %1551
      %1553 = vadd.xlane.f32.xlu0 %v1491
      %v1554 = vpop.xlane.xlu0 %1553
      %1555 = vadd.xlane.f32.xlu0 %v1492
      %v1556 = vpop.xlane.xlu0 %1555
      %vm1557 = vcmask 7168
      %v1558 = vsel %vm1557, %v1203, %v1300
      %v1559 = vsel %vm1557, %v1205, %v1302
      %v1560 = vsel %vm1557, %v1207, %v1304
      %v1561 = vsel %vm1557, %v1209, %v1306
      %v1562 = vsel %vm1557, %v1211, %v1308
      %v1563 = vsel %vm1557, %v1213, %v1310
      %v1564 = vsel %vm1557, %v1215, %v1312
      %v1565 = vsel %vm1557, %v1217, %v1314
      %v1566 = vsel %vm1557, %v1219, %v1316
      %v1567 = vsel %vm1557, %v1221, %v1318
      %v1568 = vsel %vm1557, %v1223, %v1320
      %v1569 = vsel %vm1557, %v1225, %v1322
      %v1570 = vsel %vm1557, %v1227, %v1324
      %v1571 = vsel %vm1557, %v1229, %v1326
      %v1572 = vsel %vm1557, %v1231, %v1328
      %v1573 = vsel %vm1557, %v1233, %v1330
      %v1574 = vsel %vm1557, %v1235, %v1332
      %v1575 = vsel %vm1557, %v1237, %v1334
      %v1576 = vsel %vm1557, %v1239, %v1336
      %v1577 = vsel %vm1557, %v1241, %v1338
      %v1578 = vsel %vm1557, %v1243, %v1340
      %v1579 = vsel %vm1557, %v1245, %v1342
      %v1580 = vsel %vm1557, %v1247, %v1344
      %v1581 = vsel %vm1557, %v1249, %v1346
      %v1582 = vsel %vm1557, %v1251, %v1348
      %v1583 = vsel %vm1557, %v1253, %v1350
      %v1584 = vsel %vm1557, %v1255, %v1352
      %v1585 = vsel %vm1557, %v1257, %v1354
      %v1586 = vsel %vm1557, %v1259, %v1356
      %v1587 = vsel %vm1557, %v1261, %v1358
      %v1588 = vsel %vm1557, %v1263, %v1360
      %v1589 = vsel %vm1557, %v1265, %v1362
      %vm1590 = vcmask 15360
      %v1591 = vsel %vm1590, %v1558, %v1397
      %v1592 = vsel %vm1590, %v1559, %v1399
      %v1593 = vsel %vm1590, %v1560, %v1401
      %v1594 = vsel %vm1590, %v1561, %v1403
      %v1595 = vsel %vm1590, %v1562, %v1405
      %v1596 = vsel %vm1590, %v1563, %v1407
      %v1597 = vsel %vm1590, %v1564, %v1409
      %v1598 = vsel %vm1590, %v1565, %v1411
      %v1599 = vsel %vm1590, %v1566, %v1413
      %v1600 = vsel %vm1590, %v1567, %v1415
      %v1601 = vsel %vm1590, %v1568, %v1417
      %v1602 = vsel %vm1590, %v1569, %v1419
      %v1603 = vsel %vm1590, %v1570, %v1421
      %v1604 = vsel %vm1590, %v1571, %v1423
      %v1605 = vsel %vm1590, %v1572, %v1425
      %v1606 = vsel %vm1590, %v1573, %v1427
      %v1607 = vsel %vm1590, %v1574, %v1429
      %v1608 = vsel %vm1590, %v1575, %v1431
      %v1609 = vsel %vm1590, %v1576, %v1433
      %v1610 = vsel %vm1590, %v1577, %v1435
      %v1611 = vsel %vm1590, %v1578, %v1437
      %v1612 = vsel %vm1590, %v1579, %v1439
      %v1613 = vsel %vm1590, %v1580, %v1441
      %v1614 = vsel %vm1590, %v1581, %v1443
      %v1615 = vsel %vm1590, %v1582, %v1445
      %v1616 = vsel %vm1590, %v1583, %v1447
      %v1617 = vsel %vm1590, %v1584, %v1449
      %v1618 = vsel %vm1590, %v1585, %v1451
      %v1619 = vsel %vm1590, %v1586, %v1453
      %v1620 = vsel %vm1590, %v1587, %v1455
      %v1621 = vsel %vm1590, %v1588, %v1457
      %v1622 = vsel %vm1590, %v1589, %v1459
      %vm1623 = vcmask 23552
      %v1624 = vsel %vm1623, %v1591, %v1494
      %v1625 = vsel %vm1623, %v1592, %v1496
      %v1626 = vsel %vm1623, %v1593, %v1498
      %v1627 = vsel %vm1623, %v1594, %v1500
      %v1628 = vsel %vm1623, %v1595, %v1502
      %v1629 = vsel %vm1623, %v1596, %v1504
      %v1630 = vsel %vm1623, %v1597, %v1506
      %v1631 = vsel %vm1623, %v1598, %v1508
      %v1632 = vsel %vm1623, %v1599, %v1510
      %v1633 = vsel %vm1623, %v1600, %v1512
      %v1634 = vsel %vm1623, %v1601, %v1514
      %v1635 = vsel %vm1623, %v1602, %v1516
      %v1636 = vsel %vm1623, %v1603, %v1518
      %v1637 = vsel %vm1623, %v1604, %v1520
      %v1638 = vsel %vm1623, %v1605, %v1522
      %v1639 = vsel %vm1623, %v1606, %v1524
      %v1640 = vsel %vm1623, %v1607, %v1526
      %v1641 = vsel %vm1623, %v1608, %v1528
      %v1642 = vsel %vm1623, %v1609, %v1530
      %v1643 = vsel %vm1623, %v1610, %v1532
      %v1644 = vsel %vm1623, %v1611, %v1534
      %v1645 = vsel %vm1623, %v1612, %v1536
      %v1646 = vsel %vm1623, %v1613, %v1538
      %v1647 = vsel %vm1623, %v1614, %v1540
      %v1648 = vsel %vm1623, %v1615, %v1542
      %v1649 = vsel %vm1623, %v1616, %v1544
      %v1650 = vsel %vm1623, %v1617, %v1546
      %v1651 = vsel %vm1623, %v1618, %v1548
      %v1652 = vsel %vm1623, %v1619, %v1550
      %v1653 = vsel %vm1623, %v1620, %v1552
      %v1654 = vsel %vm1623, %v1621, %v1554
      %v1655 = vsel %vm1623, %v1622, %v1556
      %v1657 = vperm.slane %v302, 0
      %v1659 = vadd.f32 %v1624, %v1657
      %v1660 = vadd.f32 %v1625, %v1657
      %v1661 = vadd.f32 %v1626, %v1657
      %v1662 = vadd.f32 %v1627, %v1657
      %v1663 = vadd.f32 %v1628, %v1657
      %v1664 = vadd.f32 %v1629, %v1657
      %v1665 = vadd.f32 %v1630, %v1657
      %v1666 = vadd.f32 %v1631, %v1657
      %v1667 = vadd.f32 %v1632, %v1657
      %v1668 = vadd.f32 %v1633, %v1657
      %v1669 = vadd.f32 %v1634, %v1657
      %v1670 = vadd.f32 %v1635, %v1657
      %v1671 = vadd.f32 %v1636, %v1657
      %v1672 = vadd.f32 %v1637, %v1657
      %v1673 = vadd.f32 %v1638, %v1657
      %v1674 = vadd.f32 %v1639, %v1657
      %v1675 = vadd.f32 %v1640, %v1657
      %v1676 = vadd.f32 %v1641, %v1657
      %v1677 = vadd.f32 %v1642, %v1657
      %v1678 = vadd.f32 %v1643, %v1657
      %v1679 = vadd.f32 %v1644, %v1657
      %v1680 = vadd.f32 %v1645, %v1657
      %v1681 = vadd.f32 %v1646, %v1657
      %v1682 = vadd.f32 %v1647, %v1657
      %v1683 = vadd.f32 %v1648, %v1657
      %v1684 = vadd.f32 %v1649, %v1657
      %v1685 = vadd.f32 %v1650, %v1657
      %v1686 = vadd.f32 %v1651, %v1657
      %v1687 = vadd.f32 %v1652, %v1657
      %v1688 = vadd.f32 %v1653, %v1657
      %v1689 = vadd.f32 %v1654, %v1657
      %v1690 = vadd.f32 %v1655, %v1657
      %vm1691 = vcmask 31744
      %1692 = vst.msk [vmem:[%s280] sm:$0xff] %vm1691, %v1659
      %1693 = vst.msk [vmem:[%s280 + $0x8] sm:$0xff] %vm1691, %v1660
      %1694 = vst.msk [vmem:[%s280 + $0x10] sm:$0xff] %vm1691, %v1661
      %1695 = vst.msk [vmem:[%s280 + $0x18] sm:$0xff] %vm1691, %v1662
      %1696 = vst.msk [vmem:[%s280 + $0x20] sm:$0xff] %vm1691, %v1663
      %1697 = vst.msk [vmem:[%s280 + $0x28] sm:$0xff] %vm1691, %v1664
      %1698 = vst.msk [vmem:[%s280 + $0x30] sm:$0xff] %vm1691, %v1665
      %1699 = vst.msk [vmem:[%s280 + $0x38] sm:$0xff] %vm1691, %v1666
      %1700 = vst.msk [vmem:[%s280 + $0x40] sm:$0xff] %vm1691, %v1667
      %1701 = vst.msk [vmem:[%s280 + $0x48] sm:$0xff] %vm1691, %v1668
      %1702 = vst.msk [vmem:[%s280 + $0x50] sm:$0xff] %vm1691, %v1669
      %1703 = vst.msk [vmem:[%s280 + $0x58] sm:$0xff] %vm1691, %v1670
      %1704 = vst.msk [vmem:[%s280 + $0x60] sm:$0xff] %vm1691, %v1671
      %1705 = vst.msk [vmem:[%s280 + $0x68] sm:$0xff] %vm1691, %v1672
      %1706 = vst.msk [vmem:[%s280 + $0x70] sm:$0xff] %vm1691, %v1673
      %1707 = vst.msk [vmem:[%s280 + $0x78] sm:$0xff] %vm1691, %v1674
      %1708 = vst.msk [vmem:[%s280 + $0x80] sm:$0xff] %vm1691, %v1675
      %1709 = vst.msk [vmem:[%s280 + $0x88] sm:$0xff] %vm1691, %v1676
      %1710 = vst.msk [vmem:[%s280 + $0x90] sm:$0xff] %vm1691, %v1677
      %1711 = vst.msk [vmem:[%s280 + $0x98] sm:$0xff] %vm1691, %v1678
      %1712 = vst.msk [vmem:[%s280 + $0xa0] sm:$0xff] %vm1691, %v1679
      %1713 = vst.msk [vmem:[%s280 + $0xa8] sm:$0xff] %vm1691, %v1680
      %1714 = vst.msk [vmem:[%s280 + $0xb0] sm:$0xff] %vm1691, %v1681
      %1715 = vst.msk [vmem:[%s280 + $0xb8] sm:$0xff] %vm1691, %v1682
      %1716 = vst.msk [vmem:[%s280 + $0xc0] sm:$0xff] %vm1691, %v1683
      %1717 = vst.msk [vmem:[%s280 + $0xc8] sm:$0xff] %vm1691, %v1684
      %1718 = vst.msk [vmem:[%s280 + $0xd0] sm:$0xff] %vm1691, %v1685
      %1719 = vst.msk [vmem:[%s280 + $0xd8] sm:$0xff] %vm1691, %v1686
      %1720 = vst.msk [vmem:[%s280 + $0xe0] sm:$0xff] %vm1691, %v1687
      %1721 = vst.msk [vmem:[%s280 + $0xe8] sm:$0xff] %vm1691, %v1688
      %1722 = vst.msk [vmem:[%s280 + $0xf0] sm:$0xff] %vm1691, %v1689
      %1723 = vst.msk [vmem:[%s280 + $0xf8] sm:$0xff] %vm1691, %v1690
      %s1724 = scalar_lea.vmem %s274, 256
      %v1725 = vld [vmem:[%s1724] sm:$0xff]
      %v1726 = vld [vmem:[%s1724 + $0x8] sm:$0xff]
      %v1727 = vld [vmem:[%s1724 + $0x10] sm:$0xff]
      %v1728 = vld [vmem:[%s1724 + $0x18] sm:$0xff]
      %v1729 = vld [vmem:[%s1724 + $0x20] sm:$0xff]
      %v1730 = vld [vmem:[%s1724 + $0x28] sm:$0xff]
      %v1731 = vld [vmem:[%s1724 + $0x30] sm:$0xff]
      %v1732 = vld [vmem:[%s1724 + $0x38] sm:$0xff]
      %v1733 = vld [vmem:[%s1724 + $0x40] sm:$0xff]
      %v1734 = vld [vmem:[%s1724 + $0x48] sm:$0xff]
      %v1735 = vld [vmem:[%s1724 + $0x50] sm:$0xff]
      %v1736 = vld [vmem:[%s1724 + $0x58] sm:$0xff]
      %v1737 = vld [vmem:[%s1724 + $0x60] sm:$0xff]
      %v1738 = vld [vmem:[%s1724 + $0x68] sm:$0xff]
      %v1739 = vld [vmem:[%s1724 + $0x70] sm:$0xff]
      %v1740 = vld [vmem:[%s1724 + $0x78] sm:$0xff]
      %v1741 = vld [vmem:[%s1724 + $0x80] sm:$0xff]
      %v1742 = vld [vmem:[%s1724 + $0x88] sm:$0xff]
      %v1743 = vld [vmem:[%s1724 + $0x90] sm:$0xff]
      %v1744 = vld [vmem:[%s1724 + $0x98] sm:$0xff]
      %v1745 = vld [vmem:[%s1724 + $0xa0] sm:$0xff]
      %v1746 = vld [vmem:[%s1724 + $0xa8] sm:$0xff]
      %v1747 = vld [vmem:[%s1724 + $0xb0] sm:$0xff]
      %v1748 = vld [vmem:[%s1724 + $0xb8] sm:$0xff]
      %v1749 = vld [vmem:[%s1724 + $0xc0] sm:$0xff]
      %v1750 = vld [vmem:[%s1724 + $0xc8] sm:$0xff]
      %v1751 = vld [vmem:[%s1724 + $0xd0] sm:$0xff]
      %v1752 = vld [vmem:[%s1724 + $0xd8] sm:$0xff]
      %v1753 = vld [vmem:[%s1724 + $0xe0] sm:$0xff]
      %v1754 = vld [vmem:[%s1724 + $0xe8] sm:$0xff]
      %v1755 = vld [vmem:[%s1724 + $0xf0] sm:$0xff]
      %v1756 = vld [vmem:[%s1724 + $0xf8] sm:$0xff]
      %1758 = vset.pattern.permute.xlu0 0
      %1759 = vperm.xlu0 %1758, %v1725
      %v1760 = vpop.permute.xlu0 %1759
      %1763 = vset.pattern.permute.xlu0 0
      %1764 = vperm.xlu0 %1763, %v1726
      %v1765 = vpop.permute.xlu0 %1764
      %1768 = vset.pattern.permute.xlu0 0
      %1769 = vperm.xlu0 %1768, %v1727
      %v1770 = vpop.permute.xlu0 %1769
      %1773 = vset.pattern.permute.xlu0 0
      %1774 = vperm.xlu0 %1773, %v1728
      %v1775 = vpop.permute.xlu0 %1774
      %1778 = vset.pattern.permute.xlu0 0
      %1779 = vperm.xlu0 %1778, %v1729
      %v1780 = vpop.permute.xlu0 %1779
      %1783 = vset.pattern.permute.xlu0 0
      %1784 = vperm.xlu0 %1783, %v1730
      %v1785 = vpop.permute.xlu0 %1784
      %1788 = vset.pattern.permute.xlu0 0
      %1789 = vperm.xlu0 %1788, %v1731
      %v1790 = vpop.permute.xlu0 %1789
      %1793 = vset.pattern.permute.xlu0 0
      %1794 = vperm.xlu0 %1793, %v1732
      %v1795 = vpop.permute.xlu0 %1794
      %1798 = vset.pattern.permute.xlu0 0
      %1799 = vperm.xlu0 %1798, %v1733
      %v1800 = vpop.permute.xlu0 %1799
      %1803 = vset.pattern.permute.xlu0 0
      %1804 = vperm.xlu0 %1803, %v1734
      %v1805 = vpop.permute.xlu0 %1804
      %1808 = vset.pattern.permute.xlu0 0
      %1809 = vperm.xlu0 %1808, %v1735
      %v1810 = vpop.permute.xlu0 %1809
      %1813 = vset.pattern.permute.xlu0 0
      %1814 = vperm.xlu0 %1813, %v1736
      %v1815 = vpop.permute.xlu0 %1814
      %1818 = vset.pattern.permute.xlu0 0
      %1819 = vperm.xlu0 %1818, %v1737
      %v1820 = vpop.permute.xlu0 %1819
      %1823 = vset.pattern.permute.xlu0 0
      %1824 = vperm.xlu0 %1823, %v1738
      %v1825 = vpop.permute.xlu0 %1824
      %1828 = vset.pattern.permute.xlu0 0
      %1829 = vperm.xlu0 %1828, %v1739
      %v1830 = vpop.permute.xlu0 %1829
      %1833 = vset.pattern.permute.xlu0 0
      %1834 = vperm.xlu0 %1833, %v1740
      %v1835 = vpop.permute.xlu0 %1834
      %1838 = vset.pattern.permute.xlu0 0
      %1839 = vperm.xlu0 %1838, %v1741
      %v1840 = vpop.permute.xlu0 %1839
      %1843 = vset.pattern.permute.xlu0 0
      %1844 = vperm.xlu0 %1843, %v1742
      %v1845 = vpop.permute.xlu0 %1844
      %1848 = vset.pattern.permute.xlu0 0
      %1849 = vperm.xlu0 %1848, %v1743
      %v1850 = vpop.permute.xlu0 %1849
      %1853 = vset.pattern.permute.xlu0 0
      %1854 = vperm.xlu0 %1853, %v1744
      %v1855 = vpop.permute.xlu0 %1854
      %1858 = vset.pattern.permute.xlu0 0
      %1859 = vperm.xlu0 %1858, %v1745
      %v1860 = vpop.permute.xlu0 %1859
      %1863 = vset.pattern.permute.xlu0 0
      %1864 = vperm.xlu0 %1863, %v1746
      %v1865 = vpop.permute.xlu0 %1864
      %1868 = vset.pattern.permute.xlu0 0
      %1869 = vperm.xlu0 %1868, %v1747
      %v1870 = vpop.permute.xlu0 %1869
      %1873 = vset.pattern.permute.xlu0 0
      %1874 = vperm.xlu0 %1873, %v1748
      %v1875 = vpop.permute.xlu0 %1874
      %1878 = vset.pattern.permute.xlu0 0
      %1879 = vperm.xlu0 %1878, %v1749
      %v1880 = vpop.permute.xlu0 %1879
      %1883 = vset.pattern.permute.xlu0 0
      %1884 = vperm.xlu0 %1883, %v1750
      %v1885 = vpop.permute.xlu0 %1884
      %1888 = vset.pattern.permute.xlu0 0
      %1889 = vperm.xlu0 %1888, %v1751
      %v1890 = vpop.permute.xlu0 %1889
      %1893 = vset.pattern.permute.xlu0 0
      %1894 = vperm.xlu0 %1893, %v1752
      %v1895 = vpop.permute.xlu0 %1894
      %1898 = vset.pattern.permute.xlu0 0
      %1899 = vperm.xlu0 %1898, %v1753
      %v1900 = vpop.permute.xlu0 %1899
      %1903 = vset.pattern.permute.xlu0 0
      %1904 = vperm.xlu0 %1903, %v1754
      %v1905 = vpop.permute.xlu0 %1904
      %1908 = vset.pattern.permute.xlu0 0
      %1909 = vperm.xlu0 %1908, %v1755
      %v1910 = vpop.permute.xlu0 %1909
      %1913 = vset.pattern.permute.xlu0 0
      %1914 = vperm.xlu0 %1913, %v1756
      %v1915 = vpop.permute.xlu0 %1914
      %v1917 = vmul.f32 %v1760, %v495
      %v1918 = vmul.f32 %v1765, %v495
      %v1919 = vmul.f32 %v1770, %v495
      %v1920 = vmul.f32 %v1775, %v495
      %v1921 = vmul.f32 %v1780, %v495
      %v1922 = vmul.f32 %v1785, %v495
      %v1923 = vmul.f32 %v1790, %v495
      %v1924 = vmul.f32 %v1795, %v495
      %v1925 = vmul.f32 %v1800, %v495
      %v1926 = vmul.f32 %v1805, %v495
      %v1927 = vmul.f32 %v1810, %v495
      %v1928 = vmul.f32 %v1815, %v495
      %v1929 = vmul.f32 %v1820, %v495
      %v1930 = vmul.f32 %v1825, %v495
      %v1931 = vmul.f32 %v1830, %v495
      %v1932 = vmul.f32 %v1835, %v495
      %v1933 = vmul.f32 %v1840, %v495
      %v1934 = vmul.f32 %v1845, %v495
      %v1935 = vmul.f32 %v1850, %v495
      %v1936 = vmul.f32 %v1855, %v495
      %v1937 = vmul.f32 %v1860, %v495
      %v1938 = vmul.f32 %v1865, %v495
      %v1939 = vmul.f32 %v1870, %v495
      %v1940 = vmul.f32 %v1875, %v495
      %v1941 = vmul.f32 %v1880, %v495
      %v1942 = vmul.f32 %v1885, %v495
      %v1943 = vmul.f32 %v1890, %v495
      %v1944 = vmul.f32 %v1895, %v495
      %v1945 = vmul.f32 %v1900, %v495
      %v1946 = vmul.f32 %v1905, %v495
      %v1947 = vmul.f32 %v1910, %v495
      %v1948 = vmul.f32 %v1915, %v495
      %v1949 = vadd.f32 %v529, %v1917
      %v1950 = vadd.f32 %v529, %v1918
      %v1951 = vadd.f32 %v529, %v1919
      %v1952 = vadd.f32 %v529, %v1920
      %v1953 = vadd.f32 %v529, %v1921
      %v1954 = vadd.f32 %v529, %v1922
      %v1955 = vadd.f32 %v529, %v1923
      %v1956 = vadd.f32 %v529, %v1924
      %v1957 = vadd.f32 %v529, %v1925
      %v1958 = vadd.f32 %v529, %v1926
      %v1959 = vadd.f32 %v529, %v1927
      %v1960 = vadd.f32 %v529, %v1928
      %v1961 = vadd.f32 %v529, %v1929
      %v1962 = vadd.f32 %v529, %v1930
      %v1963 = vadd.f32 %v529, %v1931
      %v1964 = vadd.f32 %v529, %v1932
      %v1965 = vadd.f32 %v529, %v1933
      %v1966 = vadd.f32 %v529, %v1934
      %v1967 = vadd.f32 %v529, %v1935
      %v1968 = vadd.f32 %v529, %v1936
      %v1969 = vadd.f32 %v529, %v1937
      %v1970 = vadd.f32 %v529, %v1938
      %v1971 = vadd.f32 %v529, %v1939
      %v1972 = vadd.f32 %v529, %v1940
      %v1973 = vadd.f32 %v529, %v1941
      %v1974 = vadd.f32 %v529, %v1942
      %v1975 = vadd.f32 %v529, %v1943
      %v1976 = vadd.f32 %v529, %v1944
      %v1977 = vadd.f32 %v529, %v1945
      %v1978 = vadd.f32 %v529, %v1946
      %v1979 = vadd.f32 %v529, %v1947
      %v1980 = vadd.f32 %v529, %v1948
      %1981 = vset.pattern.permute.xlu0 1
      %1982 = vperm.xlu0 %1981, %v1725
      %v1983 = vpop.permute.xlu0 %1982
      %1985 = vset.pattern.permute.xlu0 1
      %1986 = vperm.xlu0 %1985, %v1726
      %v1987 = vpop.permute.xlu0 %1986
      %1989 = vset.pattern.permute.xlu0 1
      %1990 = vperm.xlu0 %1989, %v1727
      %v1991 = vpop.permute.xlu0 %1990
      %1993 = vset.pattern.permute.xlu0 1
      %1994 = vperm.xlu0 %1993, %v1728
      %v1995 = vpop.permute.xlu0 %1994
      %1997 = vset.pattern.permute.xlu0 1
      %1998 = vperm.xlu0 %1997, %v1729
      %v1999 = vpop.permute.xlu0 %1998
      %2001 = vset.pattern.permute.xlu0 1
      %2002 = vperm.xlu0 %2001, %v1730
      %v2003 = vpop.permute.xlu0 %2002
      %2005 = vset.pattern.permute.xlu0 1
      %2006 = vperm.xlu0 %2005, %v1731
      %v2007 = vpop.permute.xlu0 %2006
      %2009 = vset.pattern.permute.xlu0 1
      %2010 = vperm.xlu0 %2009, %v1732
      %v2011 = vpop.permute.xlu0 %2010
      %2013 = vset.pattern.permute.xlu0 1
      %2014 = vperm.xlu0 %2013, %v1733
      %v2015 = vpop.permute.xlu0 %2014
      %2017 = vset.pattern.permute.xlu0 1
      %2018 = vperm.xlu0 %2017, %v1734
      %v2019 = vpop.permute.xlu0 %2018
      %2021 = vset.pattern.permute.xlu0 1
      %2022 = vperm.xlu0 %2021, %v1735
      %v2023 = vpop.permute.xlu0 %2022
      %2025 = vset.pattern.permute.xlu0 1
      %2026 = vperm.xlu0 %2025, %v1736
      %v2027 = vpop.permute.xlu0 %2026
      %2029 = vset.pattern.permute.xlu0 1
      %2030 = vperm.xlu0 %2029, %v1737
      %v2031 = vpop.permute.xlu0 %2030
      %2033 = vset.pattern.permute.xlu0 1
      %2034 = vperm.xlu0 %2033, %v1738
      %v2035 = vpop.permute.xlu0 %2034
      %2037 = vset.pattern.permute.xlu0 1
      %2038 = vperm.xlu0 %2037, %v1739
      %v2039 = vpop.permute.xlu0 %2038
      %2041 = vset.pattern.permute.xlu0 1
      %2042 = vperm.xlu0 %2041, %v1740
      %v2043 = vpop.permute.xlu0 %2042
      %2045 = vset.pattern.permute.xlu0 1
      %2046 = vperm.xlu0 %2045, %v1741
      %v2047 = vpop.permute.xlu0 %2046
      %2049 = vset.pattern.permute.xlu0 1
      %2050 = vperm.xlu0 %2049, %v1742
      %v2051 = vpop.permute.xlu0 %2050
      %2053 = vset.pattern.permute.xlu0 1
      %2054 = vperm.xlu0 %2053, %v1743
      %v2055 = vpop.permute.xlu0 %2054
      %2057 = vset.pattern.permute.xlu0 1
      %2058 = vperm.xlu0 %2057, %v1744
      %v2059 = vpop.permute.xlu0 %2058
      %2061 = vset.pattern.permute.xlu0 1
      %2062 = vperm.xlu0 %2061, %v1745
      %v2063 = vpop.permute.xlu0 %2062
      %2065 = vset.pattern.permute.xlu0 1
      %2066 = vperm.xlu0 %2065, %v1746
      %v2067 = vpop.permute.xlu0 %2066
      %2069 = vset.pattern.permute.xlu0 1
      %2070 = vperm.xlu0 %2069, %v1747
      %v2071 = vpop.permute.xlu0 %2070
      %2073 = vset.pattern.permute.xlu0 1
      %2074 = vperm.xlu0 %2073, %v1748
      %v2075 = vpop.permute.xlu0 %2074
      %2077 = vset.pattern.permute.xlu0 1
      %2078 = vperm.xlu0 %2077, %v1749
      %v2079 = vpop.permute.xlu0 %2078
      %2081 = vset.pattern.permute.xlu0 1
      %2082 = vperm.xlu0 %2081, %v1750
      %v2083 = vpop.permute.xlu0 %2082
      %2085 = vset.pattern.permute.xlu0 1
      %2086 = vperm.xlu0 %2085, %v1751
      %v2087 = vpop.permute.xlu0 %2086
      %2089 = vset.pattern.permute.xlu0 1
      %2090 = vperm.xlu0 %2089, %v1752
      %v2091 = vpop.permute.xlu0 %2090
      %2093 = vset.pattern.permute.xlu0 1
      %2094 = vperm.xlu0 %2093, %v1753
      %v2095 = vpop.permute.xlu0 %2094
      %2097 = vset.pattern.permute.xlu0 1
      %2098 = vperm.xlu0 %2097, %v1754
      %v2099 = vpop.permute.xlu0 %2098
      %2101 = vset.pattern.permute.xlu0 1
      %2102 = vperm.xlu0 %2101, %v1755
      %v2103 = vpop.permute.xlu0 %2102
      %2105 = vset.pattern.permute.xlu0 1
      %2106 = vperm.xlu0 %2105, %v1756
      %v2107 = vpop.permute.xlu0 %2106
      %v2109 = vmul.f32 %v1983, %v691
      %v2110 = vmul.f32 %v1987, %v691
      %v2111 = vmul.f32 %v1991, %v691
      %v2112 = vmul.f32 %v1995, %v691
      %v2113 = vmul.f32 %v1999, %v691
      %v2114 = vmul.f32 %v2003, %v691
      %v2115 = vmul.f32 %v2007, %v691
      %v2116 = vmul.f32 %v2011, %v691
      %v2117 = vmul.f32 %v2015, %v691
      %v2118 = vmul.f32 %v2019, %v691
      %v2119 = vmul.f32 %v2023, %v691
      %v2120 = vmul.f32 %v2027, %v691
      %v2121 = vmul.f32 %v2031, %v691
      %v2122 = vmul.f32 %v2035, %v691
      %v2123 = vmul.f32 %v2039, %v691
      %v2124 = vmul.f32 %v2043, %v691
      %v2125 = vmul.f32 %v2047, %v691
      %v2126 = vmul.f32 %v2051, %v691
      %v2127 = vmul.f32 %v2055, %v691
      %v2128 = vmul.f32 %v2059, %v691
      %v2129 = vmul.f32 %v2063, %v691
      %v2130 = vmul.f32 %v2067, %v691
      %v2131 = vmul.f32 %v2071, %v691
      %v2132 = vmul.f32 %v2075, %v691
      %v2133 = vmul.f32 %v2079, %v691
      %v2134 = vmul.f32 %v2083, %v691
      %v2135 = vmul.f32 %v2087, %v691
      %v2136 = vmul.f32 %v2091, %v691
      %v2137 = vmul.f32 %v2095, %v691
      %v2138 = vmul.f32 %v2099, %v691
      %v2139 = vmul.f32 %v2103, %v691
      %v2140 = vmul.f32 %v2107, %v691
      %v2141 = vadd.f32 %v1949, %v2109
      %v2142 = vadd.f32 %v1950, %v2110
      %v2143 = vadd.f32 %v1951, %v2111
      %v2144 = vadd.f32 %v1952, %v2112
      %v2145 = vadd.f32 %v1953, %v2113
      %v2146 = vadd.f32 %v1954, %v2114
      %v2147 = vadd.f32 %v1955, %v2115
      %v2148 = vadd.f32 %v1956, %v2116
      %v2149 = vadd.f32 %v1957, %v2117
      %v2150 = vadd.f32 %v1958, %v2118
      %v2151 = vadd.f32 %v1959, %v2119
      %v2152 = vadd.f32 %v1960, %v2120
      %v2153 = vadd.f32 %v1961, %v2121
      %v2154 = vadd.f32 %v1962, %v2122
      %v2155 = vadd.f32 %v1963, %v2123
      %v2156 = vadd.f32 %v1964, %v2124
      %v2157 = vadd.f32 %v1965, %v2125
      %v2158 = vadd.f32 %v1966, %v2126
      %v2159 = vadd.f32 %v1967, %v2127
      %v2160 = vadd.f32 %v1968, %v2128
      %v2161 = vadd.f32 %v1969, %v2129
      %v2162 = vadd.f32 %v1970, %v2130
      %v2163 = vadd.f32 %v1971, %v2131
      %v2164 = vadd.f32 %v1972, %v2132
      %v2165 = vadd.f32 %v1973, %v2133
      %v2166 = vadd.f32 %v1974, %v2134
      %v2167 = vadd.f32 %v1975, %v2135
      %v2168 = vadd.f32 %v1976, %v2136
      %v2169 = vadd.f32 %v1977, %v2137
      %v2170 = vadd.f32 %v1978, %v2138
      %v2171 = vadd.f32 %v1979, %v2139
      %v2172 = vadd.f32 %v1980, %v2140
      %2173 = vset.pattern.permute.xlu0 2
      %2174 = vperm.xlu0 %2173, %v1725
      %v2175 = vpop.permute.xlu0 %2174
      %2177 = vset.pattern.permute.xlu0 2
      %2178 = vperm.xlu0 %2177, %v1726
      %v2179 = vpop.permute.xlu0 %2178
      %2181 = vset.pattern.permute.xlu0 2
      %2182 = vperm.xlu0 %2181, %v1727
      %v2183 = vpop.permute.xlu0 %2182
      %2185 = vset.pattern.permute.xlu0 2
      %2186 = vperm.xlu0 %2185, %v1728
      %v2187 = vpop.permute.xlu0 %2186
      %2189 = vset.pattern.permute.xlu0 2
      %2190 = vperm.xlu0 %2189, %v1729
      %v2191 = vpop.permute.xlu0 %2190
      %2193 = vset.pattern.permute.xlu0 2
      %2194 = vperm.xlu0 %2193, %v1730
      %v2195 = vpop.permute.xlu0 %2194
      %2197 = vset.pattern.permute.xlu0 2
      %2198 = vperm.xlu0 %2197, %v1731
      %v2199 = vpop.permute.xlu0 %2198
      %2201 = vset.pattern.permute.xlu0 2
      %2202 = vperm.xlu0 %2201, %v1732
      %v2203 = vpop.permute.xlu0 %2202
      %2205 = vset.pattern.permute.xlu0 2
      %2206 = vperm.xlu0 %2205, %v1733
      %v2207 = vpop.permute.xlu0 %2206
      %2209 = vset.pattern.permute.xlu0 2
      %2210 = vperm.xlu0 %2209, %v1734
      %v2211 = vpop.permute.xlu0 %2210
      %2213 = vset.pattern.permute.xlu0 2
      %2214 = vperm.xlu0 %2213, %v1735
      %v2215 = vpop.permute.xlu0 %2214
      %2217 = vset.pattern.permute.xlu0 2
      %2218 = vperm.xlu0 %2217, %v1736
      %v2219 = vpop.permute.xlu0 %2218
      %2221 = vset.pattern.permute.xlu0 2
      %2222 = vperm.xlu0 %2221, %v1737
      %v2223 = vpop.permute.xlu0 %2222
      %2225 = vset.pattern.permute.xlu0 2
      %2226 = vperm.xlu0 %2225, %v1738
      %v2227 = vpop.permute.xlu0 %2226
      %2229 = vset.pattern.permute.xlu0 2
      %2230 = vperm.xlu0 %2229, %v1739
      %v2231 = vpop.permute.xlu0 %2230
      %2233 = vset.pattern.permute.xlu0 2
      %2234 = vperm.xlu0 %2233, %v1740
      %v2235 = vpop.permute.xlu0 %2234
      %2237 = vset.pattern.permute.xlu0 2
      %2238 = vperm.xlu0 %2237, %v1741
      %v2239 = vpop.permute.xlu0 %2238
      %2241 = vset.pattern.permute.xlu0 2
      %2242 = vperm.xlu0 %2241, %v1742
      %v2243 = vpop.permute.xlu0 %2242
      %2245 = vset.pattern.permute.xlu0 2
      %2246 = vperm.xlu0 %2245, %v1743
      %v2247 = vpop.permute.xlu0 %2246
      %2249 = vset.pattern.permute.xlu0 2
      %2250 = vperm.xlu0 %2249, %v1744
      %v2251 = vpop.permute.xlu0 %2250
      %2253 = vset.pattern.permute.xlu0 2
      %2254 = vperm.xlu0 %2253, %v1745
      %v2255 = vpop.permute.xlu0 %2254
      %2257 = vset.pattern.permute.xlu0 2
      %2258 = vperm.xlu0 %2257, %v1746
      %v2259 = vpop.permute.xlu0 %2258
      %2261 = vset.pattern.permute.xlu0 2
      %2262 = vperm.xlu0 %2261, %v1747
      %v2263 = vpop.permute.xlu0 %2262
      %2265 = vset.pattern.permute.xlu0 2
      %2266 = vperm.xlu0 %2265, %v1748
      %v2267 = vpop.permute.xlu0 %2266
      %2269 = vset.pattern.permute.xlu0 2
      %2270 = vperm.xlu0 %2269, %v1749
      %v2271 = vpop.permute.xlu0 %2270
      %2273 = vset.pattern.permute.xlu0 2
      %2274 = vperm.xlu0 %2273, %v1750
      %v2275 = vpop.permute.xlu0 %2274
      %2277 = vset.pattern.permute.xlu0 2
      %2278 = vperm.xlu0 %2277, %v1751
      %v2279 = vpop.permute.xlu0 %2278
      %2281 = vset.pattern.permute.xlu0 2
      %2282 = vperm.xlu0 %2281, %v1752
      %v2283 = vpop.permute.xlu0 %2282
      %2285 = vset.pattern.permute.xlu0 2
      %2286 = vperm.xlu0 %2285, %v1753
      %v2287 = vpop.permute.xlu0 %2286
      %2289 = vset.pattern.permute.xlu0 2
      %2290 = vperm.xlu0 %2289, %v1754
      %v2291 = vpop.permute.xlu0 %2290
      %2293 = vset.pattern.permute.xlu0 2
      %2294 = vperm.xlu0 %2293, %v1755
      %v2295 = vpop.permute.xlu0 %2294
      %2297 = vset.pattern.permute.xlu0 2
      %2298 = vperm.xlu0 %2297, %v1756
      %v2299 = vpop.permute.xlu0 %2298
      %v2301 = vmul.f32 %v2175, %v884
      %v2302 = vmul.f32 %v2179, %v884
      %v2303 = vmul.f32 %v2183, %v884
      %v2304 = vmul.f32 %v2187, %v884
      %v2305 = vmul.f32 %v2191, %v884
      %v2306 = vmul.f32 %v2195, %v884
      %v2307 = vmul.f32 %v2199, %v884
      %v2308 = vmul.f32 %v2203, %v884
      %v2309 = vmul.f32 %v2207, %v884
      %v2310 = vmul.f32 %v2211, %v884
      %v2311 = vmul.f32 %v2215, %v884
      %v2312 = vmul.f32 %v2219, %v884
      %v2313 = vmul.f32 %v2223, %v884
      %v2314 = vmul.f32 %v2227, %v884
      %v2315 = vmul.f32 %v2231, %v884
      %v2316 = vmul.f32 %v2235, %v884
      %v2317 = vmul.f32 %v2239, %v884
      %v2318 = vmul.f32 %v2243, %v884
      %v2319 = vmul.f32 %v2247, %v884
      %v2320 = vmul.f32 %v2251, %v884
      %v2321 = vmul.f32 %v2255, %v884
      %v2322 = vmul.f32 %v2259, %v884
      %v2323 = vmul.f32 %v2263, %v884
      %v2324 = vmul.f32 %v2267, %v884
      %v2325 = vmul.f32 %v2271, %v884
      %v2326 = vmul.f32 %v2275, %v884
      %v2327 = vmul.f32 %v2279, %v884
      %v2328 = vmul.f32 %v2283, %v884
      %v2329 = vmul.f32 %v2287, %v884
      %v2330 = vmul.f32 %v2291, %v884
      %v2331 = vmul.f32 %v2295, %v884
      %v2332 = vmul.f32 %v2299, %v884
      %v2333 = vadd.f32 %v2141, %v2301
      %v2334 = vadd.f32 %v2142, %v2302
      %v2335 = vadd.f32 %v2143, %v2303
      %v2336 = vadd.f32 %v2144, %v2304
      %v2337 = vadd.f32 %v2145, %v2305
      %v2338 = vadd.f32 %v2146, %v2306
      %v2339 = vadd.f32 %v2147, %v2307
      %v2340 = vadd.f32 %v2148, %v2308
      %v2341 = vadd.f32 %v2149, %v2309
      %v2342 = vadd.f32 %v2150, %v2310
      %v2343 = vadd.f32 %v2151, %v2311
      %v2344 = vadd.f32 %v2152, %v2312
      %v2345 = vadd.f32 %v2153, %v2313
      %v2346 = vadd.f32 %v2154, %v2314
      %v2347 = vadd.f32 %v2155, %v2315
      %v2348 = vadd.f32 %v2156, %v2316
      %v2349 = vadd.f32 %v2157, %v2317
      %v2350 = vadd.f32 %v2158, %v2318
      %v2351 = vadd.f32 %v2159, %v2319
      %v2352 = vadd.f32 %v2160, %v2320
      %v2353 = vadd.f32 %v2161, %v2321
      %v2354 = vadd.f32 %v2162, %v2322
      %v2355 = vadd.f32 %v2163, %v2323
      %v2356 = vadd.f32 %v2164, %v2324
      %v2357 = vadd.f32 %v2165, %v2325
      %v2358 = vadd.f32 %v2166, %v2326
      %v2359 = vadd.f32 %v2167, %v2327
      %v2360 = vadd.f32 %v2168, %v2328
      %v2361 = vadd.f32 %v2169, %v2329
      %v2362 = vadd.f32 %v2170, %v2330
      %v2363 = vadd.f32 %v2171, %v2331
      %v2364 = vadd.f32 %v2172, %v2332
      %v2365 = vmax.f32 %v2333, 0.0
      %v2366 = vmax.f32 %v2334, 0.0
      %v2367 = vmax.f32 %v2335, 0.0
      %v2368 = vmax.f32 %v2336, 0.0
      %v2369 = vmax.f32 %v2337, 0.0
      %v2370 = vmax.f32 %v2338, 0.0
      %v2371 = vmax.f32 %v2339, 0.0
      %v2372 = vmax.f32 %v2340, 0.0
      %v2373 = vmax.f32 %v2341, 0.0
      %v2374 = vmax.f32 %v2342, 0.0
      %v2375 = vmax.f32 %v2343, 0.0
      %v2376 = vmax.f32 %v2344, 0.0
      %v2377 = vmax.f32 %v2345, 0.0
      %v2378 = vmax.f32 %v2346, 0.0
      %v2379 = vmax.f32 %v2347, 0.0
      %v2380 = vmax.f32 %v2348, 0.0
      %v2381 = vmax.f32 %v2349, 0.0
      %v2382 = vmax.f32 %v2350, 0.0
      %v2383 = vmax.f32 %v2351, 0.0
      %v2384 = vmax.f32 %v2352, 0.0
      %v2385 = vmax.f32 %v2353, 0.0
      %v2386 = vmax.f32 %v2354, 0.0
      %v2387 = vmax.f32 %v2355, 0.0
      %v2388 = vmax.f32 %v2356, 0.0
      %v2389 = vmax.f32 %v2357, 0.0
      %v2390 = vmax.f32 %v2358, 0.0
      %v2391 = vmax.f32 %v2359, 0.0
      %v2392 = vmax.f32 %v2360, 0.0
      %v2393 = vmax.f32 %v2361, 0.0
      %v2394 = vmax.f32 %v2362, 0.0
      %v2395 = vmax.f32 %v2363, 0.0
      %v2396 = vmax.f32 %v2364, 0.0
      %v2397 = vpack.c.bf16 %v2366, %v2365
      %v2398 = vpack.c.bf16 %v2368, %v2367
      %v2399 = vpack.c.bf16 %v2370, %v2369
      %v2400 = vpack.c.bf16 %v2372, %v2371
      %v2401 = vpack.c.bf16 %v2374, %v2373
      %v2402 = vpack.c.bf16 %v2376, %v2375
      %v2403 = vpack.c.bf16 %v2378, %v2377
      %v2404 = vpack.c.bf16 %v2380, %v2379
      %v2405 = vpack.c.bf16 %v2382, %v2381
      %v2406 = vpack.c.bf16 %v2384, %v2383
      %v2407 = vpack.c.bf16 %v2386, %v2385
      %v2408 = vpack.c.bf16 %v2388, %v2387
      %v2409 = vpack.c.bf16 %v2390, %v2389
      %v2410 = vpack.c.bf16 %v2392, %v2391
      %v2411 = vpack.c.bf16 %v2394, %v2393
      %v2412 = vpack.c.bf16 %v2396, %v2395
      %2413 = vmatpush.bf16.msra.mxu0 %v1039
      %2414 = vmatpush.bf16.msra.mxu0 %v1038
      %2415 = vmatpush.bf16.msra.mxu0 %v1037
      %2416 = vmatpush.bf16.msra.mxu0 %v1036
      %2417 = vmatpush.bf16.msra.mxu0 %v1035
      %2418 = vmatpush.bf16.msra.mxu0 %v1034
      %2419 = vmatpush.bf16.msra.mxu0 %v1033
      %2420 = vmatpush.bf16.msra.mxu0 %v1032
      %2421 = vmatmul.bf16.gmra.mxu0 %v2397
      %v2422 = vpop.f32.mrf.mxu0
      %v2423 = vadd.f32 %v998, %v2422
      %v2424 = vpop.f32.mrf.mxu0
      %v2425 = vadd.f32 %v998, %v2424
      %2426 = vmatmul.bf16.gmra.mxu0 %v2398
      %v2427 = vpop.f32.mrf.mxu0
      %v2428 = vadd.f32 %v998, %v2427
      %v2429 = vpop.f32.mrf.mxu0
      %v2430 = vadd.f32 %v998, %v2429
      %2431 = vmatmul.bf16.gmra.mxu0 %v2399
      %v2432 = vpop.f32.mrf.mxu0
      %v2433 = vadd.f32 %v998, %v2432
      %v2434 = vpop.f32.mrf.mxu0
      %v2435 = vadd.f32 %v998, %v2434
      %2436 = vmatmul.bf16.gmra.mxu0 %v2400
      %v2437 = vpop.f32.mrf.mxu0
      %v2438 = vadd.f32 %v998, %v2437
      %v2439 = vpop.f32.mrf.mxu0
      %v2440 = vadd.f32 %v998, %v2439
      %2441 = vmatmul.bf16.gmra.mxu0 %v2401
      %v2442 = vpop.f32.mrf.mxu0
      %v2443 = vadd.f32 %v998, %v2442
      %v2444 = vpop.f32.mrf.mxu0
      %v2445 = vadd.f32 %v998, %v2444
      %2446 = vmatmul.bf16.gmra.mxu0 %v2402
      %v2447 = vpop.f32.mrf.mxu0
      %v2448 = vadd.f32 %v998, %v2447
      %v2449 = vpop.f32.mrf.mxu0
      %v2450 = vadd.f32 %v998, %v2449
      %2451 = vmatmul.bf16.gmra.mxu0 %v2403
      %v2452 = vpop.f32.mrf.mxu0
      %v2453 = vadd.f32 %v998, %v2452
      %v2454 = vpop.f32.mrf.mxu0
      %v2455 = vadd.f32 %v998, %v2454
      %2456 = vmatmul.bf16.gmra.mxu0 %v2404
      %v2457 = vpop.f32.mrf.mxu0
      %v2458 = vadd.f32 %v998, %v2457
      %v2459 = vpop.f32.mrf.mxu0
      %v2460 = vadd.f32 %v998, %v2459
      %2461 = vmatmul.bf16.gmra.mxu0 %v2405
      %v2462 = vpop.f32.mrf.mxu0
      %v2463 = vadd.f32 %v998, %v2462
      %v2464 = vpop.f32.mrf.mxu0
      %v2465 = vadd.f32 %v998, %v2464
      %2466 = vmatmul.bf16.gmra.mxu0 %v2406
      %v2467 = vpop.f32.mrf.mxu0
      %v2468 = vadd.f32 %v998, %v2467
      %v2469 = vpop.f32.mrf.mxu0
      %v2470 = vadd.f32 %v998, %v2469
      %2471 = vmatmul.bf16.gmra.mxu0 %v2407
      %v2472 = vpop.f32.mrf.mxu0
      %v2473 = vadd.f32 %v998, %v2472
      %v2474 = vpop.f32.mrf.mxu0
      %v2475 = vadd.f32 %v998, %v2474
      %2476 = vmatmul.bf16.gmra.mxu0 %v2408
      %v2477 = vpop.f32.mrf.mxu0
      %v2478 = vadd.f32 %v998, %v2477
      %v2479 = vpop.f32.mrf.mxu0
      %v2480 = vadd.f32 %v998, %v2479
      %2481 = vmatmul.bf16.gmra.mxu0 %v2409
      %v2482 = vpop.f32.mrf.mxu0
      %v2483 = vadd.f32 %v998, %v2482
      %v2484 = vpop.f32.mrf.mxu0
      %v2485 = vadd.f32 %v998, %v2484
      %2486 = vmatmul.bf16.gmra.mxu0 %v2410
      %v2487 = vpop.f32.mrf.mxu0
      %v2488 = vadd.f32 %v998, %v2487
      %v2489 = vpop.f32.mrf.mxu0
      %v2490 = vadd.f32 %v998, %v2489
      %2491 = vmatmul.bf16.gmra.mxu0 %v2411
      %v2492 = vpop.f32.mrf.mxu0
      %v2493 = vadd.f32 %v998, %v2492
      %v2494 = vpop.f32.mrf.mxu0
      %v2495 = vadd.f32 %v998, %v2494
      %2496 = vmatmul.bf16.gmra.mxu0 %v2412
      %v2497 = vpop.f32.mrf.mxu0
      %v2498 = vadd.f32 %v998, %v2497
      %v2499 = vpop.f32.mrf.mxu0
      %v2500 = vadd.f32 %v998, %v2499
      %2501 = vdwg.mxu0
      %v2502 = vmax.f32 %v2423, 0.0
      %v2503 = vmax.f32 %v2425, 0.0
      %v2504 = vmax.f32 %v2428, 0.0
      %v2505 = vmax.f32 %v2430, 0.0
      %v2506 = vmax.f32 %v2433, 0.0
      %v2507 = vmax.f32 %v2435, 0.0
      %v2508 = vmax.f32 %v2438, 0.0
      %v2509 = vmax.f32 %v2440, 0.0
      %v2510 = vmax.f32 %v2443, 0.0
      %v2511 = vmax.f32 %v2445, 0.0
      %v2512 = vmax.f32 %v2448, 0.0
      %v2513 = vmax.f32 %v2450, 0.0
      %v2514 = vmax.f32 %v2453, 0.0
      %v2515 = vmax.f32 %v2455, 0.0
      %v2516 = vmax.f32 %v2458, 0.0
      %v2517 = vmax.f32 %v2460, 0.0
      %v2518 = vmax.f32 %v2463, 0.0
      %v2519 = vmax.f32 %v2465, 0.0
      %v2520 = vmax.f32 %v2468, 0.0
      %v2521 = vmax.f32 %v2470, 0.0
      %v2522 = vmax.f32 %v2473, 0.0
      %v2523 = vmax.f32 %v2475, 0.0
      %v2524 = vmax.f32 %v2478, 0.0
      %v2525 = vmax.f32 %v2480, 0.0
      %v2526 = vmax.f32 %v2483, 0.0
      %v2527 = vmax.f32 %v2485, 0.0
      %v2528 = vmax.f32 %v2488, 0.0
      %v2529 = vmax.f32 %v2490, 0.0
      %v2530 = vmax.f32 %v2493, 0.0
      %v2531 = vmax.f32 %v2495, 0.0
      %v2532 = vmax.f32 %v2498, 0.0
      %v2533 = vmax.f32 %v2500, 0.0
      %v2534 = vmul.f32 %v2502, %v1169
      %v2535 = vmul.f32 %v2503, %v1169
      %v2536 = vmul.f32 %v2504, %v1169
      %v2537 = vmul.f32 %v2505, %v1169
      %v2538 = vmul.f32 %v2506, %v1169
      %v2539 = vmul.f32 %v2507, %v1169
      %v2540 = vmul.f32 %v2508, %v1169
      %v2541 = vmul.f32 %v2509, %v1169
      %v2542 = vmul.f32 %v2510, %v1169
      %v2543 = vmul.f32 %v2511, %v1169
      %v2544 = vmul.f32 %v2512, %v1169
      %v2545 = vmul.f32 %v2513, %v1169
      %v2546 = vmul.f32 %v2514, %v1169
      %v2547 = vmul.f32 %v2515, %v1169
      %v2548 = vmul.f32 %v2516, %v1169
      %v2549 = vmul.f32 %v2517, %v1169
      %v2550 = vmul.f32 %v2518, %v1169
      %v2551 = vmul.f32 %v2519, %v1169
      %v2552 = vmul.f32 %v2520, %v1169
      %v2553 = vmul.f32 %v2521, %v1169
      %v2554 = vmul.f32 %v2522, %v1169
      %v2555 = vmul.f32 %v2523, %v1169
      %v2556 = vmul.f32 %v2524, %v1169
      %v2557 = vmul.f32 %v2525, %v1169
      %v2558 = vmul.f32 %v2526, %v1169
      %v2559 = vmul.f32 %v2527, %v1169
      %v2560 = vmul.f32 %v2528, %v1169
      %v2561 = vmul.f32 %v2529, %v1169
      %v2562 = vmul.f32 %v2530, %v1169
      %v2563 = vmul.f32 %v2531, %v1169
      %v2564 = vmul.f32 %v2532, %v1169
      %v2565 = vmul.f32 %v2533, %v1169
      %2566 = vadd.xlane.f32.xlu0 %v2534
      %v2567 = vpop.xlane.xlu0 %2566
      %2568 = vadd.xlane.f32.xlu0 %v2535
      %v2569 = vpop.xlane.xlu0 %2568
      %2570 = vadd.xlane.f32.xlu0 %v2536
      %v2571 = vpop.xlane.xlu0 %2570
      %2572 = vadd.xlane.f32.xlu0 %v2537
      %v2573 = vpop.xlane.xlu0 %2572
      %2574 = vadd.xlane.f32.xlu0 %v2538
      %v2575 = vpop.xlane.xlu0 %2574
      %2576 = vadd.xlane.f32.xlu0 %v2539
      %v2577 = vpop.xlane.xlu0 %2576
      %2578 = vadd.xlane.f32.xlu0 %v2540
      %v2579 = vpop.xlane.xlu0 %2578
      %2580 = vadd.xlane.f32.xlu0 %v2541
      %v2581 = vpop.xlane.xlu0 %2580
      %2582 = vadd.xlane.f32.xlu0 %v2542
      %v2583 = vpop.xlane.xlu0 %2582
      %2584 = vadd.xlane.f32.xlu0 %v2543
      %v2585 = vpop.xlane.xlu0 %2584
      %2586 = vadd.xlane.f32.xlu0 %v2544
      %v2587 = vpop.xlane.xlu0 %2586
      %2588 = vadd.xlane.f32.xlu0 %v2545
      %v2589 = vpop.xlane.xlu0 %2588
      %2590 = vadd.xlane.f32.xlu0 %v2546
      %v2591 = vpop.xlane.xlu0 %2590
      %2592 = vadd.xlane.f32.xlu0 %v2547
      %v2593 = vpop.xlane.xlu0 %2592
      %2594 = vadd.xlane.f32.xlu0 %v2548
      %v2595 = vpop.xlane.xlu0 %2594
      %2596 = vadd.xlane.f32.xlu0 %v2549
      %v2597 = vpop.xlane.xlu0 %2596
      %2598 = vadd.xlane.f32.xlu0 %v2550
      %v2599 = vpop.xlane.xlu0 %2598
      %2600 = vadd.xlane.f32.xlu0 %v2551
      %v2601 = vpop.xlane.xlu0 %2600
      %2602 = vadd.xlane.f32.xlu0 %v2552
      %v2603 = vpop.xlane.xlu0 %2602
      %2604 = vadd.xlane.f32.xlu0 %v2553
      %v2605 = vpop.xlane.xlu0 %2604
      %2606 = vadd.xlane.f32.xlu0 %v2554
      %v2607 = vpop.xlane.xlu0 %2606
      %2608 = vadd.xlane.f32.xlu0 %v2555
      %v2609 = vpop.xlane.xlu0 %2608
      %2610 = vadd.xlane.f32.xlu0 %v2556
      %v2611 = vpop.xlane.xlu0 %2610
      %2612 = vadd.xlane.f32.xlu0 %v2557
      %v2613 = vpop.xlane.xlu0 %2612
      %2614 = vadd.xlane.f32.xlu0 %v2558
      %v2615 = vpop.xlane.xlu0 %2614
      %2616 = vadd.xlane.f32.xlu0 %v2559
      %v2617 = vpop.xlane.xlu0 %2616
      %2618 = vadd.xlane.f32.xlu0 %v2560
      %v2619 = vpop.xlane.xlu0 %2618
      %2620 = vadd.xlane.f32.xlu0 %v2561
      %v2621 = vpop.xlane.xlu0 %2620
      %2622 = vadd.xlane.f32.xlu0 %v2562
      %v2623 = vpop.xlane.xlu0 %2622
      %2624 = vadd.xlane.f32.xlu0 %v2563
      %v2625 = vpop.xlane.xlu0 %2624
      %2626 = vadd.xlane.f32.xlu0 %v2564
      %v2627 = vpop.xlane.xlu0 %2626
      %2628 = vadd.xlane.f32.xlu0 %v2565
      %v2629 = vpop.xlane.xlu0 %2628
      %v2630 = vmul.f32 %v2502, %v1266
      %v2631 = vmul.f32 %v2503, %v1266
      %v2632 = vmul.f32 %v2504, %v1266
      %v2633 = vmul.f32 %v2505, %v1266
      %v2634 = vmul.f32 %v2506, %v1266
      %v2635 = vmul.f32 %v2507, %v1266
      %v2636 = vmul.f32 %v2508, %v1266
      %v2637 = vmul.f32 %v2509, %v1266
      %v2638 = vmul.f32 %v2510, %v1266
      %v2639 = vmul.f32 %v2511, %v1266
      %v2640 = vmul.f32 %v2512, %v1266
      %v2641 = vmul.f32 %v2513, %v1266
      %v2642 = vmul.f32 %v2514, %v1266
      %v2643 = vmul.f32 %v2515, %v1266
      %v2644 = vmul.f32 %v2516, %v1266
      %v2645 = vmul.f32 %v2517, %v1266
      %v2646 = vmul.f32 %v2518, %v1266
      %v2647 = vmul.f32 %v2519, %v1266
      %v2648 = vmul.f32 %v2520, %v1266
      %v2649 = vmul.f32 %v2521, %v1266
      %v2650 = vmul.f32 %v2522, %v1266
      %v2651 = vmul.f32 %v2523, %v1266
      %v2652 = vmul.f32 %v2524, %v1266
      %v2653 = vmul.f32 %v2525, %v1266
      %v2654 = vmul.f32 %v2526, %v1266
      %v2655 = vmul.f32 %v2527, %v1266
      %v2656 = vmul.f32 %v2528, %v1266
      %v2657 = vmul.f32 %v2529, %v1266
      %v2658 = vmul.f32 %v2530, %v1266
      %v2659 = vmul.f32 %v2531, %v1266
      %v2660 = vmul.f32 %v2532, %v1266
      %v2661 = vmul.f32 %v2533, %v1266
      %2662 = vadd.xlane.f32.xlu0 %v2630
      %v2663 = vpop.xlane.xlu0 %2662
      %2664 = vadd.xlane.f32.xlu0 %v2631
      %v2665 = vpop.xlane.xlu0 %2664
      %2666 = vadd.xlane.f32.xlu0 %v2632
      %v2667 = vpop.xlane.xlu0 %2666
      %2668 = vadd.xlane.f32.xlu0 %v2633
      %v2669 = vpop.xlane.xlu0 %2668
      %2670 = vadd.xlane.f32.xlu0 %v2634
      %v2671 = vpop.xlane.xlu0 %2670
      %2672 = vadd.xlane.f32.xlu0 %v2635
      %v2673 = vpop.xlane.xlu0 %2672
      %2674 = vadd.xlane.f32.xlu0 %v2636
      %v2675 = vpop.xlane.xlu0 %2674
      %2676 = vadd.xlane.f32.xlu0 %v2637
      %v2677 = vpop.xlane.xlu0 %2676
      %2678 = vadd.xlane.f32.xlu0 %v2638
      %v2679 = vpop.xlane.xlu0 %2678
      %2680 = vadd.xlane.f32.xlu0 %v2639
      %v2681 = vpop.xlane.xlu0 %2680
      %2682 = vadd.xlane.f32.xlu0 %v2640
      %v2683 = vpop.xlane.xlu0 %2682
      %2684 = vadd.xlane.f32.xlu0 %v2641
      %v2685 = vpop.xlane.xlu0 %2684
      %2686 = vadd.xlane.f32.xlu0 %v2642
      %v2687 = vpop.xlane.xlu0 %2686
      %2688 = vadd.xlane.f32.xlu0 %v2643
      %v2689 = vpop.xlane.xlu0 %2688
      %2690 = vadd.xlane.f32.xlu0 %v2644
      %v2691 = vpop.xlane.xlu0 %2690
      %2692 = vadd.xlane.f32.xlu0 %v2645
      %v2693 = vpop.xlane.xlu0 %2692
      %2694 = vadd.xlane.f32.xlu0 %v2646
      %v2695 = vpop.xlane.xlu0 %2694
      %2696 = vadd.xlane.f32.xlu0 %v2647
      %v2697 = vpop.xlane.xlu0 %2696
      %2698 = vadd.xlane.f32.xlu0 %v2648
      %v2699 = vpop.xlane.xlu0 %2698
      %2700 = vadd.xlane.f32.xlu0 %v2649
      %v2701 = vpop.xlane.xlu0 %2700
      %2702 = vadd.xlane.f32.xlu0 %v2650
      %v2703 = vpop.xlane.xlu0 %2702
      %2704 = vadd.xlane.f32.xlu0 %v2651
      %v2705 = vpop.xlane.xlu0 %2704
      %2706 = vadd.xlane.f32.xlu0 %v2652
      %v2707 = vpop.xlane.xlu0 %2706
      %2708 = vadd.xlane.f32.xlu0 %v2653
      %v2709 = vpop.xlane.xlu0 %2708
      %2710 = vadd.xlane.f32.xlu0 %v2654
      %v2711 = vpop.xlane.xlu0 %2710
      %2712 = vadd.xlane.f32.xlu0 %v2655
      %v2713 = vpop.xlane.xlu0 %2712
      %2714 = vadd.xlane.f32.xlu0 %v2656
      %v2715 = vpop.xlane.xlu0 %2714
      %2716 = vadd.xlane.f32.xlu0 %v2657
      %v2717 = vpop.xlane.xlu0 %2716
      %2718 = vadd.xlane.f32.xlu0 %v2658
      %v2719 = vpop.xlane.xlu0 %2718
      %2720 = vadd.xlane.f32.xlu0 %v2659
      %v2721 = vpop.xlane.xlu0 %2720
      %2722 = vadd.xlane.f32.xlu0 %v2660
      %v2723 = vpop.xlane.xlu0 %2722
      %2724 = vadd.xlane.f32.xlu0 %v2661
      %v2725 = vpop.xlane.xlu0 %2724
      %v2726 = vmul.f32 %v2502, %v1363
      %v2727 = vmul.f32 %v2503, %v1363
      %v2728 = vmul.f32 %v2504, %v1363
      %v2729 = vmul.f32 %v2505, %v1363
      %v2730 = vmul.f32 %v2506, %v1363
      %v2731 = vmul.f32 %v2507, %v1363
      %v2732 = vmul.f32 %v2508, %v1363
      %v2733 = vmul.f32 %v2509, %v1363
      %v2734 = vmul.f32 %v2510, %v1363
      %v2735 = vmul.f32 %v2511, %v1363
      %v2736 = vmul.f32 %v2512, %v1363
      %v2737 = vmul.f32 %v2513, %v1363
      %v2738 = vmul.f32 %v2514, %v1363
      %v2739 = vmul.f32 %v2515, %v1363
      %v2740 = vmul.f32 %v2516, %v1363
      %v2741 = vmul.f32 %v2517, %v1363
      %v2742 = vmul.f32 %v2518, %v1363
      %v2743 = vmul.f32 %v2519, %v1363
      %v2744 = vmul.f32 %v2520, %v1363
      %v2745 = vmul.f32 %v2521, %v1363
      %v2746 = vmul.f32 %v2522, %v1363
      %v2747 = vmul.f32 %v2523, %v1363
      %v2748 = vmul.f32 %v2524, %v1363
      %v2749 = vmul.f32 %v2525, %v1363
      %v2750 = vmul.f32 %v2526, %v1363
      %v2751 = vmul.f32 %v2527, %v1363
      %v2752 = vmul.f32 %v2528, %v1363
      %v2753 = vmul.f32 %v2529, %v1363
      %v2754 = vmul.f32 %v2530, %v1363
      %v2755 = vmul.f32 %v2531, %v1363
      %v2756 = vmul.f32 %v2532, %v1363
      %v2757 = vmul.f32 %v2533, %v1363
      %2758 = vadd.xlane.f32.xlu0 %v2726
      %v2759 = vpop.xlane.xlu0 %2758
      %2760 = vadd.xlane.f32.xlu0 %v2727
      %v2761 = vpop.xlane.xlu0 %2760
      %2762 = vadd.xlane.f32.xlu0 %v2728
      %v2763 = vpop.xlane.xlu0 %2762
      %2764 = vadd.xlane.f32.xlu0 %v2729
      %v2765 = vpop.xlane.xlu0 %2764
      %2766 = vadd.xlane.f32.xlu0 %v2730
      %v2767 = vpop.xlane.xlu0 %2766
      %2768 = vadd.xlane.f32.xlu0 %v2731
      %v2769 = vpop.xlane.xlu0 %2768
      %2770 = vadd.xlane.f32.xlu0 %v2732
      %v2771 = vpop.xlane.xlu0 %2770
      %2772 = vadd.xlane.f32.xlu0 %v2733
      %v2773 = vpop.xlane.xlu0 %2772
      %2774 = vadd.xlane.f32.xlu0 %v2734
      %v2775 = vpop.xlane.xlu0 %2774
      %2776 = vadd.xlane.f32.xlu0 %v2735
      %v2777 = vpop.xlane.xlu0 %2776
      %2778 = vadd.xlane.f32.xlu0 %v2736
      %v2779 = vpop.xlane.xlu0 %2778
      %2780 = vadd.xlane.f32.xlu0 %v2737
      %v2781 = vpop.xlane.xlu0 %2780
      %2782 = vadd.xlane.f32.xlu0 %v2738
      %v2783 = vpop.xlane.xlu0 %2782
      %2784 = vadd.xlane.f32.xlu0 %v2739
      %v2785 = vpop.xlane.xlu0 %2784
      %2786 = vadd.xlane.f32.xlu0 %v2740
      %v2787 = vpop.xlane.xlu0 %2786
      %2788 = vadd.xlane.f32.xlu0 %v2741
      %v2789 = vpop.xlane.xlu0 %2788
      %2790 = vadd.xlane.f32.xlu0 %v2742
      %v2791 = vpop.xlane.xlu0 %2790
      %2792 = vadd.xlane.f32.xlu0 %v2743
      %v2793 = vpop.xlane.xlu0 %2792
      %2794 = vadd.xlane.f32.xlu0 %v2744
      %v2795 = vpop.xlane.xlu0 %2794
      %2796 = vadd.xlane.f32.xlu0 %v2745
      %v2797 = vpop.xlane.xlu0 %2796
      %2798 = vadd.xlane.f32.xlu0 %v2746
      %v2799 = vpop.xlane.xlu0 %2798
      %2800 = vadd.xlane.f32.xlu0 %v2747
      %v2801 = vpop.xlane.xlu0 %2800
      %2802 = vadd.xlane.f32.xlu0 %v2748
      %v2803 = vpop.xlane.xlu0 %2802
      %2804 = vadd.xlane.f32.xlu0 %v2749
      %v2805 = vpop.xlane.xlu0 %2804
      %2806 = vadd.xlane.f32.xlu0 %v2750
      %v2807 = vpop.xlane.xlu0 %2806
      %2808 = vadd.xlane.f32.xlu0 %v2751
      %v2809 = vpop.xlane.xlu0 %2808
      %2810 = vadd.xlane.f32.xlu0 %v2752
      %v2811 = vpop.xlane.xlu0 %2810
      %2812 = vadd.xlane.f32.xlu0 %v2753
      %v2813 = vpop.xlane.xlu0 %2812
      %2814 = vadd.xlane.f32.xlu0 %v2754
      %v2815 = vpop.xlane.xlu0 %2814
      %2816 = vadd.xlane.f32.xlu0 %v2755
      %v2817 = vpop.xlane.xlu0 %2816
      %2818 = vadd.xlane.f32.xlu0 %v2756
      %v2819 = vpop.xlane.xlu0 %2818
      %2820 = vadd.xlane.f32.xlu0 %v2757
      %v2821 = vpop.xlane.xlu0 %2820
      %v2822 = vmul.f32 %v2502, %v1460
      %v2823 = vmul.f32 %v2503, %v1460
      %v2824 = vmul.f32 %v2504, %v1460
      %v2825 = vmul.f32 %v2505, %v1460
      %v2826 = vmul.f32 %v2506, %v1460
      %v2827 = vmul.f32 %v2507, %v1460
      %v2828 = vmul.f32 %v2508, %v1460
      %v2829 = vmul.f32 %v2509, %v1460
      %v2830 = vmul.f32 %v2510, %v1460
      %v2831 = vmul.f32 %v2511, %v1460
      %v2832 = vmul.f32 %v2512, %v1460
      %v2833 = vmul.f32 %v2513, %v1460
      %v2834 = vmul.f32 %v2514, %v1460
      %v2835 = vmul.f32 %v2515, %v1460
      %v2836 = vmul.f32 %v2516, %v1460
      %v2837 = vmul.f32 %v2517, %v1460
      %v2838 = vmul.f32 %v2518, %v1460
      %v2839 = vmul.f32 %v2519, %v1460
      %v2840 = vmul.f32 %v2520, %v1460
      %v2841 = vmul.f32 %v2521, %v1460
      %v2842 = vmul.f32 %v2522, %v1460
      %v2843 = vmul.f32 %v2523, %v1460
      %v2844 = vmul.f32 %v2524, %v1460
      %v2845 = vmul.f32 %v2525, %v1460
      %v2846 = vmul.f32 %v2526, %v1460
      %v2847 = vmul.f32 %v2527, %v1460
      %v2848 = vmul.f32 %v2528, %v1460
      %v2849 = vmul.f32 %v2529, %v1460
      %v2850 = vmul.f32 %v2530, %v1460
      %v2851 = vmul.f32 %v2531, %v1460
      %v2852 = vmul.f32 %v2532, %v1460
      %v2853 = vmul.f32 %v2533, %v1460
      %2854 = vadd.xlane.f32.xlu0 %v2822
      %v2855 = vpop.xlane.xlu0 %2854
      %2856 = vadd.xlane.f32.xlu0 %v2823
      %v2857 = vpop.xlane.xlu0 %2856
      %2858 = vadd.xlane.f32.xlu0 %v2824
      %v2859 = vpop.xlane.xlu0 %2858
      %2860 = vadd.xlane.f32.xlu0 %v2825
      %v2861 = vpop.xlane.xlu0 %2860
      %2862 = vadd.xlane.f32.xlu0 %v2826
      %v2863 = vpop.xlane.xlu0 %2862
      %2864 = vadd.xlane.f32.xlu0 %v2827
      %v2865 = vpop.xlane.xlu0 %2864
      %2866 = vadd.xlane.f32.xlu0 %v2828
      %v2867 = vpop.xlane.xlu0 %2866
      %2868 = vadd.xlane.f32.xlu0 %v2829
      %v2869 = vpop.xlane.xlu0 %2868
      %2870 = vadd.xlane.f32.xlu0 %v2830
      %v2871 = vpop.xlane.xlu0 %2870
      %2872 = vadd.xlane.f32.xlu0 %v2831
      %v2873 = vpop.xlane.xlu0 %2872
      %2874 = vadd.xlane.f32.xlu0 %v2832
      %v2875 = vpop.xlane.xlu0 %2874
      %2876 = vadd.xlane.f32.xlu0 %v2833
      %v2877 = vpop.xlane.xlu0 %2876
      %2878 = vadd.xlane.f32.xlu0 %v2834
      %v2879 = vpop.xlane.xlu0 %2878
      %2880 = vadd.xlane.f32.xlu0 %v2835
      %v2881 = vpop.xlane.xlu0 %2880
      %2882 = vadd.xlane.f32.xlu0 %v2836
      %v2883 = vpop.xlane.xlu0 %2882
      %2884 = vadd.xlane.f32.xlu0 %v2837
      %v2885 = vpop.xlane.xlu0 %2884
      %2886 = vadd.xlane.f32.xlu0 %v2838
      %v2887 = vpop.xlane.xlu0 %2886
      %2888 = vadd.xlane.f32.xlu0 %v2839
      %v2889 = vpop.xlane.xlu0 %2888
      %2890 = vadd.xlane.f32.xlu0 %v2840
      %v2891 = vpop.xlane.xlu0 %2890
      %2892 = vadd.xlane.f32.xlu0 %v2841
      %v2893 = vpop.xlane.xlu0 %2892
      %2894 = vadd.xlane.f32.xlu0 %v2842
      %v2895 = vpop.xlane.xlu0 %2894
      %2896 = vadd.xlane.f32.xlu0 %v2843
      %v2897 = vpop.xlane.xlu0 %2896
      %2898 = vadd.xlane.f32.xlu0 %v2844
      %v2899 = vpop.xlane.xlu0 %2898
      %2900 = vadd.xlane.f32.xlu0 %v2845
      %v2901 = vpop.xlane.xlu0 %2900
      %2902 = vadd.xlane.f32.xlu0 %v2846
      %v2903 = vpop.xlane.xlu0 %2902
      %2904 = vadd.xlane.f32.xlu0 %v2847
      %v2905 = vpop.xlane.xlu0 %2904
      %2906 = vadd.xlane.f32.xlu0 %v2848
      %v2907 = vpop.xlane.xlu0 %2906
      %2908 = vadd.xlane.f32.xlu0 %v2849
      %v2909 = vpop.xlane.xlu0 %2908
      %2910 = vadd.xlane.f32.xlu0 %v2850
      %v2911 = vpop.xlane.xlu0 %2910
      %2912 = vadd.xlane.f32.xlu0 %v2851
      %v2913 = vpop.xlane.xlu0 %2912
      %2914 = vadd.xlane.f32.xlu0 %v2852
      %v2915 = vpop.xlane.xlu0 %2914
      %2916 = vadd.xlane.f32.xlu0 %v2853
      %v2917 = vpop.xlane.xlu0 %2916
      %v2918 = vsel %vm1557, %v2567, %v2663
      %v2919 = vsel %vm1557, %v2569, %v2665
      %v2920 = vsel %vm1557, %v2571, %v2667
      %v2921 = vsel %vm1557, %v2573, %v2669
      %v2922 = vsel %vm1557, %v2575, %v2671
      %v2923 = vsel %vm1557, %v2577, %v2673
      %v2924 = vsel %vm1557, %v2579, %v2675
      %v2925 = vsel %vm1557, %v2581, %v2677
      %v2926 = vsel %vm1557, %v2583, %v2679
      %v2927 = vsel %vm1557, %v2585, %v2681
      %v2928 = vsel %vm1557, %v2587, %v2683
      %v2929 = vsel %vm1557, %v2589, %v2685
      %v2930 = vsel %vm1557, %v2591, %v2687
      %v2931 = vsel %vm1557, %v2593, %v2689
      %v2932 = vsel %vm1557, %v2595, %v2691
      %v2933 = vsel %vm1557, %v2597, %v2693
      %v2934 = vsel %vm1557, %v2599, %v2695
      %v2935 = vsel %vm1557, %v2601, %v2697
      %v2936 = vsel %vm1557, %v2603, %v2699
      %v2937 = vsel %vm1557, %v2605, %v2701
      %v2938 = vsel %vm1557, %v2607, %v2703
      %v2939 = vsel %vm1557, %v2609, %v2705
      %v2940 = vsel %vm1557, %v2611, %v2707
      %v2941 = vsel %vm1557, %v2613, %v2709
      %v2942 = vsel %vm1557, %v2615, %v2711
      %v2943 = vsel %vm1557, %v2617, %v2713
      %v2944 = vsel %vm1557, %v2619, %v2715
      %v2945 = vsel %vm1557, %v2621, %v2717
      %v2946 = vsel %vm1557, %v2623, %v2719
      %v2947 = vsel %vm1557, %v2625, %v2721
      %v2948 = vsel %vm1557, %v2627, %v2723
      %v2949 = vsel %vm1557, %v2629, %v2725
      %v2950 = vsel %vm1590, %v2918, %v2759
      %v2951 = vsel %vm1590, %v2919, %v2761
      %v2952 = vsel %vm1590, %v2920, %v2763
      %v2953 = vsel %vm1590, %v2921, %v2765
      %v2954 = vsel %vm1590, %v2922, %v2767
      %v2955 = vsel %vm1590, %v2923, %v2769
      %v2956 = vsel %vm1590, %v2924, %v2771
      %v2957 = vsel %vm1590, %v2925, %v2773
      %v2958 = vsel %vm1590, %v2926, %v2775
      %v2959 = vsel %vm1590, %v2927, %v2777
      %v2960 = vsel %vm1590, %v2928, %v2779
      %v2961 = vsel %vm1590, %v2929, %v2781
      %v2962 = vsel %vm1590, %v2930, %v2783
      %v2963 = vsel %vm1590, %v2931, %v2785
      %v2964 = vsel %vm1590, %v2932, %v2787
      %v2965 = vsel %vm1590, %v2933, %v2789
      %v2966 = vsel %vm1590, %v2934, %v2791
      %v2967 = vsel %vm1590, %v2935, %v2793
      %v2968 = vsel %vm1590, %v2936, %v2795
      %v2969 = vsel %vm1590, %v2937, %v2797
      %v2970 = vsel %vm1590, %v2938, %v2799
      %v2971 = vsel %vm1590, %v2939, %v2801
      %v2972 = vsel %vm1590, %v2940, %v2803
      %v2973 = vsel %vm1590, %v2941, %v2805
      %v2974 = vsel %vm1590, %v2942, %v2807
      %v2975 = vsel %vm1590, %v2943, %v2809
      %v2976 = vsel %vm1590, %v2944, %v2811
      %v2977 = vsel %vm1590, %v2945, %v2813
      %v2978 = vsel %vm1590, %v2946, %v2815
      %v2979 = vsel %vm1590, %v2947, %v2817
      %v2980 = vsel %vm1590, %v2948, %v2819
      %v2981 = vsel %vm1590, %v2949, %v2821
      %v2982 = vsel %vm1623, %v2950, %v2855
      %v2983 = vsel %vm1623, %v2951, %v2857
      %v2984 = vsel %vm1623, %v2952, %v2859
      %v2985 = vsel %vm1623, %v2953, %v2861
      %v2986 = vsel %vm1623, %v2954, %v2863
      %v2987 = vsel %vm1623, %v2955, %v2865
      %v2988 = vsel %vm1623, %v2956, %v2867
      %v2989 = vsel %vm1623, %v2957, %v2869
      %v2990 = vsel %vm1623, %v2958, %v2871
      %v2991 = vsel %vm1623, %v2959, %v2873
      %v2992 = vsel %vm1623, %v2960, %v2875
      %v2993 = vsel %vm1623, %v2961, %v2877
      %v2994 = vsel %vm1623, %v2962, %v2879
      %v2995 = vsel %vm1623, %v2963, %v2881
      %v2996 = vsel %vm1623, %v2964, %v2883
      %v2997 = vsel %vm1623, %v2965, %v2885
      %v2998 = vsel %vm1623, %v2966, %v2887
      %v2999 = vsel %vm1623, %v2967, %v2889
      %v3000 = vsel %vm1623, %v2968, %v2891
      %v3001 = vsel %vm1623, %v2969, %v2893
      %v3002 = vsel %vm1623, %v2970, %v2895
      %v3003 = vsel %vm1623, %v2971, %v2897
      %v3004 = vsel %vm1623, %v2972, %v2899
      %v3005 = vsel %vm1623, %v2973, %v2901
      %v3006 = vsel %vm1623, %v2974, %v2903
      %v3007 = vsel %vm1623, %v2975, %v2905
      %v3008 = vsel %vm1623, %v2976, %v2907
      %v3009 = vsel %vm1623, %v2977, %v2909
      %v3010 = vsel %vm1623, %v2978, %v2911
      %v3011 = vsel %vm1623, %v2979, %v2913
      %v3012 = vsel %vm1623, %v2980, %v2915
      %v3013 = vsel %vm1623, %v2981, %v2917
      %v3014 = vadd.f32 %v2982, %v1657
      %v3015 = vadd.f32 %v2983, %v1657
      %v3016 = vadd.f32 %v2984, %v1657
      %v3017 = vadd.f32 %v2985, %v1657
      %v3018 = vadd.f32 %v2986, %v1657
      %v3019 = vadd.f32 %v2987, %v1657
      %v3020 = vadd.f32 %v2988, %v1657
      %v3021 = vadd.f32 %v2989, %v1657
      %v3022 = vadd.f32 %v2990, %v1657
      %v3023 = vadd.f32 %v2991, %v1657
      %v3024 = vadd.f32 %v2992, %v1657
      %v3025 = vadd.f32 %v2993, %v1657
      %v3026 = vadd.f32 %v2994, %v1657
      %v3027 = vadd.f32 %v2995, %v1657
      %v3028 = vadd.f32 %v2996, %v1657
      %v3029 = vadd.f32 %v2997, %v1657
      %v3030 = vadd.f32 %v2998, %v1657
      %v3031 = vadd.f32 %v2999, %v1657
      %v3032 = vadd.f32 %v3000, %v1657
      %v3033 = vadd.f32 %v3001, %v1657
      %v3034 = vadd.f32 %v3002, %v1657
      %v3035 = vadd.f32 %v3003, %v1657
      %v3036 = vadd.f32 %v3004, %v1657
      %v3037 = vadd.f32 %v3005, %v1657
      %v3038 = vadd.f32 %v3006, %v1657
      %v3039 = vadd.f32 %v3007, %v1657
      %v3040 = vadd.f32 %v3008, %v1657
      %v3041 = vadd.f32 %v3009, %v1657
      %v3042 = vadd.f32 %v3010, %v1657
      %v3043 = vadd.f32 %v3011, %v1657
      %v3044 = vadd.f32 %v3012, %v1657
      %v3045 = vadd.f32 %v3013, %v1657
      %s3046 = scalar_lea.vmem %s280, 256
      %3047 = vst.msk [vmem:[%s3046] sm:$0xff] %vm1691, %v3014
      %3048 = vst.msk [vmem:[%s3046 + $0x8] sm:$0xff] %vm1691, %v3015
      %3049 = vst.msk [vmem:[%s3046 + $0x10] sm:$0xff] %vm1691, %v3016
      %3050 = vst.msk [vmem:[%s3046 + $0x18] sm:$0xff] %vm1691, %v3017
      %3051 = vst.msk [vmem:[%s3046 + $0x20] sm:$0xff] %vm1691, %v3018
      %3052 = vst.msk [vmem:[%s3046 + $0x28] sm:$0xff] %vm1691, %v3019
      %3053 = vst.msk [vmem:[%s3046 + $0x30] sm:$0xff] %vm1691, %v3020
      %3054 = vst.msk [vmem:[%s3046 + $0x38] sm:$0xff] %vm1691, %v3021
      %3055 = vst.msk [vmem:[%s3046 + $0x40] sm:$0xff] %vm1691, %v3022
      %3056 = vst.msk [vmem:[%s3046 + $0x48] sm:$0xff] %vm1691, %v3023
      %3057 = vst.msk [vmem:[%s3046 + $0x50] sm:$0xff] %vm1691, %v3024
      %3058 = vst.msk [vmem:[%s3046 + $0x58] sm:$0xff] %vm1691, %v3025
      %3059 = vst.msk [vmem:[%s3046 + $0x60] sm:$0xff] %vm1691, %v3026
      %3060 = vst.msk [vmem:[%s3046 + $0x68] sm:$0xff] %vm1691, %v3027
      %3061 = vst.msk [vmem:[%s3046 + $0x70] sm:$0xff] %vm1691, %v3028
      %3062 = vst.msk [vmem:[%s3046 + $0x78] sm:$0xff] %vm1691, %v3029
      %3063 = vst.msk [vmem:[%s3046 + $0x80] sm:$0xff] %vm1691, %v3030
      %3064 = vst.msk [vmem:[%s3046 + $0x88] sm:$0xff] %vm1691, %v3031
      %3065 = vst.msk [vmem:[%s3046 + $0x90] sm:$0xff] %vm1691, %v3032
      %3066 = vst.msk [vmem:[%s3046 + $0x98] sm:$0xff] %vm1691, %v3033
      %3067 = vst.msk [vmem:[%s3046 + $0xa0] sm:$0xff] %vm1691, %v3034
      %3068 = vst.msk [vmem:[%s3046 + $0xa8] sm:$0xff] %vm1691, %v3035
      %3069 = vst.msk [vmem:[%s3046 + $0xb0] sm:$0xff] %vm1691, %v3036
      %3070 = vst.msk [vmem:[%s3046 + $0xb8] sm:$0xff] %vm1691, %v3037
      %3071 = vst.msk [vmem:[%s3046 + $0xc0] sm:$0xff] %vm1691, %v3038
      %3072 = vst.msk [vmem:[%s3046 + $0xc8] sm:$0xff] %vm1691, %v3039
      %3073 = vst.msk [vmem:[%s3046 + $0xd0] sm:$0xff] %vm1691, %v3040
      %3074 = vst.msk [vmem:[%s3046 + $0xd8] sm:$0xff] %vm1691, %v3041
      %3075 = vst.msk [vmem:[%s3046 + $0xe0] sm:$0xff] %vm1691, %v3042
      %3076 = vst.msk [vmem:[%s3046 + $0xe8] sm:$0xff] %vm1691, %v3043
      %3077 = vst.msk [vmem:[%s3046 + $0xf0] sm:$0xff] %vm1691, %v3044
      %3078 = vst.msk [vmem:[%s3046 + $0xf8] sm:$0xff] %vm1691, %v3045
      %s3079 = scalar_lea.vmem %s274, 512
      %v3080 = vld [vmem:[%s3079] sm:$0xff]
      %v3081 = vld [vmem:[%s3079 + $0x8] sm:$0xff]
      %v3082 = vld [vmem:[%s3079 + $0x10] sm:$0xff]
      %v3083 = vld [vmem:[%s3079 + $0x18] sm:$0xff]
      %v3084 = vld [vmem:[%s3079 + $0x20] sm:$0xff]
      %v3085 = vld [vmem:[%s3079 + $0x28] sm:$0xff]
      %v3086 = vld [vmem:[%s3079 + $0x30] sm:$0xff]
      %v3087 = vld [vmem:[%s3079 + $0x38] sm:$0xff]
      %v3088 = vld [vmem:[%s3079 + $0x40] sm:$0xff]
      %v3089 = vld [vmem:[%s3079 + $0x48] sm:$0xff]
      %v3090 = vld [vmem:[%s3079 + $0x50] sm:$0xff]
      %v3091 = vld [vmem:[%s3079 + $0x58] sm:$0xff]
      %v3092 = vld [vmem:[%s3079 + $0x60] sm:$0xff]
      %v3093 = vld [vmem:[%s3079 + $0x68] sm:$0xff]
      %v3094 = vld [vmem:[%s3079 + $0x70] sm:$0xff]
      %v3095 = vld [vmem:[%s3079 + $0x78] sm:$0xff]
      %v3096 = vld [vmem:[%s3079 + $0x80] sm:$0xff]
      %v3097 = vld [vmem:[%s3079 + $0x88] sm:$0xff]
      %v3098 = vld [vmem:[%s3079 + $0x90] sm:$0xff]
      %v3099 = vld [vmem:[%s3079 + $0x98] sm:$0xff]
      %v3100 = vld [vmem:[%s3079 + $0xa0] sm:$0xff]
      %v3101 = vld [vmem:[%s3079 + $0xa8] sm:$0xff]
      %v3102 = vld [vmem:[%s3079 + $0xb0] sm:$0xff]
      %v3103 = vld [vmem:[%s3079 + $0xb8] sm:$0xff]
      %v3104 = vld [vmem:[%s3079 + $0xc0] sm:$0xff]
      %v3105 = vld [vmem:[%s3079 + $0xc8] sm:$0xff]
      %v3106 = vld [vmem:[%s3079 + $0xd0] sm:$0xff]
      %v3107 = vld [vmem:[%s3079 + $0xd8] sm:$0xff]
      %v3108 = vld [vmem:[%s3079 + $0xe0] sm:$0xff]
      %v3109 = vld [vmem:[%s3079 + $0xe8] sm:$0xff]
      %v3110 = vld [vmem:[%s3079 + $0xf0] sm:$0xff]
      %v3111 = vld [vmem:[%s3079 + $0xf8] sm:$0xff]
      %3113 = vset.pattern.permute.xlu0 0
      %3114 = vperm.xlu0 %3113, %v3080
      %v3115 = vpop.permute.xlu0 %3114
      %3118 = vset.pattern.permute.xlu0 0
      %3119 = vperm.xlu0 %3118, %v3081
      %v3120 = vpop.permute.xlu0 %3119
      %3123 = vset.pattern.permute.xlu0 0
      %3124 = vperm.xlu0 %3123, %v3082
      %v3125 = vpop.permute.xlu0 %3124
      %3128 = vset.pattern.permute.xlu0 0
      %3129 = vperm.xlu0 %3128, %v3083
      %v3130 = vpop.permute.xlu0 %3129
      %3133 = vset.pattern.permute.xlu0 0
      %3134 = vperm.xlu0 %3133, %v3084
      %v3135 = vpop.permute.xlu0 %3134
      %3138 = vset.pattern.permute.xlu0 0
      %3139 = vperm.xlu0 %3138, %v3085
      %v3140 = vpop.permute.xlu0 %3139
      %3143 = vset.pattern.permute.xlu0 0
      %3144 = vperm.xlu0 %3143, %v3086
      %v3145 = vpop.permute.xlu0 %3144
      %3148 = vset.pattern.permute.xlu0 0
      %3149 = vperm.xlu0 %3148, %v3087
      %v3150 = vpop.permute.xlu0 %3149
      %3153 = vset.pattern.permute.xlu0 0
      %3154 = vperm.xlu0 %3153, %v3088
      %v3155 = vpop.permute.xlu0 %3154
      %3158 = vset.pattern.permute.xlu0 0
      %3159 = vperm.xlu0 %3158, %v3089
      %v3160 = vpop.permute.xlu0 %3159
      %3163 = vset.pattern.permute.xlu0 0
      %3164 = vperm.xlu0 %3163, %v3090
      %v3165 = vpop.permute.xlu0 %3164
      %3168 = vset.pattern.permute.xlu0 0
      %3169 = vperm.xlu0 %3168, %v3091
      %v3170 = vpop.permute.xlu0 %3169
      %3173 = vset.pattern.permute.xlu0 0
      %3174 = vperm.xlu0 %3173, %v3092
      %v3175 = vpop.permute.xlu0 %3174
      %3178 = vset.pattern.permute.xlu0 0
      %3179 = vperm.xlu0 %3178, %v3093
      %v3180 = vpop.permute.xlu0 %3179
      %3183 = vset.pattern.permute.xlu0 0
      %3184 = vperm.xlu0 %3183, %v3094
      %v3185 = vpop.permute.xlu0 %3184
      %3188 = vset.pattern.permute.xlu0 0
      %3189 = vperm.xlu0 %3188, %v3095
      %v3190 = vpop.permute.xlu0 %3189
      %3193 = vset.pattern.permute.xlu0 0
      %3194 = vperm.xlu0 %3193, %v3096
      %v3195 = vpop.permute.xlu0 %3194
      %3198 = vset.pattern.permute.xlu0 0
      %3199 = vperm.xlu0 %3198, %v3097
      %v3200 = vpop.permute.xlu0 %3199
      %3203 = vset.pattern.permute.xlu0 0
      %3204 = vperm.xlu0 %3203, %v3098
      %v3205 = vpop.permute.xlu0 %3204
      %3208 = vset.pattern.permute.xlu0 0
      %3209 = vperm.xlu0 %3208, %v3099
      %v3210 = vpop.permute.xlu0 %3209
      %3213 = vset.pattern.permute.xlu0 0
      %3214 = vperm.xlu0 %3213, %v3100
      %v3215 = vpop.permute.xlu0 %3214
      %3218 = vset.pattern.permute.xlu0 0
      %3219 = vperm.xlu0 %3218, %v3101
      %v3220 = vpop.permute.xlu0 %3219
      %3223 = vset.pattern.permute.xlu0 0
      %3224 = vperm.xlu0 %3223, %v3102
      %v3225 = vpop.permute.xlu0 %3224
      %3228 = vset.pattern.permute.xlu0 0
      %3229 = vperm.xlu0 %3228, %v3103
      %v3230 = vpop.permute.xlu0 %3229
      %3233 = vset.pattern.permute.xlu0 0
      %3234 = vperm.xlu0 %3233, %v3104
      %v3235 = vpop.permute.xlu0 %3234
      %3238 = vset.pattern.permute.xlu0 0
      %3239 = vperm.xlu0 %3238, %v3105
      %v3240 = vpop.permute.xlu0 %3239
      %3243 = vset.pattern.permute.xlu0 0
      %3244 = vperm.xlu0 %3243, %v3106
      %v3245 = vpop.permute.xlu0 %3244
      %3248 = vset.pattern.permute.xlu0 0
      %3249 = vperm.xlu0 %3248, %v3107
      %v3250 = vpop.permute.xlu0 %3249
      %3253 = vset.pattern.permute.xlu0 0
      %3254 = vperm.xlu0 %3253, %v3108
      %v3255 = vpop.permute.xlu0 %3254
      %3258 = vset.pattern.permute.xlu0 0
      %3259 = vperm.xlu0 %3258, %v3109
      %v3260 = vpop.permute.xlu0 %3259
      %3263 = vset.pattern.permute.xlu0 0
      %3264 = vperm.xlu0 %3263, %v3110
      %v3265 = vpop.permute.xlu0 %3264
      %3268 = vset.pattern.permute.xlu0 0
      %3269 = vperm.xlu0 %3268, %v3111
      %v3270 = vpop.permute.xlu0 %3269
      %v3272 = vmul.f32 %v3115, %v495
      %v3273 = vmul.f32 %v3120, %v495
      %v3274 = vmul.f32 %v3125, %v495
      %v3275 = vmul.f32 %v3130, %v495
      %v3276 = vmul.f32 %v3135, %v495
      %v3277 = vmul.f32 %v3140, %v495
      %v3278 = vmul.f32 %v3145, %v495
      %v3279 = vmul.f32 %v3150, %v495
      %v3280 = vmul.f32 %v3155, %v495
      %v3281 = vmul.f32 %v3160, %v495
      %v3282 = vmul.f32 %v3165, %v495
      %v3283 = vmul.f32 %v3170, %v495
      %v3284 = vmul.f32 %v3175, %v495
      %v3285 = vmul.f32 %v3180, %v495
      %v3286 = vmul.f32 %v3185, %v495
      %v3287 = vmul.f32 %v3190, %v495
      %v3288 = vmul.f32 %v3195, %v495
      %v3289 = vmul.f32 %v3200, %v495
      %v3290 = vmul.f32 %v3205, %v495
      %v3291 = vmul.f32 %v3210, %v495
      %v3292 = vmul.f32 %v3215, %v495
      %v3293 = vmul.f32 %v3220, %v495
      %v3294 = vmul.f32 %v3225, %v495
      %v3295 = vmul.f32 %v3230, %v495
      %v3296 = vmul.f32 %v3235, %v495
      %v3297 = vmul.f32 %v3240, %v495
      %v3298 = vmul.f32 %v3245, %v495
      %v3299 = vmul.f32 %v3250, %v495
      %v3300 = vmul.f32 %v3255, %v495
      %v3301 = vmul.f32 %v3260, %v495
      %v3302 = vmul.f32 %v3265, %v495
      %v3303 = vmul.f32 %v3270, %v495
      %v3304 = vadd.f32 %v529, %v3272
      %v3305 = vadd.f32 %v529, %v3273
      %v3306 = vadd.f32 %v529, %v3274
      %v3307 = vadd.f32 %v529, %v3275
      %v3308 = vadd.f32 %v529, %v3276
      %v3309 = vadd.f32 %v529, %v3277
      %v3310 = vadd.f32 %v529, %v3278
      %v3311 = vadd.f32 %v529, %v3279
      %v3312 = vadd.f32 %v529, %v3280
      %v3313 = vadd.f32 %v529, %v3281
      %v3314 = vadd.f32 %v529, %v3282
      %v3315 = vadd.f32 %v529, %v3283
      %v3316 = vadd.f32 %v529, %v3284
      %v3317 = vadd.f32 %v529, %v3285
      %v3318 = vadd.f32 %v529, %v3286
      %v3319 = vadd.f32 %v529, %v3287
      %v3320 = vadd.f32 %v529, %v3288
      %v3321 = vadd.f32 %v529, %v3289
      %v3322 = vadd.f32 %v529, %v3290
      %v3323 = vadd.f32 %v529, %v3291
      %v3324 = vadd.f32 %v529, %v3292
      %v3325 = vadd.f32 %v529, %v3293
      %v3326 = vadd.f32 %v529, %v3294
      %v3327 = vadd.f32 %v529, %v3295
      %v3328 = vadd.f32 %v529, %v3296
      %v3329 = vadd.f32 %v529, %v3297
      %v3330 = vadd.f32 %v529, %v3298
      %v3331 = vadd.f32 %v529, %v3299
      %v3332 = vadd.f32 %v529, %v3300
      %v3333 = vadd.f32 %v529, %v3301
      %v3334 = vadd.f32 %v529, %v3302
      %v3335 = vadd.f32 %v529, %v3303
      %3336 = vset.pattern.permute.xlu0 1
      %3337 = vperm.xlu0 %3336, %v3080
      %v3338 = vpop.permute.xlu0 %3337
      %3340 = vset.pattern.permute.xlu0 1
      %3341 = vperm.xlu0 %3340, %v3081
      %v3342 = vpop.permute.xlu0 %3341
      %3344 = vset.pattern.permute.xlu0 1
      %3345 = vperm.xlu0 %3344, %v3082
      %v3346 = vpop.permute.xlu0 %3345
      %3348 = vset.pattern.permute.xlu0 1
      %3349 = vperm.xlu0 %3348, %v3083
      %v3350 = vpop.permute.xlu0 %3349
      %3352 = vset.pattern.permute.xlu0 1
      %3353 = vperm.xlu0 %3352, %v3084
      %v3354 = vpop.permute.xlu0 %3353
      %3356 = vset.pattern.permute.xlu0 1
      %3357 = vperm.xlu0 %3356, %v3085
      %v3358 = vpop.permute.xlu0 %3357
      %3360 = vset.pattern.permute.xlu0 1
      %3361 = vperm.xlu0 %3360, %v3086
      %v3362 = vpop.permute.xlu0 %3361
      %3364 = vset.pattern.permute.xlu0 1
      %3365 = vperm.xlu0 %3364, %v3087
      %v3366 = vpop.permute.xlu0 %3365
      %3368 = vset.pattern.permute.xlu0 1
      %3369 = vperm.xlu0 %3368, %v3088
      %v3370 = vpop.permute.xlu0 %3369
      %3372 = vset.pattern.permute.xlu0 1
      %3373 = vperm.xlu0 %3372, %v3089
      %v3374 = vpop.permute.xlu0 %3373
      %3376 = vset.pattern.permute.xlu0 1
      %3377 = vperm.xlu0 %3376, %v3090
      %v3378 = vpop.permute.xlu0 %3377
      %3380 = vset.pattern.permute.xlu0 1
      %3381 = vperm.xlu0 %3380, %v3091
      %v3382 = vpop.permute.xlu0 %3381
      %3384 = vset.pattern.permute.xlu0 1
      %3385 = vperm.xlu0 %3384, %v3092
      %v3386 = vpop.permute.xlu0 %3385
      %3388 = vset.pattern.permute.xlu0 1
      %3389 = vperm.xlu0 %3388, %v3093
      %v3390 = vpop.permute.xlu0 %3389
      %3392 = vset.pattern.permute.xlu0 1
      %3393 = vperm.xlu0 %3392, %v3094
      %v3394 = vpop.permute.xlu0 %3393
      %3396 = vset.pattern.permute.xlu0 1
      %3397 = vperm.xlu0 %3396, %v3095
      %v3398 = vpop.permute.xlu0 %3397
      %3400 = vset.pattern.permute.xlu0 1
      %3401 = vperm.xlu0 %3400, %v3096
      %v3402 = vpop.permute.xlu0 %3401
      %3404 = vset.pattern.permute.xlu0 1
      %3405 = vperm.xlu0 %3404, %v3097
      %v3406 = vpop.permute.xlu0 %3405
      %3408 = vset.pattern.permute.xlu0 1
      %3409 = vperm.xlu0 %3408, %v3098
      %v3410 = vpop.permute.xlu0 %3409
      %3412 = vset.pattern.permute.xlu0 1
      %3413 = vperm.xlu0 %3412, %v3099
      %v3414 = vpop.permute.xlu0 %3413
      %3416 = vset.pattern.permute.xlu0 1
      %3417 = vperm.xlu0 %3416, %v3100
      %v3418 = vpop.permute.xlu0 %3417
      %3420 = vset.pattern.permute.xlu0 1
      %3421 = vperm.xlu0 %3420, %v3101
      %v3422 = vpop.permute.xlu0 %3421
      %3424 = vset.pattern.permute.xlu0 1
      %3425 = vperm.xlu0 %3424, %v3102
      %v3426 = vpop.permute.xlu0 %3425
      %3428 = vset.pattern.permute.xlu0 1
      %3429 = vperm.xlu0 %3428, %v3103
      %v3430 = vpop.permute.xlu0 %3429
      %3432 = vset.pattern.permute.xlu0 1
      %3433 = vperm.xlu0 %3432, %v3104
      %v3434 = vpop.permute.xlu0 %3433
      %3436 = vset.pattern.permute.xlu0 1
      %3437 = vperm.xlu0 %3436, %v3105
      %v3438 = vpop.permute.xlu0 %3437
      %3440 = vset.pattern.permute.xlu0 1
      %3441 = vperm.xlu0 %3440, %v3106
      %v3442 = vpop.permute.xlu0 %3441
      %3444 = vset.pattern.permute.xlu0 1
      %3445 = vperm.xlu0 %3444, %v3107
      %v3446 = vpop.permute.xlu0 %3445
      %3448 = vset.pattern.permute.xlu0 1
      %3449 = vperm.xlu0 %3448, %v3108
      %v3450 = vpop.permute.xlu0 %3449
      %3452 = vset.pattern.permute.xlu0 1
      %3453 = vperm.xlu0 %3452, %v3109
      %v3454 = vpop.permute.xlu0 %3453
      %3456 = vset.pattern.permute.xlu0 1
      %3457 = vperm.xlu0 %3456, %v3110
      %v3458 = vpop.permute.xlu0 %3457
      %3460 = vset.pattern.permute.xlu0 1
      %3461 = vperm.xlu0 %3460, %v3111
      %v3462 = vpop.permute.xlu0 %3461
      %v3464 = vmul.f32 %v3338, %v691
      %v3465 = vmul.f32 %v3342, %v691
      %v3466 = vmul.f32 %v3346, %v691
      %v3467 = vmul.f32 %v3350, %v691
      %v3468 = vmul.f32 %v3354, %v691
      %v3469 = vmul.f32 %v3358, %v691
      %v3470 = vmul.f32 %v3362, %v691
      %v3471 = vmul.f32 %v3366, %v691
      %v3472 = vmul.f32 %v3370, %v691
      %v3473 = vmul.f32 %v3374, %v691
      %v3474 = vmul.f32 %v3378, %v691
      %v3475 = vmul.f32 %v3382, %v691
      %v3476 = vmul.f32 %v3386, %v691
      %v3477 = vmul.f32 %v3390, %v691
      %v3478 = vmul.f32 %v3394, %v691
      %v3479 = vmul.f32 %v3398, %v691
      %v3480 = vmul.f32 %v3402, %v691
      %v3481 = vmul.f32 %v3406, %v691
      %v3482 = vmul.f32 %v3410, %v691
      %v3483 = vmul.f32 %v3414, %v691
      %v3484 = vmul.f32 %v3418, %v691
      %v3485 = vmul.f32 %v3422, %v691
      %v3486 = vmul.f32 %v3426, %v691
      %v3487 = vmul.f32 %v3430, %v691
      %v3488 = vmul.f32 %v3434, %v691
      %v3489 = vmul.f32 %v3438, %v691
      %v3490 = vmul.f32 %v3442, %v691
      %v3491 = vmul.f32 %v3446, %v691
      %v3492 = vmul.f32 %v3450, %v691
      %v3493 = vmul.f32 %v3454, %v691
      %v3494 = vmul.f32 %v3458, %v691
      %v3495 = vmul.f32 %v3462, %v691
      %v3496 = vadd.f32 %v3304, %v3464
      %v3497 = vadd.f32 %v3305, %v3465
      %v3498 = vadd.f32 %v3306, %v3466
      %v3499 = vadd.f32 %v3307, %v3467
      %v3500 = vadd.f32 %v3308, %v3468
      %v3501 = vadd.f32 %v3309, %v3469
      %v3502 = vadd.f32 %v3310, %v3470
      %v3503 = vadd.f32 %v3311, %v3471
      %v3504 = vadd.f32 %v3312, %v3472
      %v3505 = vadd.f32 %v3313, %v3473
      %v3506 = vadd.f32 %v3314, %v3474
      %v3507 = vadd.f32 %v3315, %v3475
      %v3508 = vadd.f32 %v3316, %v3476
      %v3509 = vadd.f32 %v3317, %v3477
      %v3510 = vadd.f32 %v3318, %v3478
      %v3511 = vadd.f32 %v3319, %v3479
      %v3512 = vadd.f32 %v3320, %v3480
      %v3513 = vadd.f32 %v3321, %v3481
      %v3514 = vadd.f32 %v3322, %v3482
      %v3515 = vadd.f32 %v3323, %v3483
      %v3516 = vadd.f32 %v3324, %v3484
      %v3517 = vadd.f32 %v3325, %v3485
      %v3518 = vadd.f32 %v3326, %v3486
      %v3519 = vadd.f32 %v3327, %v3487
      %v3520 = vadd.f32 %v3328, %v3488
      %v3521 = vadd.f32 %v3329, %v3489
      %v3522 = vadd.f32 %v3330, %v3490
      %v3523 = vadd.f32 %v3331, %v3491
      %v3524 = vadd.f32 %v3332, %v3492
      %v3525 = vadd.f32 %v3333, %v3493
      %v3526 = vadd.f32 %v3334, %v3494
      %v3527 = vadd.f32 %v3335, %v3495
      %3528 = vset.pattern.permute.xlu0 2
      %3529 = vperm.xlu0 %3528, %v3080
      %v3530 = vpop.permute.xlu0 %3529
      %3532 = vset.pattern.permute.xlu0 2
      %3533 = vperm.xlu0 %3532, %v3081
      %v3534 = vpop.permute.xlu0 %3533
      %3536 = vset.pattern.permute.xlu0 2
      %3537 = vperm.xlu0 %3536, %v3082
      %v3538 = vpop.permute.xlu0 %3537
      %3540 = vset.pattern.permute.xlu0 2
      %3541 = vperm.xlu0 %3540, %v3083
      %v3542 = vpop.permute.xlu0 %3541
      %3544 = vset.pattern.permute.xlu0 2
      %3545 = vperm.xlu0 %3544, %v3084
      %v3546 = vpop.permute.xlu0 %3545
      %3548 = vset.pattern.permute.xlu0 2
      %3549 = vperm.xlu0 %3548, %v3085
      %v3550 = vpop.permute.xlu0 %3549
      %3552 = vset.pattern.permute.xlu0 2
      %3553 = vperm.xlu0 %3552, %v3086
      %v3554 = vpop.permute.xlu0 %3553
      %3556 = vset.pattern.permute.xlu0 2
      %3557 = vperm.xlu0 %3556, %v3087
      %v3558 = vpop.permute.xlu0 %3557
      %3560 = vset.pattern.permute.xlu0 2
      %3561 = vperm.xlu0 %3560, %v3088
      %v3562 = vpop.permute.xlu0 %3561
      %3564 = vset.pattern.permute.xlu0 2
      %3565 = vperm.xlu0 %3564, %v3089
      %v3566 = vpop.permute.xlu0 %3565
      %3568 = vset.pattern.permute.xlu0 2
      %3569 = vperm.xlu0 %3568, %v3090
      %v3570 = vpop.permute.xlu0 %3569
      %3572 = vset.pattern.permute.xlu0 2
      %3573 = vperm.xlu0 %3572, %v3091
      %v3574 = vpop.permute.xlu0 %3573
      %3576 = vset.pattern.permute.xlu0 2
      %3577 = vperm.xlu0 %3576, %v3092
      %v3578 = vpop.permute.xlu0 %3577
      %3580 = vset.pattern.permute.xlu0 2
      %3581 = vperm.xlu0 %3580, %v3093
      %v3582 = vpop.permute.xlu0 %3581
      %3584 = vset.pattern.permute.xlu0 2
      %3585 = vperm.xlu0 %3584, %v3094
      %v3586 = vpop.permute.xlu0 %3585
      %3588 = vset.pattern.permute.xlu0 2
      %3589 = vperm.xlu0 %3588, %v3095
      %v3590 = vpop.permute.xlu0 %3589
      %3592 = vset.pattern.permute.xlu0 2
      %3593 = vperm.xlu0 %3592, %v3096
      %v3594 = vpop.permute.xlu0 %3593
      %3596 = vset.pattern.permute.xlu0 2
      %3597 = vperm.xlu0 %3596, %v3097
      %v3598 = vpop.permute.xlu0 %3597
      %3600 = vset.pattern.permute.xlu0 2
      %3601 = vperm.xlu0 %3600, %v3098
      %v3602 = vpop.permute.xlu0 %3601
      %3604 = vset.pattern.permute.xlu0 2
      %3605 = vperm.xlu0 %3604, %v3099
      %v3606 = vpop.permute.xlu0 %3605
      %3608 = vset.pattern.permute.xlu0 2
      %3609 = vperm.xlu0 %3608, %v3100
      %v3610 = vpop.permute.xlu0 %3609
      %3612 = vset.pattern.permute.xlu0 2
      %3613 = vperm.xlu0 %3612, %v3101
      %v3614 = vpop.permute.xlu0 %3613
      %3616 = vset.pattern.permute.xlu0 2
      %3617 = vperm.xlu0 %3616, %v3102
      %v3618 = vpop.permute.xlu0 %3617
      %3620 = vset.pattern.permute.xlu0 2
      %3621 = vperm.xlu0 %3620, %v3103
      %v3622 = vpop.permute.xlu0 %3621
      %3624 = vset.pattern.permute.xlu0 2
      %3625 = vperm.xlu0 %3624, %v3104
      %v3626 = vpop.permute.xlu0 %3625
      %3628 = vset.pattern.permute.xlu0 2
      %3629 = vperm.xlu0 %3628, %v3105
      %v3630 = vpop.permute.xlu0 %3629
      %3632 = vset.pattern.permute.xlu0 2
      %3633 = vperm.xlu0 %3632, %v3106
      %v3634 = vpop.permute.xlu0 %3633
      %3636 = vset.pattern.permute.xlu0 2
      %3637 = vperm.xlu0 %3636, %v3107
      %v3638 = vpop.permute.xlu0 %3637
      %3640 = vset.pattern.permute.xlu0 2
      %3641 = vperm.xlu0 %3640, %v3108
      %v3642 = vpop.permute.xlu0 %3641
      %3644 = vset.pattern.permute.xlu0 2
      %3645 = vperm.xlu0 %3644, %v3109
      %v3646 = vpop.permute.xlu0 %3645
      %3648 = vset.pattern.permute.xlu0 2
      %3649 = vperm.xlu0 %3648, %v3110
      %v3650 = vpop.permute.xlu0 %3649
      %3652 = vset.pattern.permute.xlu0 2
      %3653 = vperm.xlu0 %3652, %v3111
      %v3654 = vpop.permute.xlu0 %3653
      %v3656 = vmul.f32 %v3530, %v884
      %v3657 = vmul.f32 %v3534, %v884
      %v3658 = vmul.f32 %v3538, %v884
      %v3659 = vmul.f32 %v3542, %v884
      %v3660 = vmul.f32 %v3546, %v884
      %v3661 = vmul.f32 %v3550, %v884
      %v3662 = vmul.f32 %v3554, %v884
      %v3663 = vmul.f32 %v3558, %v884
      %v3664 = vmul.f32 %v3562, %v884
      %v3665 = vmul.f32 %v3566, %v884
      %v3666 = vmul.f32 %v3570, %v884
      %v3667 = vmul.f32 %v3574, %v884
      %v3668 = vmul.f32 %v3578, %v884
      %v3669 = vmul.f32 %v3582, %v884
      %v3670 = vmul.f32 %v3586, %v884
      %v3671 = vmul.f32 %v3590, %v884
      %v3672 = vmul.f32 %v3594, %v884
      %v3673 = vmul.f32 %v3598, %v884
      %v3674 = vmul.f32 %v3602, %v884
      %v3675 = vmul.f32 %v3606, %v884
      %v3676 = vmul.f32 %v3610, %v884
      %v3677 = vmul.f32 %v3614, %v884
      %v3678 = vmul.f32 %v3618, %v884
      %v3679 = vmul.f32 %v3622, %v884
      %v3680 = vmul.f32 %v3626, %v884
      %v3681 = vmul.f32 %v3630, %v884
      %v3682 = vmul.f32 %v3634, %v884
      %v3683 = vmul.f32 %v3638, %v884
      %v3684 = vmul.f32 %v3642, %v884
      %v3685 = vmul.f32 %v3646, %v884
      %v3686 = vmul.f32 %v3650, %v884
      %v3687 = vmul.f32 %v3654, %v884
      %v3688 = vadd.f32 %v3496, %v3656
      %v3689 = vadd.f32 %v3497, %v3657
      %v3690 = vadd.f32 %v3498, %v3658
      %v3691 = vadd.f32 %v3499, %v3659
      %v3692 = vadd.f32 %v3500, %v3660
      %v3693 = vadd.f32 %v3501, %v3661
      %v3694 = vadd.f32 %v3502, %v3662
      %v3695 = vadd.f32 %v3503, %v3663
      %v3696 = vadd.f32 %v3504, %v3664
      %v3697 = vadd.f32 %v3505, %v3665
      %v3698 = vadd.f32 %v3506, %v3666
      %v3699 = vadd.f32 %v3507, %v3667
      %v3700 = vadd.f32 %v3508, %v3668
      %v3701 = vadd.f32 %v3509, %v3669
      %v3702 = vadd.f32 %v3510, %v3670
      %v3703 = vadd.f32 %v3511, %v3671
      %v3704 = vadd.f32 %v3512, %v3672
      %v3705 = vadd.f32 %v3513, %v3673
      %v3706 = vadd.f32 %v3514, %v3674
      %v3707 = vadd.f32 %v3515, %v3675
      %v3708 = vadd.f32 %v3516, %v3676
      %v3709 = vadd.f32 %v3517, %v3677
      %v3710 = vadd.f32 %v3518, %v3678
      %v3711 = vadd.f32 %v3519, %v3679
      %v3712 = vadd.f32 %v3520, %v3680
      %v3713 = vadd.f32 %v3521, %v3681
      %v3714 = vadd.f32 %v3522, %v3682
      %v3715 = vadd.f32 %v3523, %v3683
      %v3716 = vadd.f32 %v3524, %v3684
      %v3717 = vadd.f32 %v3525, %v3685
      %v3718 = vadd.f32 %v3526, %v3686
      %v3719 = vadd.f32 %v3527, %v3687
      %v3720 = vmax.f32 %v3688, 0.0
      %v3721 = vmax.f32 %v3689, 0.0
      %v3722 = vmax.f32 %v3690, 0.0
      %v3723 = vmax.f32 %v3691, 0.0
      %v3724 = vmax.f32 %v3692, 0.0
      %v3725 = vmax.f32 %v3693, 0.0
      %v3726 = vmax.f32 %v3694, 0.0
      %v3727 = vmax.f32 %v3695, 0.0
      %v3728 = vmax.f32 %v3696, 0.0
      %v3729 = vmax.f32 %v3697, 0.0
      %v3730 = vmax.f32 %v3698, 0.0
      %v3731 = vmax.f32 %v3699, 0.0
      %v3732 = vmax.f32 %v3700, 0.0
      %v3733 = vmax.f32 %v3701, 0.0
      %v3734 = vmax.f32 %v3702, 0.0
      %v3735 = vmax.f32 %v3703, 0.0
      %v3736 = vmax.f32 %v3704, 0.0
      %v3737 = vmax.f32 %v3705, 0.0
      %v3738 = vmax.f32 %v3706, 0.0
      %v3739 = vmax.f32 %v3707, 0.0
      %v3740 = vmax.f32 %v3708, 0.0
      %v3741 = vmax.f32 %v3709, 0.0
      %v3742 = vmax.f32 %v3710, 0.0
      %v3743 = vmax.f32 %v3711, 0.0
      %v3744 = vmax.f32 %v3712, 0.0
      %v3745 = vmax.f32 %v3713, 0.0
      %v3746 = vmax.f32 %v3714, 0.0
      %v3747 = vmax.f32 %v3715, 0.0
      %v3748 = vmax.f32 %v3716, 0.0
      %v3749 = vmax.f32 %v3717, 0.0
      %v3750 = vmax.f32 %v3718, 0.0
      %v3751 = vmax.f32 %v3719, 0.0
      %v3752 = vpack.c.bf16 %v3721, %v3720
      %v3753 = vpack.c.bf16 %v3723, %v3722
      %v3754 = vpack.c.bf16 %v3725, %v3724
      %v3755 = vpack.c.bf16 %v3727, %v3726
      %v3756 = vpack.c.bf16 %v3729, %v3728
      %v3757 = vpack.c.bf16 %v3731, %v3730
      %v3758 = vpack.c.bf16 %v3733, %v3732
      %v3759 = vpack.c.bf16 %v3735, %v3734
      %v3760 = vpack.c.bf16 %v3737, %v3736
      %v3761 = vpack.c.bf16 %v3739, %v3738
      %v3762 = vpack.c.bf16 %v3741, %v3740
      %v3763 = vpack.c.bf16 %v3743, %v3742
      %v3764 = vpack.c.bf16 %v3745, %v3744
      %v3765 = vpack.c.bf16 %v3747, %v3746
      %v3766 = vpack.c.bf16 %v3749, %v3748
      %v3767 = vpack.c.bf16 %v3751, %v3750
      %3768 = vmatpush.bf16.msra.mxu0 %v1039
      %3769 = vmatpush.bf16.msra.mxu0 %v1038
      %3770 = vmatpush.bf16.msra.mxu0 %v1037
      %3771 = vmatpush.bf16.msra.mxu0 %v1036
      %3772 = vmatpush.bf16.msra.mxu0 %v1035
      %3773 = vmatpush.bf16.msra.mxu0 %v1034
      %3774 = vmatpush.bf16.msra.mxu0 %v1033
      %3775 = vmatpush.bf16.msra.mxu0 %v1032
      %3776 = vmatmul.bf16.gmra.mxu0 %v3752
      %v3777 = vpop.f32.mrf.mxu0
      %v3778 = vadd.f32 %v998, %v3777
      %v3779 = vpop.f32.mrf.mxu0
      %v3780 = vadd.f32 %v998, %v3779
      %3781 = vmatmul.bf16.gmra.mxu0 %v3753
      %v3782 = vpop.f32.mrf.mxu0
      %v3783 = vadd.f32 %v998, %v3782
      %v3784 = vpop.f32.mrf.mxu0
      %v3785 = vadd.f32 %v998, %v3784
      %3786 = vmatmul.bf16.gmra.mxu0 %v3754
      %v3787 = vpop.f32.mrf.mxu0
      %v3788 = vadd.f32 %v998, %v3787
      %v3789 = vpop.f32.mrf.mxu0
      %v3790 = vadd.f32 %v998, %v3789
      %3791 = vmatmul.bf16.gmra.mxu0 %v3755
      %v3792 = vpop.f32.mrf.mxu0
      %v3793 = vadd.f32 %v998, %v3792
      %v3794 = vpop.f32.mrf.mxu0
      %v3795 = vadd.f32 %v998, %v3794
      %3796 = vmatmul.bf16.gmra.mxu0 %v3756
      %v3797 = vpop.f32.mrf.mxu0
      %v3798 = vadd.f32 %v998, %v3797
      %v3799 = vpop.f32.mrf.mxu0
      %v3800 = vadd.f32 %v998, %v3799
      %3801 = vmatmul.bf16.gmra.mxu0 %v3757
      %v3802 = vpop.f32.mrf.mxu0
      %v3803 = vadd.f32 %v998, %v3802
      %v3804 = vpop.f32.mrf.mxu0
      %v3805 = vadd.f32 %v998, %v3804
      %3806 = vmatmul.bf16.gmra.mxu0 %v3758
      %v3807 = vpop.f32.mrf.mxu0
      %v3808 = vadd.f32 %v998, %v3807
      %v3809 = vpop.f32.mrf.mxu0
      %v3810 = vadd.f32 %v998, %v3809
      %3811 = vmatmul.bf16.gmra.mxu0 %v3759
      %v3812 = vpop.f32.mrf.mxu0
      %v3813 = vadd.f32 %v998, %v3812
      %v3814 = vpop.f32.mrf.mxu0
      %v3815 = vadd.f32 %v998, %v3814
      %3816 = vmatmul.bf16.gmra.mxu0 %v3760
      %v3817 = vpop.f32.mrf.mxu0
      %v3818 = vadd.f32 %v998, %v3817
      %v3819 = vpop.f32.mrf.mxu0
      %v3820 = vadd.f32 %v998, %v3819
      %3821 = vmatmul.bf16.gmra.mxu0 %v3761
      %v3822 = vpop.f32.mrf.mxu0
      %v3823 = vadd.f32 %v998, %v3822
      %v3824 = vpop.f32.mrf.mxu0
      %v3825 = vadd.f32 %v998, %v3824
      %3826 = vmatmul.bf16.gmra.mxu0 %v3762
      %v3827 = vpop.f32.mrf.mxu0
      %v3828 = vadd.f32 %v998, %v3827
      %v3829 = vpop.f32.mrf.mxu0
      %v3830 = vadd.f32 %v998, %v3829
      %3831 = vmatmul.bf16.gmra.mxu0 %v3763
      %v3832 = vpop.f32.mrf.mxu0
      %v3833 = vadd.f32 %v998, %v3832
      %v3834 = vpop.f32.mrf.mxu0
      %v3835 = vadd.f32 %v998, %v3834
      %3836 = vmatmul.bf16.gmra.mxu0 %v3764
      %v3837 = vpop.f32.mrf.mxu0
      %v3838 = vadd.f32 %v998, %v3837
      %v3839 = vpop.f32.mrf.mxu0
      %v3840 = vadd.f32 %v998, %v3839
      %3841 = vmatmul.bf16.gmra.mxu0 %v3765
      %v3842 = vpop.f32.mrf.mxu0
      %v3843 = vadd.f32 %v998, %v3842
      %v3844 = vpop.f32.mrf.mxu0
      %v3845 = vadd.f32 %v998, %v3844
      %3846 = vmatmul.bf16.gmra.mxu0 %v3766
      %v3847 = vpop.f32.mrf.mxu0
      %v3848 = vadd.f32 %v998, %v3847
      %v3849 = vpop.f32.mrf.mxu0
      %v3850 = vadd.f32 %v998, %v3849
      %3851 = vmatmul.bf16.gmra.mxu0 %v3767
      %v3852 = vpop.f32.mrf.mxu0
      %v3853 = vadd.f32 %v998, %v3852
      %v3854 = vpop.f32.mrf.mxu0
      %v3855 = vadd.f32 %v998, %v3854
      %3856 = vdwg.mxu0
      %v3857 = vmax.f32 %v3778, 0.0
      %v3858 = vmax.f32 %v3780, 0.0
      %v3859 = vmax.f32 %v3783, 0.0
      %v3860 = vmax.f32 %v3785, 0.0
      %v3861 = vmax.f32 %v3788, 0.0
      %v3862 = vmax.f32 %v3790, 0.0
      %v3863 = vmax.f32 %v3793, 0.0
      %v3864 = vmax.f32 %v3795, 0.0
      %v3865 = vmax.f32 %v3798, 0.0
      %v3866 = vmax.f32 %v3800, 0.0
      %v3867 = vmax.f32 %v3803, 0.0
      %v3868 = vmax.f32 %v3805, 0.0
      %v3869 = vmax.f32 %v3808, 0.0
      %v3870 = vmax.f32 %v3810, 0.0
      %v3871 = vmax.f32 %v3813, 0.0
      %v3872 = vmax.f32 %v3815, 0.0
      %v3873 = vmax.f32 %v3818, 0.0
      %v3874 = vmax.f32 %v3820, 0.0
      %v3875 = vmax.f32 %v3823, 0.0
      %v3876 = vmax.f32 %v3825, 0.0
      %v3877 = vmax.f32 %v3828, 0.0
      %v3878 = vmax.f32 %v3830, 0.0
      %v3879 = vmax.f32 %v3833, 0.0
      %v3880 = vmax.f32 %v3835, 0.0
      %v3881 = vmax.f32 %v3838, 0.0
      %v3882 = vmax.f32 %v3840, 0.0
      %v3883 = vmax.f32 %v3843, 0.0
      %v3884 = vmax.f32 %v3845, 0.0
      %v3885 = vmax.f32 %v3848, 0.0
      %v3886 = vmax.f32 %v3850, 0.0
      %v3887 = vmax.f32 %v3853, 0.0
      %v3888 = vmax.f32 %v3855, 0.0
      %v3889 = vmul.f32 %v3857, %v1169
      %v3890 = vmul.f32 %v3858, %v1169
      %v3891 = vmul.f32 %v3859, %v1169
      %v3892 = vmul.f32 %v3860, %v1169
      %v3893 = vmul.f32 %v3861, %v1169
      %v3894 = vmul.f32 %v3862, %v1169
      %v3895 = vmul.f32 %v3863, %v1169
      %v3896 = vmul.f32 %v3864, %v1169
      %v3897 = vmul.f32 %v3865, %v1169
      %v3898 = vmul.f32 %v3866, %v1169
      %v3899 = vmul.f32 %v3867, %v1169
      %v3900 = vmul.f32 %v3868, %v1169
      %v3901 = vmul.f32 %v3869, %v1169
      %v3902 = vmul.f32 %v3870, %v1169
      %v3903 = vmul.f32 %v3871, %v1169
      %v3904 = vmul.f32 %v3872, %v1169
      %v3905 = vmul.f32 %v3873, %v1169
      %v3906 = vmul.f32 %v3874, %v1169
      %v3907 = vmul.f32 %v3875, %v1169
      %v3908 = vmul.f32 %v3876, %v1169
      %v3909 = vmul.f32 %v3877, %v1169
      %v3910 = vmul.f32 %v3878, %v1169
      %v3911 = vmul.f32 %v3879, %v1169
      %v3912 = vmul.f32 %v3880, %v1169
      %v3913 = vmul.f32 %v3881, %v1169
      %v3914 = vmul.f32 %v3882, %v1169
      %v3915 = vmul.f32 %v3883, %v1169
      %v3916 = vmul.f32 %v3884, %v1169
      %v3917 = vmul.f32 %v3885, %v1169
      %v3918 = vmul.f32 %v3886, %v1169
      %v3919 = vmul.f32 %v3887, %v1169
      %v3920 = vmul.f32 %v3888, %v1169
      %3921 = vadd.xlane.f32.xlu0 %v3889
      %v3922 = vpop.xlane.xlu0 %3921
      %3923 = vadd.xlane.f32.xlu0 %v3890
      %v3924 = vpop.xlane.xlu0 %3923
      %3925 = vadd.xlane.f32.xlu0 %v3891
      %v3926 = vpop.xlane.xlu0 %3925
      %3927 = vadd.xlane.f32.xlu0 %v3892
      %v3928 = vpop.xlane.xlu0 %3927
      %3929 = vadd.xlane.f32.xlu0 %v3893
      %v3930 = vpop.xlane.xlu0 %3929
      %3931 = vadd.xlane.f32.xlu0 %v3894
      %v3932 = vpop.xlane.xlu0 %3931
      %3933 = vadd.xlane.f32.xlu0 %v3895
      %v3934 = vpop.xlane.xlu0 %3933
      %3935 = vadd.xlane.f32.xlu0 %v3896
      %v3936 = vpop.xlane.xlu0 %3935
      %3937 = vadd.xlane.f32.xlu0 %v3897
      %v3938 = vpop.xlane.xlu0 %3937
      %3939 = vadd.xlane.f32.xlu0 %v3898
      %v3940 = vpop.xlane.xlu0 %3939
      %3941 = vadd.xlane.f32.xlu0 %v3899
      %v3942 = vpop.xlane.xlu0 %3941
      %3943 = vadd.xlane.f32.xlu0 %v3900
      %v3944 = vpop.xlane.xlu0 %3943
      %3945 = vadd.xlane.f32.xlu0 %v3901
      %v3946 = vpop.xlane.xlu0 %3945
      %3947 = vadd.xlane.f32.xlu0 %v3902
      %v3948 = vpop.xlane.xlu0 %3947
      %3949 = vadd.xlane.f32.xlu0 %v3903
      %v3950 = vpop.xlane.xlu0 %3949
      %3951 = vadd.xlane.f32.xlu0 %v3904
      %v3952 = vpop.xlane.xlu0 %3951
      %3953 = vadd.xlane.f32.xlu0 %v3905
      %v3954 = vpop.xlane.xlu0 %3953
      %3955 = vadd.xlane.f32.xlu0 %v3906
      %v3956 = vpop.xlane.xlu0 %3955
      %3957 = vadd.xlane.f32.xlu0 %v3907
      %v3958 = vpop.xlane.xlu0 %3957
      %3959 = vadd.xlane.f32.xlu0 %v3908
      %v3960 = vpop.xlane.xlu0 %3959
      %3961 = vadd.xlane.f32.xlu0 %v3909
      %v3962 = vpop.xlane.xlu0 %3961
      %3963 = vadd.xlane.f32.xlu0 %v3910
      %v3964 = vpop.xlane.xlu0 %3963
      %3965 = vadd.xlane.f32.xlu0 %v3911
      %v3966 = vpop.xlane.xlu0 %3965
      %3967 = vadd.xlane.f32.xlu0 %v3912
      %v3968 = vpop.xlane.xlu0 %3967
      %3969 = vadd.xlane.f32.xlu0 %v3913
      %v3970 = vpop.xlane.xlu0 %3969
      %3971 = vadd.xlane.f32.xlu0 %v3914
      %v3972 = vpop.xlane.xlu0 %3971
      %3973 = vadd.xlane.f32.xlu0 %v3915
      %v3974 = vpop.xlane.xlu0 %3973
      %3975 = vadd.xlane.f32.xlu0 %v3916
      %v3976 = vpop.xlane.xlu0 %3975
      %3977 = vadd.xlane.f32.xlu0 %v3917
      %v3978 = vpop.xlane.xlu0 %3977
      %3979 = vadd.xlane.f32.xlu0 %v3918
      %v3980 = vpop.xlane.xlu0 %3979
      %3981 = vadd.xlane.f32.xlu0 %v3919
      %v3982 = vpop.xlane.xlu0 %3981
      %3983 = vadd.xlane.f32.xlu0 %v3920
      %v3984 = vpop.xlane.xlu0 %3983
      %v3985 = vmul.f32 %v3857, %v1266
      %v3986 = vmul.f32 %v3858, %v1266
      %v3987 = vmul.f32 %v3859, %v1266
      %v3988 = vmul.f32 %v3860, %v1266
      %v3989 = vmul.f32 %v3861, %v1266
      %v3990 = vmul.f32 %v3862, %v1266
      %v3991 = vmul.f32 %v3863, %v1266
      %v3992 = vmul.f32 %v3864, %v1266
      %v3993 = vmul.f32 %v3865, %v1266
      %v3994 = vmul.f32 %v3866, %v1266
      %v3995 = vmul.f32 %v3867, %v1266
      %v3996 = vmul.f32 %v3868, %v1266
      %v3997 = vmul.f32 %v3869, %v1266
      %v3998 = vmul.f32 %v3870, %v1266
      %v3999 = vmul.f32 %v3871, %v1266
      %v4000 = vmul.f32 %v3872, %v1266
      %v4001 = vmul.f32 %v3873, %v1266
      %v4002 = vmul.f32 %v3874, %v1266
      %v4003 = vmul.f32 %v3875, %v1266
      %v4004 = vmul.f32 %v3876, %v1266
      %v4005 = vmul.f32 %v3877, %v1266
      %v4006 = vmul.f32 %v3878, %v1266
      %v4007 = vmul.f32 %v3879, %v1266
      %v4008 = vmul.f32 %v3880, %v1266
      %v4009 = vmul.f32 %v3881, %v1266
      %v4010 = vmul.f32 %v3882, %v1266
      %v4011 = vmul.f32 %v3883, %v1266
      %v4012 = vmul.f32 %v3884, %v1266
      %v4013 = vmul.f32 %v3885, %v1266
      %v4014 = vmul.f32 %v3886, %v1266
      %v4015 = vmul.f32 %v3887, %v1266
      %v4016 = vmul.f32 %v3888, %v1266
      %4017 = vadd.xlane.f32.xlu0 %v3985
      %v4018 = vpop.xlane.xlu0 %4017
      %4019 = vadd.xlane.f32.xlu0 %v3986
      %v4020 = vpop.xlane.xlu0 %4019
      %4021 = vadd.xlane.f32.xlu0 %v3987
      %v4022 = vpop.xlane.xlu0 %4021
      %4023 = vadd.xlane.f32.xlu0 %v3988
      %v4024 = vpop.xlane.xlu0 %4023
      %4025 = vadd.xlane.f32.xlu0 %v3989
      %v4026 = vpop.xlane.xlu0 %4025
      %4027 = vadd.xlane.f32.xlu0 %v3990
      %v4028 = vpop.xlane.xlu0 %4027
      %4029 = vadd.xlane.f32.xlu0 %v3991
      %v4030 = vpop.xlane.xlu0 %4029
      %4031 = vadd.xlane.f32.xlu0 %v3992
      %v4032 = vpop.xlane.xlu0 %4031
      %4033 = vadd.xlane.f32.xlu0 %v3993
      %v4034 = vpop.xlane.xlu0 %4033
      %4035 = vadd.xlane.f32.xlu0 %v3994
      %v4036 = vpop.xlane.xlu0 %4035
      %4037 = vadd.xlane.f32.xlu0 %v3995
      %v4038 = vpop.xlane.xlu0 %4037
      %4039 = vadd.xlane.f32.xlu0 %v3996
      %v4040 = vpop.xlane.xlu0 %4039
      %4041 = vadd.xlane.f32.xlu0 %v3997
      %v4042 = vpop.xlane.xlu0 %4041
      %4043 = vadd.xlane.f32.xlu0 %v3998
      %v4044 = vpop.xlane.xlu0 %4043
      %4045 = vadd.xlane.f32.xlu0 %v3999
      %v4046 = vpop.xlane.xlu0 %4045
      %4047 = vadd.xlane.f32.xlu0 %v4000
      %v4048 = vpop.xlane.xlu0 %4047
      %4049 = vadd.xlane.f32.xlu0 %v4001
      %v4050 = vpop.xlane.xlu0 %4049
      %4051 = vadd.xlane.f32.xlu0 %v4002
      %v4052 = vpop.xlane.xlu0 %4051
      %4053 = vadd.xlane.f32.xlu0 %v4003
      %v4054 = vpop.xlane.xlu0 %4053
      %4055 = vadd.xlane.f32.xlu0 %v4004
      %v4056 = vpop.xlane.xlu0 %4055
      %4057 = vadd.xlane.f32.xlu0 %v4005
      %v4058 = vpop.xlane.xlu0 %4057
      %4059 = vadd.xlane.f32.xlu0 %v4006
      %v4060 = vpop.xlane.xlu0 %4059
      %4061 = vadd.xlane.f32.xlu0 %v4007
      %v4062 = vpop.xlane.xlu0 %4061
      %4063 = vadd.xlane.f32.xlu0 %v4008
      %v4064 = vpop.xlane.xlu0 %4063
      %4065 = vadd.xlane.f32.xlu0 %v4009
      %v4066 = vpop.xlane.xlu0 %4065
      %4067 = vadd.xlane.f32.xlu0 %v4010
      %v4068 = vpop.xlane.xlu0 %4067
      %4069 = vadd.xlane.f32.xlu0 %v4011
      %v4070 = vpop.xlane.xlu0 %4069
      %4071 = vadd.xlane.f32.xlu0 %v4012
      %v4072 = vpop.xlane.xlu0 %4071
      %4073 = vadd.xlane.f32.xlu0 %v4013
      %v4074 = vpop.xlane.xlu0 %4073
      %4075 = vadd.xlane.f32.xlu0 %v4014
      %v4076 = vpop.xlane.xlu0 %4075
      %4077 = vadd.xlane.f32.xlu0 %v4015
      %v4078 = vpop.xlane.xlu0 %4077
      %4079 = vadd.xlane.f32.xlu0 %v4016
      %v4080 = vpop.xlane.xlu0 %4079
      %v4081 = vmul.f32 %v3857, %v1363
      %v4082 = vmul.f32 %v3858, %v1363
      %v4083 = vmul.f32 %v3859, %v1363
      %v4084 = vmul.f32 %v3860, %v1363
      %v4085 = vmul.f32 %v3861, %v1363
      %v4086 = vmul.f32 %v3862, %v1363
      %v4087 = vmul.f32 %v3863, %v1363
      %v4088 = vmul.f32 %v3864, %v1363
      %v4089 = vmul.f32 %v3865, %v1363
      %v4090 = vmul.f32 %v3866, %v1363
      %v4091 = vmul.f32 %v3867, %v1363
      %v4092 = vmul.f32 %v3868, %v1363
      %v4093 = vmul.f32 %v3869, %v1363
      %v4094 = vmul.f32 %v3870, %v1363
      %v4095 = vmul.f32 %v3871, %v1363
      %v4096 = vmul.f32 %v3872, %v1363
      %v4097 = vmul.f32 %v3873, %v1363
      %v4098 = vmul.f32 %v3874, %v1363
      %v4099 = vmul.f32 %v3875, %v1363
      %v4100 = vmul.f32 %v3876, %v1363
      %v4101 = vmul.f32 %v3877, %v1363
      %v4102 = vmul.f32 %v3878, %v1363
      %v4103 = vmul.f32 %v3879, %v1363
      %v4104 = vmul.f32 %v3880, %v1363
      %v4105 = vmul.f32 %v3881, %v1363
      %v4106 = vmul.f32 %v3882, %v1363
      %v4107 = vmul.f32 %v3883, %v1363
      %v4108 = vmul.f32 %v3884, %v1363
      %v4109 = vmul.f32 %v3885, %v1363
      %v4110 = vmul.f32 %v3886, %v1363
      %v4111 = vmul.f32 %v3887, %v1363
      %v4112 = vmul.f32 %v3888, %v1363
      %4113 = vadd.xlane.f32.xlu0 %v4081
      %v4114 = vpop.xlane.xlu0 %4113
      %4115 = vadd.xlane.f32.xlu0 %v4082
      %v4116 = vpop.xlane.xlu0 %4115
      %4117 = vadd.xlane.f32.xlu0 %v4083
      %v4118 = vpop.xlane.xlu0 %4117
      %4119 = vadd.xlane.f32.xlu0 %v4084
      %v4120 = vpop.xlane.xlu0 %4119
      %4121 = vadd.xlane.f32.xlu0 %v4085
      %v4122 = vpop.xlane.xlu0 %4121
      %4123 = vadd.xlane.f32.xlu0 %v4086
      %v4124 = vpop.xlane.xlu0 %4123
      %4125 = vadd.xlane.f32.xlu0 %v4087
      %v4126 = vpop.xlane.xlu0 %4125
      %4127 = vadd.xlane.f32.xlu0 %v4088
      %v4128 = vpop.xlane.xlu0 %4127
      %4129 = vadd.xlane.f32.xlu0 %v4089
      %v4130 = vpop.xlane.xlu0 %4129
      %4131 = vadd.xlane.f32.xlu0 %v4090
      %v4132 = vpop.xlane.xlu0 %4131
      %4133 = vadd.xlane.f32.xlu0 %v4091
      %v4134 = vpop.xlane.xlu0 %4133
      %4135 = vadd.xlane.f32.xlu0 %v4092
      %v4136 = vpop.xlane.xlu0 %4135
      %4137 = vadd.xlane.f32.xlu0 %v4093
      %v4138 = vpop.xlane.xlu0 %4137
      %4139 = vadd.xlane.f32.xlu0 %v4094
      %v4140 = vpop.xlane.xlu0 %4139
      %4141 = vadd.xlane.f32.xlu0 %v4095
      %v4142 = vpop.xlane.xlu0 %4141
      %4143 = vadd.xlane.f32.xlu0 %v4096
      %v4144 = vpop.xlane.xlu0 %4143
      %4145 = vadd.xlane.f32.xlu0 %v4097
      %v4146 = vpop.xlane.xlu0 %4145
      %4147 = vadd.xlane.f32.xlu0 %v4098
      %v4148 = vpop.xlane.xlu0 %4147
      %4149 = vadd.xlane.f32.xlu0 %v4099
      %v4150 = vpop.xlane.xlu0 %4149
      %4151 = vadd.xlane.f32.xlu0 %v4100
      %v4152 = vpop.xlane.xlu0 %4151
      %4153 = vadd.xlane.f32.xlu0 %v4101
      %v4154 = vpop.xlane.xlu0 %4153
      %4155 = vadd.xlane.f32.xlu0 %v4102
      %v4156 = vpop.xlane.xlu0 %4155
      %4157 = vadd.xlane.f32.xlu0 %v4103
      %v4158 = vpop.xlane.xlu0 %4157
      %4159 = vadd.xlane.f32.xlu0 %v4104
      %v4160 = vpop.xlane.xlu0 %4159
      %4161 = vadd.xlane.f32.xlu0 %v4105
      %v4162 = vpop.xlane.xlu0 %4161
      %4163 = vadd.xlane.f32.xlu0 %v4106
      %v4164 = vpop.xlane.xlu0 %4163
      %4165 = vadd.xlane.f32.xlu0 %v4107
      %v4166 = vpop.xlane.xlu0 %4165
      %4167 = vadd.xlane.f32.xlu0 %v4108
      %v4168 = vpop.xlane.xlu0 %4167
      %4169 = vadd.xlane.f32.xlu0 %v4109
      %v4170 = vpop.xlane.xlu0 %4169
      %4171 = vadd.xlane.f32.xlu0 %v4110
      %v4172 = vpop.xlane.xlu0 %4171
      %4173 = vadd.xlane.f32.xlu0 %v4111
      %v4174 = vpop.xlane.xlu0 %4173
      %4175 = vadd.xlane.f32.xlu0 %v4112
      %v4176 = vpop.xlane.xlu0 %4175
      %v4177 = vmul.f32 %v3857, %v1460
      %v4178 = vmul.f32 %v3858, %v1460
      %v4179 = vmul.f32 %v3859, %v1460
      %v4180 = vmul.f32 %v3860, %v1460
      %v4181 = vmul.f32 %v3861, %v1460
      %v4182 = vmul.f32 %v3862, %v1460
      %v4183 = vmul.f32 %v3863, %v1460
      %v4184 = vmul.f32 %v3864, %v1460
      %v4185 = vmul.f32 %v3865, %v1460
      %v4186 = vmul.f32 %v3866, %v1460
      %v4187 = vmul.f32 %v3867, %v1460
      %v4188 = vmul.f32 %v3868, %v1460
      %v4189 = vmul.f32 %v3869, %v1460
      %v4190 = vmul.f32 %v3870, %v1460
      %v4191 = vmul.f32 %v3871, %v1460
      %v4192 = vmul.f32 %v3872, %v1460
      %v4193 = vmul.f32 %v3873, %v1460
      %v4194 = vmul.f32 %v3874, %v1460
      %v4195 = vmul.f32 %v3875, %v1460
      %v4196 = vmul.f32 %v3876, %v1460
      %v4197 = vmul.f32 %v3877, %v1460
      %v4198 = vmul.f32 %v3878, %v1460
      %v4199 = vmul.f32 %v3879, %v1460
      %v4200 = vmul.f32 %v3880, %v1460
      %v4201 = vmul.f32 %v3881, %v1460
      %v4202 = vmul.f32 %v3882, %v1460
      %v4203 = vmul.f32 %v3883, %v1460
      %v4204 = vmul.f32 %v3884, %v1460
      %v4205 = vmul.f32 %v3885, %v1460
      %v4206 = vmul.f32 %v3886, %v1460
      %v4207 = vmul.f32 %v3887, %v1460
      %v4208 = vmul.f32 %v3888, %v1460
      %4209 = vadd.xlane.f32.xlu0 %v4177
      %v4210 = vpop.xlane.xlu0 %4209
      %4211 = vadd.xlane.f32.xlu0 %v4178
      %v4212 = vpop.xlane.xlu0 %4211
      %4213 = vadd.xlane.f32.xlu0 %v4179
      %v4214 = vpop.xlane.xlu0 %4213
      %4215 = vadd.xlane.f32.xlu0 %v4180
      %v4216 = vpop.xlane.xlu0 %4215
      %4217 = vadd.xlane.f32.xlu0 %v4181
      %v4218 = vpop.xlane.xlu0 %4217
      %4219 = vadd.xlane.f32.xlu0 %v4182
      %v4220 = vpop.xlane.xlu0 %4219
      %4221 = vadd.xlane.f32.xlu0 %v4183
      %v4222 = vpop.xlane.xlu0 %4221
      %4223 = vadd.xlane.f32.xlu0 %v4184
      %v4224 = vpop.xlane.xlu0 %4223
      %4225 = vadd.xlane.f32.xlu0 %v4185
      %v4226 = vpop.xlane.xlu0 %4225
      %4227 = vadd.xlane.f32.xlu0 %v4186
      %v4228 = vpop.xlane.xlu0 %4227
      %4229 = vadd.xlane.f32.xlu0 %v4187
      %v4230 = vpop.xlane.xlu0 %4229
      %4231 = vadd.xlane.f32.xlu0 %v4188
      %v4232 = vpop.xlane.xlu0 %4231
      %4233 = vadd.xlane.f32.xlu0 %v4189
      %v4234 = vpop.xlane.xlu0 %4233
      %4235 = vadd.xlane.f32.xlu0 %v4190
      %v4236 = vpop.xlane.xlu0 %4235
      %4237 = vadd.xlane.f32.xlu0 %v4191
      %v4238 = vpop.xlane.xlu0 %4237
      %4239 = vadd.xlane.f32.xlu0 %v4192
      %v4240 = vpop.xlane.xlu0 %4239
      %4241 = vadd.xlane.f32.xlu0 %v4193
      %v4242 = vpop.xlane.xlu0 %4241
      %4243 = vadd.xlane.f32.xlu0 %v4194
      %v4244 = vpop.xlane.xlu0 %4243
      %4245 = vadd.xlane.f32.xlu0 %v4195
      %v4246 = vpop.xlane.xlu0 %4245
      %4247 = vadd.xlane.f32.xlu0 %v4196
      %v4248 = vpop.xlane.xlu0 %4247
      %4249 = vadd.xlane.f32.xlu0 %v4197
      %v4250 = vpop.xlane.xlu0 %4249
      %4251 = vadd.xlane.f32.xlu0 %v4198
      %v4252 = vpop.xlane.xlu0 %4251
      %4253 = vadd.xlane.f32.xlu0 %v4199
      %v4254 = vpop.xlane.xlu0 %4253
      %4255 = vadd.xlane.f32.xlu0 %v4200
      %v4256 = vpop.xlane.xlu0 %4255
      %4257 = vadd.xlane.f32.xlu0 %v4201
      %v4258 = vpop.xlane.xlu0 %4257
      %4259 = vadd.xlane.f32.xlu0 %v4202
      %v4260 = vpop.xlane.xlu0 %4259
      %4261 = vadd.xlane.f32.xlu0 %v4203
      %v4262 = vpop.xlane.xlu0 %4261
      %4263 = vadd.xlane.f32.xlu0 %v4204
      %v4264 = vpop.xlane.xlu0 %4263
      %4265 = vadd.xlane.f32.xlu0 %v4205
      %v4266 = vpop.xlane.xlu0 %4265
      %4267 = vadd.xlane.f32.xlu0 %v4206
      %v4268 = vpop.xlane.xlu0 %4267
      %4269 = vadd.xlane.f32.xlu0 %v4207
      %v4270 = vpop.xlane.xlu0 %4269
      %4271 = vadd.xlane.f32.xlu0 %v4208
      %v4272 = vpop.xlane.xlu0 %4271
      %v4273 = vsel %vm1557, %v3922, %v4018
      %v4274 = vsel %vm1557, %v3924, %v4020
      %v4275 = vsel %vm1557, %v3926, %v4022
      %v4276 = vsel %vm1557, %v3928, %v4024
      %v4277 = vsel %vm1557, %v3930, %v4026
      %v4278 = vsel %vm1557, %v3932, %v4028
      %v4279 = vsel %vm1557, %v3934, %v4030
      %v4280 = vsel %vm1557, %v3936, %v4032
      %v4281 = vsel %vm1557, %v3938, %v4034
      %v4282 = vsel %vm1557, %v3940, %v4036
      %v4283 = vsel %vm1557, %v3942, %v4038
      %v4284 = vsel %vm1557, %v3944, %v4040
      %v4285 = vsel %vm1557, %v3946, %v4042
      %v4286 = vsel %vm1557, %v3948, %v4044
      %v4287 = vsel %vm1557, %v3950, %v4046
      %v4288 = vsel %vm1557, %v3952, %v4048
      %v4289 = vsel %vm1557, %v3954, %v4050
      %v4290 = vsel %vm1557, %v3956, %v4052
      %v4291 = vsel %vm1557, %v3958, %v4054
      %v4292 = vsel %vm1557, %v3960, %v4056
      %v4293 = vsel %vm1557, %v3962, %v4058
      %v4294 = vsel %vm1557, %v3964, %v4060
      %v4295 = vsel %vm1557, %v3966, %v4062
      %v4296 = vsel %vm1557, %v3968, %v4064
      %v4297 = vsel %vm1557, %v3970, %v4066
      %v4298 = vsel %vm1557, %v3972, %v4068
      %v4299 = vsel %vm1557, %v3974, %v4070
      %v4300 = vsel %vm1557, %v3976, %v4072
      %v4301 = vsel %vm1557, %v3978, %v4074
      %v4302 = vsel %vm1557, %v3980, %v4076
      %v4303 = vsel %vm1557, %v3982, %v4078
      %v4304 = vsel %vm1557, %v3984, %v4080
      %v4305 = vsel %vm1590, %v4273, %v4114
      %v4306 = vsel %vm1590, %v4274, %v4116
      %v4307 = vsel %vm1590, %v4275, %v4118
      %v4308 = vsel %vm1590, %v4276, %v4120
      %v4309 = vsel %vm1590, %v4277, %v4122
      %v4310 = vsel %vm1590, %v4278, %v4124
      %v4311 = vsel %vm1590, %v4279, %v4126
      %v4312 = vsel %vm1590, %v4280, %v4128
      %v4313 = vsel %vm1590, %v4281, %v4130
      %v4314 = vsel %vm1590, %v4282, %v4132
      %v4315 = vsel %vm1590, %v4283, %v4134
      %v4316 = vsel %vm1590, %v4284, %v4136
      %v4317 = vsel %vm1590, %v4285, %v4138
      %v4318 = vsel %vm1590, %v4286, %v4140
      %v4319 = vsel %vm1590, %v4287, %v4142
      %v4320 = vsel %vm1590, %v4288, %v4144
      %v4321 = vsel %vm1590, %v4289, %v4146
      %v4322 = vsel %vm1590, %v4290, %v4148
      %v4323 = vsel %vm1590, %v4291, %v4150
      %v4324 = vsel %vm1590, %v4292, %v4152
      %v4325 = vsel %vm1590, %v4293, %v4154
      %v4326 = vsel %vm1590, %v4294, %v4156
      %v4327 = vsel %vm1590, %v4295, %v4158
      %v4328 = vsel %vm1590, %v4296, %v4160
      %v4329 = vsel %vm1590, %v4297, %v4162
      %v4330 = vsel %vm1590, %v4298, %v4164
      %v4331 = vsel %vm1590, %v4299, %v4166
      %v4332 = vsel %vm1590, %v4300, %v4168
      %v4333 = vsel %vm1590, %v4301, %v4170
      %v4334 = vsel %vm1590, %v4302, %v4172
      %v4335 = vsel %vm1590, %v4303, %v4174
      %v4336 = vsel %vm1590, %v4304, %v4176
      %v4337 = vsel %vm1623, %v4305, %v4210
      %v4338 = vsel %vm1623, %v4306, %v4212
      %v4339 = vsel %vm1623, %v4307, %v4214
      %v4340 = vsel %vm1623, %v4308, %v4216
      %v4341 = vsel %vm1623, %v4309, %v4218
      %v4342 = vsel %vm1623, %v4310, %v4220
      %v4343 = vsel %vm1623, %v4311, %v4222
      %v4344 = vsel %vm1623, %v4312, %v4224
      %v4345 = vsel %vm1623, %v4313, %v4226
      %v4346 = vsel %vm1623, %v4314, %v4228
      %v4347 = vsel %vm1623, %v4315, %v4230
      %v4348 = vsel %vm1623, %v4316, %v4232
      %v4349 = vsel %vm1623, %v4317, %v4234
      %v4350 = vsel %vm1623, %v4318, %v4236
      %v4351 = vsel %vm1623, %v4319, %v4238
      %v4352 = vsel %vm1623, %v4320, %v4240
      %v4353 = vsel %vm1623, %v4321, %v4242
      %v4354 = vsel %vm1623, %v4322, %v4244
      %v4355 = vsel %vm1623, %v4323, %v4246
      %v4356 = vsel %vm1623, %v4324, %v4248
      %v4357 = vsel %vm1623, %v4325, %v4250
      %v4358 = vsel %vm1623, %v4326, %v4252
      %v4359 = vsel %vm1623, %v4327, %v4254
      %v4360 = vsel %vm1623, %v4328, %v4256
      %v4361 = vsel %vm1623, %v4329, %v4258
      %v4362 = vsel %vm1623, %v4330, %v4260
      %v4363 = vsel %vm1623, %v4331, %v4262
      %v4364 = vsel %vm1623, %v4332, %v4264
      %v4365 = vsel %vm1623, %v4333, %v4266
      %v4366 = vsel %vm1623, %v4334, %v4268
      %v4367 = vsel %vm1623, %v4335, %v4270
      %v4368 = vsel %vm1623, %v4336, %v4272
      %v4369 = vadd.f32 %v4337, %v1657
      %v4370 = vadd.f32 %v4338, %v1657
      %v4371 = vadd.f32 %v4339, %v1657
      %v4372 = vadd.f32 %v4340, %v1657
      %v4373 = vadd.f32 %v4341, %v1657
      %v4374 = vadd.f32 %v4342, %v1657
      %v4375 = vadd.f32 %v4343, %v1657
      %v4376 = vadd.f32 %v4344, %v1657
      %v4377 = vadd.f32 %v4345, %v1657
      %v4378 = vadd.f32 %v4346, %v1657
      %v4379 = vadd.f32 %v4347, %v1657
      %v4380 = vadd.f32 %v4348, %v1657
      %v4381 = vadd.f32 %v4349, %v1657
      %v4382 = vadd.f32 %v4350, %v1657
      %v4383 = vadd.f32 %v4351, %v1657
      %v4384 = vadd.f32 %v4352, %v1657
      %v4385 = vadd.f32 %v4353, %v1657
      %v4386 = vadd.f32 %v4354, %v1657
      %v4387 = vadd.f32 %v4355, %v1657
      %v4388 = vadd.f32 %v4356, %v1657
      %v4389 = vadd.f32 %v4357, %v1657
      %v4390 = vadd.f32 %v4358, %v1657
      %v4391 = vadd.f32 %v4359, %v1657
      %v4392 = vadd.f32 %v4360, %v1657
      %v4393 = vadd.f32 %v4361, %v1657
      %v4394 = vadd.f32 %v4362, %v1657
      %v4395 = vadd.f32 %v4363, %v1657
      %v4396 = vadd.f32 %v4364, %v1657
      %v4397 = vadd.f32 %v4365, %v1657
      %v4398 = vadd.f32 %v4366, %v1657
      %v4399 = vadd.f32 %v4367, %v1657
      %v4400 = vadd.f32 %v4368, %v1657
      %s4401 = scalar_lea.vmem %s280, 512
      %4402 = vst.msk [vmem:[%s4401] sm:$0xff] %vm1691, %v4369
      %4403 = vst.msk [vmem:[%s4401 + $0x8] sm:$0xff] %vm1691, %v4370
      %4404 = vst.msk [vmem:[%s4401 + $0x10] sm:$0xff] %vm1691, %v4371
      %4405 = vst.msk [vmem:[%s4401 + $0x18] sm:$0xff] %vm1691, %v4372
      %4406 = vst.msk [vmem:[%s4401 + $0x20] sm:$0xff] %vm1691, %v4373
      %4407 = vst.msk [vmem:[%s4401 + $0x28] sm:$0xff] %vm1691, %v4374
      %4408 = vst.msk [vmem:[%s4401 + $0x30] sm:$0xff] %vm1691, %v4375
      %4409 = vst.msk [vmem:[%s4401 + $0x38] sm:$0xff] %vm1691, %v4376
      %4410 = vst.msk [vmem:[%s4401 + $0x40] sm:$0xff] %vm1691, %v4377
      %4411 = vst.msk [vmem:[%s4401 + $0x48] sm:$0xff] %vm1691, %v4378
      %4412 = vst.msk [vmem:[%s4401 + $0x50] sm:$0xff] %vm1691, %v4379
      %4413 = vst.msk [vmem:[%s4401 + $0x58] sm:$0xff] %vm1691, %v4380
      %4414 = vst.msk [vmem:[%s4401 + $0x60] sm:$0xff] %vm1691, %v4381
      %4415 = vst.msk [vmem:[%s4401 + $0x68] sm:$0xff] %vm1691, %v4382
      %4416 = vst.msk [vmem:[%s4401 + $0x70] sm:$0xff] %vm1691, %v4383
      %4417 = vst.msk [vmem:[%s4401 + $0x78] sm:$0xff] %vm1691, %v4384
      %4418 = vst.msk [vmem:[%s4401 + $0x80] sm:$0xff] %vm1691, %v4385
      %4419 = vst.msk [vmem:[%s4401 + $0x88] sm:$0xff] %vm1691, %v4386
      %4420 = vst.msk [vmem:[%s4401 + $0x90] sm:$0xff] %vm1691, %v4387
      %4421 = vst.msk [vmem:[%s4401 + $0x98] sm:$0xff] %vm1691, %v4388
      %4422 = vst.msk [vmem:[%s4401 + $0xa0] sm:$0xff] %vm1691, %v4389
      %4423 = vst.msk [vmem:[%s4401 + $0xa8] sm:$0xff] %vm1691, %v4390
      %4424 = vst.msk [vmem:[%s4401 + $0xb0] sm:$0xff] %vm1691, %v4391
      %4425 = vst.msk [vmem:[%s4401 + $0xb8] sm:$0xff] %vm1691, %v4392
      %4426 = vst.msk [vmem:[%s4401 + $0xc0] sm:$0xff] %vm1691, %v4393
      %4427 = vst.msk [vmem:[%s4401 + $0xc8] sm:$0xff] %vm1691, %v4394
      %4428 = vst.msk [vmem:[%s4401 + $0xd0] sm:$0xff] %vm1691, %v4395
      %4429 = vst.msk [vmem:[%s4401 + $0xd8] sm:$0xff] %vm1691, %v4396
      %4430 = vst.msk [vmem:[%s4401 + $0xe0] sm:$0xff] %vm1691, %v4397
      %4431 = vst.msk [vmem:[%s4401 + $0xe8] sm:$0xff] %vm1691, %v4398
      %4432 = vst.msk [vmem:[%s4401 + $0xf0] sm:$0xff] %vm1691, %v4399
      %4433 = vst.msk [vmem:[%s4401 + $0xf8] sm:$0xff] %vm1691, %v4400
      %s4434 = scalar_lea.vmem %s274, 768
      %v4435 = vld [vmem:[%s4434] sm:$0xff]
      %v4436 = vld [vmem:[%s4434 + $0x8] sm:$0xff]
      %v4437 = vld [vmem:[%s4434 + $0x10] sm:$0xff]
      %v4438 = vld [vmem:[%s4434 + $0x18] sm:$0xff]
      %v4439 = vld [vmem:[%s4434 + $0x20] sm:$0xff]
      %v4440 = vld [vmem:[%s4434 + $0x28] sm:$0xff]
      %v4441 = vld [vmem:[%s4434 + $0x30] sm:$0xff]
      %v4442 = vld [vmem:[%s4434 + $0x38] sm:$0xff]
      %v4443 = vld [vmem:[%s4434 + $0x40] sm:$0xff]
      %v4444 = vld [vmem:[%s4434 + $0x48] sm:$0xff]
      %v4445 = vld [vmem:[%s4434 + $0x50] sm:$0xff]
      %v4446 = vld [vmem:[%s4434 + $0x58] sm:$0xff]
      %v4447 = vld [vmem:[%s4434 + $0x60] sm:$0xff]
      %v4448 = vld [vmem:[%s4434 + $0x68] sm:$0xff]
      %v4449 = vld [vmem:[%s4434 + $0x70] sm:$0xff]
      %v4450 = vld [vmem:[%s4434 + $0x78] sm:$0xff]
      %v4451 = vld [vmem:[%s4434 + $0x80] sm:$0xff]
      %v4452 = vld [vmem:[%s4434 + $0x88] sm:$0xff]
      %v4453 = vld [vmem:[%s4434 + $0x90] sm:$0xff]
      %v4454 = vld [vmem:[%s4434 + $0x98] sm:$0xff]
      %v4455 = vld [vmem:[%s4434 + $0xa0] sm:$0xff]
      %v4456 = vld [vmem:[%s4434 + $0xa8] sm:$0xff]
      %v4457 = vld [vmem:[%s4434 + $0xb0] sm:$0xff]
      %v4458 = vld [vmem:[%s4434 + $0xb8] sm:$0xff]
      %v4459 = vld [vmem:[%s4434 + $0xc0] sm:$0xff]
      %v4460 = vld [vmem:[%s4434 + $0xc8] sm:$0xff]
      %v4461 = vld [vmem:[%s4434 + $0xd0] sm:$0xff]
      %v4462 = vld [vmem:[%s4434 + $0xd8] sm:$0xff]
      %v4463 = vld [vmem:[%s4434 + $0xe0] sm:$0xff]
      %v4464 = vld [vmem:[%s4434 + $0xe8] sm:$0xff]
      %v4465 = vld [vmem:[%s4434 + $0xf0] sm:$0xff]
      %v4466 = vld [vmem:[%s4434 + $0xf8] sm:$0xff]
      %4468 = vset.pattern.permute.xlu0 0
      %4469 = vperm.xlu0 %4468, %v4435
      %v4470 = vpop.permute.xlu0 %4469
      %4473 = vset.pattern.permute.xlu0 0
      %4474 = vperm.xlu0 %4473, %v4436
      %v4475 = vpop.permute.xlu0 %4474
      %4478 = vset.pattern.permute.xlu0 0
      %4479 = vperm.xlu0 %4478, %v4437
      %v4480 = vpop.permute.xlu0 %4479
      %4483 = vset.pattern.permute.xlu0 0
      %4484 = vperm.xlu0 %4483, %v4438
      %v4485 = vpop.permute.xlu0 %4484
      %4488 = vset.pattern.permute.xlu0 0
      %4489 = vperm.xlu0 %4488, %v4439
      %v4490 = vpop.permute.xlu0 %4489
      %4493 = vset.pattern.permute.xlu0 0
      %4494 = vperm.xlu0 %4493, %v4440
      %v4495 = vpop.permute.xlu0 %4494
      %4498 = vset.pattern.permute.xlu0 0
      %4499 = vperm.xlu0 %4498, %v4441
      %v4500 = vpop.permute.xlu0 %4499
      %4503 = vset.pattern.permute.xlu0 0
      %4504 = vperm.xlu0 %4503, %v4442
      %v4505 = vpop.permute.xlu0 %4504
      %4508 = vset.pattern.permute.xlu0 0
      %4509 = vperm.xlu0 %4508, %v4443
      %v4510 = vpop.permute.xlu0 %4509
      %4513 = vset.pattern.permute.xlu0 0
      %4514 = vperm.xlu0 %4513, %v4444
      %v4515 = vpop.permute.xlu0 %4514
      %4518 = vset.pattern.permute.xlu0 0
      %4519 = vperm.xlu0 %4518, %v4445
      %v4520 = vpop.permute.xlu0 %4519
      %4523 = vset.pattern.permute.xlu0 0
      %4524 = vperm.xlu0 %4523, %v4446
      %v4525 = vpop.permute.xlu0 %4524
      %4528 = vset.pattern.permute.xlu0 0
      %4529 = vperm.xlu0 %4528, %v4447
      %v4530 = vpop.permute.xlu0 %4529
      %4533 = vset.pattern.permute.xlu0 0
      %4534 = vperm.xlu0 %4533, %v4448
      %v4535 = vpop.permute.xlu0 %4534
      %4538 = vset.pattern.permute.xlu0 0
      %4539 = vperm.xlu0 %4538, %v4449
      %v4540 = vpop.permute.xlu0 %4539
      %4543 = vset.pattern.permute.xlu0 0
      %4544 = vperm.xlu0 %4543, %v4450
      %v4545 = vpop.permute.xlu0 %4544
      %4548 = vset.pattern.permute.xlu0 0
      %4549 = vperm.xlu0 %4548, %v4451
      %v4550 = vpop.permute.xlu0 %4549
      %4553 = vset.pattern.permute.xlu0 0
      %4554 = vperm.xlu0 %4553, %v4452
      %v4555 = vpop.permute.xlu0 %4554
      %4558 = vset.pattern.permute.xlu0 0
      %4559 = vperm.xlu0 %4558, %v4453
      %v4560 = vpop.permute.xlu0 %4559
      %4563 = vset.pattern.permute.xlu0 0
      %4564 = vperm.xlu0 %4563, %v4454
      %v4565 = vpop.permute.xlu0 %4564
      %4568 = vset.pattern.permute.xlu0 0
      %4569 = vperm.xlu0 %4568, %v4455
      %v4570 = vpop.permute.xlu0 %4569
      %4573 = vset.pattern.permute.xlu0 0
      %4574 = vperm.xlu0 %4573, %v4456
      %v4575 = vpop.permute.xlu0 %4574
      %4578 = vset.pattern.permute.xlu0 0
      %4579 = vperm.xlu0 %4578, %v4457
      %v4580 = vpop.permute.xlu0 %4579
      %4583 = vset.pattern.permute.xlu0 0
      %4584 = vperm.xlu0 %4583, %v4458
      %v4585 = vpop.permute.xlu0 %4584
      %4588 = vset.pattern.permute.xlu0 0
      %4589 = vperm.xlu0 %4588, %v4459
      %v4590 = vpop.permute.xlu0 %4589
      %4593 = vset.pattern.permute.xlu0 0
      %4594 = vperm.xlu0 %4593, %v4460
      %v4595 = vpop.permute.xlu0 %4594
      %4598 = vset.pattern.permute.xlu0 0
      %4599 = vperm.xlu0 %4598, %v4461
      %v4600 = vpop.permute.xlu0 %4599
      %4603 = vset.pattern.permute.xlu0 0
      %4604 = vperm.xlu0 %4603, %v4462
      %v4605 = vpop.permute.xlu0 %4604
      %4608 = vset.pattern.permute.xlu0 0
      %4609 = vperm.xlu0 %4608, %v4463
      %v4610 = vpop.permute.xlu0 %4609
      %4613 = vset.pattern.permute.xlu0 0
      %4614 = vperm.xlu0 %4613, %v4464
      %v4615 = vpop.permute.xlu0 %4614
      %4618 = vset.pattern.permute.xlu0 0
      %4619 = vperm.xlu0 %4618, %v4465
      %v4620 = vpop.permute.xlu0 %4619
      %4623 = vset.pattern.permute.xlu0 0
      %4624 = vperm.xlu0 %4623, %v4466
      %v4625 = vpop.permute.xlu0 %4624
      %v4627 = vmul.f32 %v4470, %v495
      %v4628 = vmul.f32 %v4475, %v495
      %v4629 = vmul.f32 %v4480, %v495
      %v4630 = vmul.f32 %v4485, %v495
      %v4631 = vmul.f32 %v4490, %v495
      %v4632 = vmul.f32 %v4495, %v495
      %v4633 = vmul.f32 %v4500, %v495
      %v4634 = vmul.f32 %v4505, %v495
      %v4635 = vmul.f32 %v4510, %v495
      %v4636 = vmul.f32 %v4515, %v495
      %v4637 = vmul.f32 %v4520, %v495
      %v4638 = vmul.f32 %v4525, %v495
      %v4639 = vmul.f32 %v4530, %v495
      %v4640 = vmul.f32 %v4535, %v495
      %v4641 = vmul.f32 %v4540, %v495
      %v4642 = vmul.f32 %v4545, %v495
      %v4643 = vmul.f32 %v4550, %v495
      %v4644 = vmul.f32 %v4555, %v495
      %v4645 = vmul.f32 %v4560, %v495
      %v4646 = vmul.f32 %v4565, %v495
      %v4647 = vmul.f32 %v4570, %v495
      %v4648 = vmul.f32 %v4575, %v495
      %v4649 = vmul.f32 %v4580, %v495
      %v4650 = vmul.f32 %v4585, %v495
      %v4651 = vmul.f32 %v4590, %v495
      %v4652 = vmul.f32 %v4595, %v495
      %v4653 = vmul.f32 %v4600, %v495
      %v4654 = vmul.f32 %v4605, %v495
      %v4655 = vmul.f32 %v4610, %v495
      %v4656 = vmul.f32 %v4615, %v495
      %v4657 = vmul.f32 %v4620, %v495
      %v4658 = vmul.f32 %v4625, %v495
      %v4659 = vadd.f32 %v529, %v4627
      %v4660 = vadd.f32 %v529, %v4628
      %v4661 = vadd.f32 %v529, %v4629
      %v4662 = vadd.f32 %v529, %v4630
      %v4663 = vadd.f32 %v529, %v4631
      %v4664 = vadd.f32 %v529, %v4632
      %v4665 = vadd.f32 %v529, %v4633
      %v4666 = vadd.f32 %v529, %v4634
      %v4667 = vadd.f32 %v529, %v4635
      %v4668 = vadd.f32 %v529, %v4636
      %v4669 = vadd.f32 %v529, %v4637
      %v4670 = vadd.f32 %v529, %v4638
      %v4671 = vadd.f32 %v529, %v4639
      %v4672 = vadd.f32 %v529, %v4640
      %v4673 = vadd.f32 %v529, %v4641
      %v4674 = vadd.f32 %v529, %v4642
      %v4675 = vadd.f32 %v529, %v4643
      %v4676 = vadd.f32 %v529, %v4644
      %v4677 = vadd.f32 %v529, %v4645
      %v4678 = vadd.f32 %v529, %v4646
      %v4679 = vadd.f32 %v529, %v4647
      %v4680 = vadd.f32 %v529, %v4648
      %v4681 = vadd.f32 %v529, %v4649
      %v4682 = vadd.f32 %v529, %v4650
      %v4683 = vadd.f32 %v529, %v4651
      %v4684 = vadd.f32 %v529, %v4652
      %v4685 = vadd.f32 %v529, %v4653
      %v4686 = vadd.f32 %v529, %v4654
      %v4687 = vadd.f32 %v529, %v4655
      %v4688 = vadd.f32 %v529, %v4656
      %v4689 = vadd.f32 %v529, %v4657
      %v4690 = vadd.f32 %v529, %v4658
      %4691 = vset.pattern.permute.xlu0 1
      %4692 = vperm.xlu0 %4691, %v4435
      %v4693 = vpop.permute.xlu0 %4692
      %4695 = vset.pattern.permute.xlu0 1
      %4696 = vperm.xlu0 %4695, %v4436
      %v4697 = vpop.permute.xlu0 %4696
      %4699 = vset.pattern.permute.xlu0 1
      %4700 = vperm.xlu0 %4699, %v4437
      %v4701 = vpop.permute.xlu0 %4700
      %4703 = vset.pattern.permute.xlu0 1
      %4704 = vperm.xlu0 %4703, %v4438
      %v4705 = vpop.permute.xlu0 %4704
      %4707 = vset.pattern.permute.xlu0 1
      %4708 = vperm.xlu0 %4707, %v4439
      %v4709 = vpop.permute.xlu0 %4708
      %4711 = vset.pattern.permute.xlu0 1
      %4712 = vperm.xlu0 %4711, %v4440
      %v4713 = vpop.permute.xlu0 %4712
      %4715 = vset.pattern.permute.xlu0 1
      %4716 = vperm.xlu0 %4715, %v4441
      %v4717 = vpop.permute.xlu0 %4716
      %4719 = vset.pattern.permute.xlu0 1
      %4720 = vperm.xlu0 %4719, %v4442
      %v4721 = vpop.permute.xlu0 %4720
      %4723 = vset.pattern.permute.xlu0 1
      %4724 = vperm.xlu0 %4723, %v4443
      %v4725 = vpop.permute.xlu0 %4724
      %4727 = vset.pattern.permute.xlu0 1
      %4728 = vperm.xlu0 %4727, %v4444
      %v4729 = vpop.permute.xlu0 %4728
      %4731 = vset.pattern.permute.xlu0 1
      %4732 = vperm.xlu0 %4731, %v4445
      %v4733 = vpop.permute.xlu0 %4732
      %4735 = vset.pattern.permute.xlu0 1
      %4736 = vperm.xlu0 %4735, %v4446
      %v4737 = vpop.permute.xlu0 %4736
      %4739 = vset.pattern.permute.xlu0 1
      %4740 = vperm.xlu0 %4739, %v4447
      %v4741 = vpop.permute.xlu0 %4740
      %4743 = vset.pattern.permute.xlu0 1
      %4744 = vperm.xlu0 %4743, %v4448
      %v4745 = vpop.permute.xlu0 %4744
      %4747 = vset.pattern.permute.xlu0 1
      %4748 = vperm.xlu0 %4747, %v4449
      %v4749 = vpop.permute.xlu0 %4748
      %4751 = vset.pattern.permute.xlu0 1
      %4752 = vperm.xlu0 %4751, %v4450
      %v4753 = vpop.permute.xlu0 %4752
      %4755 = vset.pattern.permute.xlu0 1
      %4756 = vperm.xlu0 %4755, %v4451
      %v4757 = vpop.permute.xlu0 %4756
      %4759 = vset.pattern.permute.xlu0 1
      %4760 = vperm.xlu0 %4759, %v4452
      %v4761 = vpop.permute.xlu0 %4760
      %4763 = vset.pattern.permute.xlu0 1
      %4764 = vperm.xlu0 %4763, %v4453
      %v4765 = vpop.permute.xlu0 %4764
      %4767 = vset.pattern.permute.xlu0 1
      %4768 = vperm.xlu0 %4767, %v4454
      %v4769 = vpop.permute.xlu0 %4768
      %4771 = vset.pattern.permute.xlu0 1
      %4772 = vperm.xlu0 %4771, %v4455
      %v4773 = vpop.permute.xlu0 %4772
      %4775 = vset.pattern.permute.xlu0 1
      %4776 = vperm.xlu0 %4775, %v4456
      %v4777 = vpop.permute.xlu0 %4776
      %4779 = vset.pattern.permute.xlu0 1
      %4780 = vperm.xlu0 %4779, %v4457
      %v4781 = vpop.permute.xlu0 %4780
      %4783 = vset.pattern.permute.xlu0 1
      %4784 = vperm.xlu0 %4783, %v4458
      %v4785 = vpop.permute.xlu0 %4784
      %4787 = vset.pattern.permute.xlu0 1
      %4788 = vperm.xlu0 %4787, %v4459
      %v4789 = vpop.permute.xlu0 %4788
      %4791 = vset.pattern.permute.xlu0 1
      %4792 = vperm.xlu0 %4791, %v4460
      %v4793 = vpop.permute.xlu0 %4792
      %4795 = vset.pattern.permute.xlu0 1
      %4796 = vperm.xlu0 %4795, %v4461
      %v4797 = vpop.permute.xlu0 %4796
      %4799 = vset.pattern.permute.xlu0 1
      %4800 = vperm.xlu0 %4799, %v4462
      %v4801 = vpop.permute.xlu0 %4800
      %4803 = vset.pattern.permute.xlu0 1
      %4804 = vperm.xlu0 %4803, %v4463
      %v4805 = vpop.permute.xlu0 %4804
      %4807 = vset.pattern.permute.xlu0 1
      %4808 = vperm.xlu0 %4807, %v4464
      %v4809 = vpop.permute.xlu0 %4808
      %4811 = vset.pattern.permute.xlu0 1
      %4812 = vperm.xlu0 %4811, %v4465
      %v4813 = vpop.permute.xlu0 %4812
      %4815 = vset.pattern.permute.xlu0 1
      %4816 = vperm.xlu0 %4815, %v4466
      %v4817 = vpop.permute.xlu0 %4816
      %v4819 = vmul.f32 %v4693, %v691
      %v4820 = vmul.f32 %v4697, %v691
      %v4821 = vmul.f32 %v4701, %v691
      %v4822 = vmul.f32 %v4705, %v691
      %v4823 = vmul.f32 %v4709, %v691
      %v4824 = vmul.f32 %v4713, %v691
      %v4825 = vmul.f32 %v4717, %v691
      %v4826 = vmul.f32 %v4721, %v691
      %v4827 = vmul.f32 %v4725, %v691
      %v4828 = vmul.f32 %v4729, %v691
      %v4829 = vmul.f32 %v4733, %v691
      %v4830 = vmul.f32 %v4737, %v691
      %v4831 = vmul.f32 %v4741, %v691
      %v4832 = vmul.f32 %v4745, %v691
      %v4833 = vmul.f32 %v4749, %v691
      %v4834 = vmul.f32 %v4753, %v691
      %v4835 = vmul.f32 %v4757, %v691
      %v4836 = vmul.f32 %v4761, %v691
      %v4837 = vmul.f32 %v4765, %v691
      %v4838 = vmul.f32 %v4769, %v691
      %v4839 = vmul.f32 %v4773, %v691
      %v4840 = vmul.f32 %v4777, %v691
      %v4841 = vmul.f32 %v4781, %v691
      %v4842 = vmul.f32 %v4785, %v691
      %v4843 = vmul.f32 %v4789, %v691
      %v4844 = vmul.f32 %v4793, %v691
      %v4845 = vmul.f32 %v4797, %v691
      %v4846 = vmul.f32 %v4801, %v691
      %v4847 = vmul.f32 %v4805, %v691
      %v4848 = vmul.f32 %v4809, %v691
      %v4849 = vmul.f32 %v4813, %v691
      %v4850 = vmul.f32 %v4817, %v691
      %v4851 = vadd.f32 %v4659, %v4819
      %v4852 = vadd.f32 %v4660, %v4820
      %v4853 = vadd.f32 %v4661, %v4821
      %v4854 = vadd.f32 %v4662, %v4822
      %v4855 = vadd.f32 %v4663, %v4823
      %v4856 = vadd.f32 %v4664, %v4824
      %v4857 = vadd.f32 %v4665, %v4825
      %v4858 = vadd.f32 %v4666, %v4826
      %v4859 = vadd.f32 %v4667, %v4827
      %v4860 = vadd.f32 %v4668, %v4828
      %v4861 = vadd.f32 %v4669, %v4829
      %v4862 = vadd.f32 %v4670, %v4830
      %v4863 = vadd.f32 %v4671, %v4831
      %v4864 = vadd.f32 %v4672, %v4832
      %v4865 = vadd.f32 %v4673, %v4833
      %v4866 = vadd.f32 %v4674, %v4834
      %v4867 = vadd.f32 %v4675, %v4835
      %v4868 = vadd.f32 %v4676, %v4836
      %v4869 = vadd.f32 %v4677, %v4837
      %v4870 = vadd.f32 %v4678, %v4838
      %v4871 = vadd.f32 %v4679, %v4839
      %v4872 = vadd.f32 %v4680, %v4840
      %v4873 = vadd.f32 %v4681, %v4841
      %v4874 = vadd.f32 %v4682, %v4842
      %v4875 = vadd.f32 %v4683, %v4843
      %v4876 = vadd.f32 %v4684, %v4844
      %v4877 = vadd.f32 %v4685, %v4845
      %v4878 = vadd.f32 %v4686, %v4846
      %v4879 = vadd.f32 %v4687, %v4847
      %v4880 = vadd.f32 %v4688, %v4848
      %v4881 = vadd.f32 %v4689, %v4849
      %v4882 = vadd.f32 %v4690, %v4850
      %4883 = vset.pattern.permute.xlu0 2
      %4884 = vperm.xlu0 %4883, %v4435
      %v4885 = vpop.permute.xlu0 %4884
      %4887 = vset.pattern.permute.xlu0 2
      %4888 = vperm.xlu0 %4887, %v4436
      %v4889 = vpop.permute.xlu0 %4888
      %4891 = vset.pattern.permute.xlu0 2
      %4892 = vperm.xlu0 %4891, %v4437
      %v4893 = vpop.permute.xlu0 %4892
      %4895 = vset.pattern.permute.xlu0 2
      %4896 = vperm.xlu0 %4895, %v4438
      %v4897 = vpop.permute.xlu0 %4896
      %4899 = vset.pattern.permute.xlu0 2
      %4900 = vperm.xlu0 %4899, %v4439
      %v4901 = vpop.permute.xlu0 %4900
      %4903 = vset.pattern.permute.xlu0 2
      %4904 = vperm.xlu0 %4903, %v4440
      %v4905 = vpop.permute.xlu0 %4904
      %4907 = vset.pattern.permute.xlu0 2
      %4908 = vperm.xlu0 %4907, %v4441
      %v4909 = vpop.permute.xlu0 %4908
      %4911 = vset.pattern.permute.xlu0 2
      %4912 = vperm.xlu0 %4911, %v4442
      %v4913 = vpop.permute.xlu0 %4912
      %4915 = vset.pattern.permute.xlu0 2
      %4916 = vperm.xlu0 %4915, %v4443
      %v4917 = vpop.permute.xlu0 %4916
      %4919 = vset.pattern.permute.xlu0 2
      %4920 = vperm.xlu0 %4919, %v4444
      %v4921 = vpop.permute.xlu0 %4920
      %4923 = vset.pattern.permute.xlu0 2
      %4924 = vperm.xlu0 %4923, %v4445
      %v4925 = vpop.permute.xlu0 %4924
      %4927 = vset.pattern.permute.xlu0 2
      %4928 = vperm.xlu0 %4927, %v4446
      %v4929 = vpop.permute.xlu0 %4928
      %4931 = vset.pattern.permute.xlu0 2
      %4932 = vperm.xlu0 %4931, %v4447
      %v4933 = vpop.permute.xlu0 %4932
      %4935 = vset.pattern.permute.xlu0 2
      %4936 = vperm.xlu0 %4935, %v4448
      %v4937 = vpop.permute.xlu0 %4936
      %4939 = vset.pattern.permute.xlu0 2
      %4940 = vperm.xlu0 %4939, %v4449
      %v4941 = vpop.permute.xlu0 %4940
      %4943 = vset.pattern.permute.xlu0 2
      %4944 = vperm.xlu0 %4943, %v4450
      %v4945 = vpop.permute.xlu0 %4944
      %4947 = vset.pattern.permute.xlu0 2
      %4948 = vperm.xlu0 %4947, %v4451
      %v4949 = vpop.permute.xlu0 %4948
      %4951 = vset.pattern.permute.xlu0 2
      %4952 = vperm.xlu0 %4951, %v4452
      %v4953 = vpop.permute.xlu0 %4952
      %4955 = vset.pattern.permute.xlu0 2
      %4956 = vperm.xlu0 %4955, %v4453
      %v4957 = vpop.permute.xlu0 %4956
      %4959 = vset.pattern.permute.xlu0 2
      %4960 = vperm.xlu0 %4959, %v4454
      %v4961 = vpop.permute.xlu0 %4960
      %4963 = vset.pattern.permute.xlu0 2
      %4964 = vperm.xlu0 %4963, %v4455
      %v4965 = vpop.permute.xlu0 %4964
      %4967 = vset.pattern.permute.xlu0 2
      %4968 = vperm.xlu0 %4967, %v4456
      %v4969 = vpop.permute.xlu0 %4968
      %4971 = vset.pattern.permute.xlu0 2
      %4972 = vperm.xlu0 %4971, %v4457
      %v4973 = vpop.permute.xlu0 %4972
      %4975 = vset.pattern.permute.xlu0 2
      %4976 = vperm.xlu0 %4975, %v4458
      %v4977 = vpop.permute.xlu0 %4976
      %4979 = vset.pattern.permute.xlu0 2
      %4980 = vperm.xlu0 %4979, %v4459
      %v4981 = vpop.permute.xlu0 %4980
      %4983 = vset.pattern.permute.xlu0 2
      %4984 = vperm.xlu0 %4983, %v4460
      %v4985 = vpop.permute.xlu0 %4984
      %4987 = vset.pattern.permute.xlu0 2
      %4988 = vperm.xlu0 %4987, %v4461
      %v4989 = vpop.permute.xlu0 %4988
      %4991 = vset.pattern.permute.xlu0 2
      %4992 = vperm.xlu0 %4991, %v4462
      %v4993 = vpop.permute.xlu0 %4992
      %4995 = vset.pattern.permute.xlu0 2
      %4996 = vperm.xlu0 %4995, %v4463
      %v4997 = vpop.permute.xlu0 %4996
      %4999 = vset.pattern.permute.xlu0 2
      %5000 = vperm.xlu0 %4999, %v4464
      %v5001 = vpop.permute.xlu0 %5000
      %5003 = vset.pattern.permute.xlu0 2
      %5004 = vperm.xlu0 %5003, %v4465
      %v5005 = vpop.permute.xlu0 %5004
      %5007 = vset.pattern.permute.xlu0 2
      %5008 = vperm.xlu0 %5007, %v4466
      %v5009 = vpop.permute.xlu0 %5008
      %v5011 = vmul.f32 %v4885, %v884
      %v5012 = vmul.f32 %v4889, %v884
      %v5013 = vmul.f32 %v4893, %v884
      %v5014 = vmul.f32 %v4897, %v884
      %v5015 = vmul.f32 %v4901, %v884
      %v5016 = vmul.f32 %v4905, %v884
      %v5017 = vmul.f32 %v4909, %v884
      %v5018 = vmul.f32 %v4913, %v884
      %v5019 = vmul.f32 %v4917, %v884
      %v5020 = vmul.f32 %v4921, %v884
      %v5021 = vmul.f32 %v4925, %v884
      %v5022 = vmul.f32 %v4929, %v884
      %v5023 = vmul.f32 %v4933, %v884
      %v5024 = vmul.f32 %v4937, %v884
      %v5025 = vmul.f32 %v4941, %v884
      %v5026 = vmul.f32 %v4945, %v884
      %v5027 = vmul.f32 %v4949, %v884
      %v5028 = vmul.f32 %v4953, %v884
      %v5029 = vmul.f32 %v4957, %v884
      %v5030 = vmul.f32 %v4961, %v884
      %v5031 = vmul.f32 %v4965, %v884
      %v5032 = vmul.f32 %v4969, %v884
      %v5033 = vmul.f32 %v4973, %v884
      %v5034 = vmul.f32 %v4977, %v884
      %v5035 = vmul.f32 %v4981, %v884
      %v5036 = vmul.f32 %v4985, %v884
      %v5037 = vmul.f32 %v4989, %v884
      %v5038 = vmul.f32 %v4993, %v884
      %v5039 = vmul.f32 %v4997, %v884
      %v5040 = vmul.f32 %v5001, %v884
      %v5041 = vmul.f32 %v5005, %v884
      %v5042 = vmul.f32 %v5009, %v884
      %v5043 = vadd.f32 %v4851, %v5011
      %v5044 = vadd.f32 %v4852, %v5012
      %v5045 = vadd.f32 %v4853, %v5013
      %v5046 = vadd.f32 %v4854, %v5014
      %v5047 = vadd.f32 %v4855, %v5015
      %v5048 = vadd.f32 %v4856, %v5016
      %v5049 = vadd.f32 %v4857, %v5017
      %v5050 = vadd.f32 %v4858, %v5018
      %v5051 = vadd.f32 %v4859, %v5019
      %v5052 = vadd.f32 %v4860, %v5020
      %v5053 = vadd.f32 %v4861, %v5021
      %v5054 = vadd.f32 %v4862, %v5022
      %v5055 = vadd.f32 %v4863, %v5023
      %v5056 = vadd.f32 %v4864, %v5024
      %v5057 = vadd.f32 %v4865, %v5025
      %v5058 = vadd.f32 %v4866, %v5026
      %v5059 = vadd.f32 %v4867, %v5027
      %v5060 = vadd.f32 %v4868, %v5028
      %v5061 = vadd.f32 %v4869, %v5029
      %v5062 = vadd.f32 %v4870, %v5030
      %v5063 = vadd.f32 %v4871, %v5031
      %v5064 = vadd.f32 %v4872, %v5032
      %v5065 = vadd.f32 %v4873, %v5033
      %v5066 = vadd.f32 %v4874, %v5034
      %v5067 = vadd.f32 %v4875, %v5035
      %v5068 = vadd.f32 %v4876, %v5036
      %v5069 = vadd.f32 %v4877, %v5037
      %v5070 = vadd.f32 %v4878, %v5038
      %v5071 = vadd.f32 %v4879, %v5039
      %v5072 = vadd.f32 %v4880, %v5040
      %v5073 = vadd.f32 %v4881, %v5041
      %v5074 = vadd.f32 %v4882, %v5042
      %v5075 = vmax.f32 %v5043, 0.0
      %v5076 = vmax.f32 %v5044, 0.0
      %v5077 = vmax.f32 %v5045, 0.0
      %v5078 = vmax.f32 %v5046, 0.0
      %v5079 = vmax.f32 %v5047, 0.0
      %v5080 = vmax.f32 %v5048, 0.0
      %v5081 = vmax.f32 %v5049, 0.0
      %v5082 = vmax.f32 %v5050, 0.0
      %v5083 = vmax.f32 %v5051, 0.0
      %v5084 = vmax.f32 %v5052, 0.0
      %v5085 = vmax.f32 %v5053, 0.0
      %v5086 = vmax.f32 %v5054, 0.0
      %v5087 = vmax.f32 %v5055, 0.0
      %v5088 = vmax.f32 %v5056, 0.0
      %v5089 = vmax.f32 %v5057, 0.0
      %v5090 = vmax.f32 %v5058, 0.0
      %v5091 = vmax.f32 %v5059, 0.0
      %v5092 = vmax.f32 %v5060, 0.0
      %v5093 = vmax.f32 %v5061, 0.0
      %v5094 = vmax.f32 %v5062, 0.0
      %v5095 = vmax.f32 %v5063, 0.0
      %v5096 = vmax.f32 %v5064, 0.0
      %v5097 = vmax.f32 %v5065, 0.0
      %v5098 = vmax.f32 %v5066, 0.0
      %v5099 = vmax.f32 %v5067, 0.0
      %v5100 = vmax.f32 %v5068, 0.0
      %v5101 = vmax.f32 %v5069, 0.0
      %v5102 = vmax.f32 %v5070, 0.0
      %v5103 = vmax.f32 %v5071, 0.0
      %v5104 = vmax.f32 %v5072, 0.0
      %v5105 = vmax.f32 %v5073, 0.0
      %v5106 = vmax.f32 %v5074, 0.0
      %v5107 = vpack.c.bf16 %v5076, %v5075
      %v5108 = vpack.c.bf16 %v5078, %v5077
      %v5109 = vpack.c.bf16 %v5080, %v5079
      %v5110 = vpack.c.bf16 %v5082, %v5081
      %v5111 = vpack.c.bf16 %v5084, %v5083
      %v5112 = vpack.c.bf16 %v5086, %v5085
      %v5113 = vpack.c.bf16 %v5088, %v5087
      %v5114 = vpack.c.bf16 %v5090, %v5089
      %v5115 = vpack.c.bf16 %v5092, %v5091
      %v5116 = vpack.c.bf16 %v5094, %v5093
      %v5117 = vpack.c.bf16 %v5096, %v5095
      %v5118 = vpack.c.bf16 %v5098, %v5097
      %v5119 = vpack.c.bf16 %v5100, %v5099
      %v5120 = vpack.c.bf16 %v5102, %v5101
      %v5121 = vpack.c.bf16 %v5104, %v5103
      %v5122 = vpack.c.bf16 %v5106, %v5105
      %5123 = vmatpush.bf16.msra.mxu0 %v1039
      %5124 = vmatpush.bf16.msra.mxu0 %v1038
      %5125 = vmatpush.bf16.msra.mxu0 %v1037
      %5126 = vmatpush.bf16.msra.mxu0 %v1036
      %5127 = vmatpush.bf16.msra.mxu0 %v1035
      %5128 = vmatpush.bf16.msra.mxu0 %v1034
      %5129 = vmatpush.bf16.msra.mxu0 %v1033
      %5130 = vmatpush.bf16.msra.mxu0 %v1032
      %5131 = vmatmul.bf16.gmra.mxu0 %v5107
      %v5132 = vpop.f32.mrf.mxu0
      %v5133 = vadd.f32 %v998, %v5132
      %v5134 = vpop.f32.mrf.mxu0
      %v5135 = vadd.f32 %v998, %v5134
      %5136 = vmatmul.bf16.gmra.mxu0 %v5108
      %v5137 = vpop.f32.mrf.mxu0
      %v5138 = vadd.f32 %v998, %v5137
      %v5139 = vpop.f32.mrf.mxu0
      %v5140 = vadd.f32 %v998, %v5139
      %5141 = vmatmul.bf16.gmra.mxu0 %v5109
      %v5142 = vpop.f32.mrf.mxu0
      %v5143 = vadd.f32 %v998, %v5142
      %v5144 = vpop.f32.mrf.mxu0
      %v5145 = vadd.f32 %v998, %v5144
      %5146 = vmatmul.bf16.gmra.mxu0 %v5110
      %v5147 = vpop.f32.mrf.mxu0
      %v5148 = vadd.f32 %v998, %v5147
      %v5149 = vpop.f32.mrf.mxu0
      %v5150 = vadd.f32 %v998, %v5149
      %5151 = vmatmul.bf16.gmra.mxu0 %v5111
      %v5152 = vpop.f32.mrf.mxu0
      %v5153 = vadd.f32 %v998, %v5152
      %v5154 = vpop.f32.mrf.mxu0
      %v5155 = vadd.f32 %v998, %v5154
      %5156 = vmatmul.bf16.gmra.mxu0 %v5112
      %v5157 = vpop.f32.mrf.mxu0
      %v5158 = vadd.f32 %v998, %v5157
      %v5159 = vpop.f32.mrf.mxu0
      %v5160 = vadd.f32 %v998, %v5159
      %5161 = vmatmul.bf16.gmra.mxu0 %v5113
      %v5162 = vpop.f32.mrf.mxu0
      %v5163 = vadd.f32 %v998, %v5162
      %v5164 = vpop.f32.mrf.mxu0
      %v5165 = vadd.f32 %v998, %v5164
      %5166 = vmatmul.bf16.gmra.mxu0 %v5114
      %v5167 = vpop.f32.mrf.mxu0
      %v5168 = vadd.f32 %v998, %v5167
      %v5169 = vpop.f32.mrf.mxu0
      %v5170 = vadd.f32 %v998, %v5169
      %5171 = vmatmul.bf16.gmra.mxu0 %v5115
      %v5172 = vpop.f32.mrf.mxu0
      %v5173 = vadd.f32 %v998, %v5172
      %v5174 = vpop.f32.mrf.mxu0
      %v5175 = vadd.f32 %v998, %v5174
      %5176 = vmatmul.bf16.gmra.mxu0 %v5116
      %v5177 = vpop.f32.mrf.mxu0
      %v5178 = vadd.f32 %v998, %v5177
      %v5179 = vpop.f32.mrf.mxu0
      %v5180 = vadd.f32 %v998, %v5179
      %5181 = vmatmul.bf16.gmra.mxu0 %v5117
      %v5182 = vpop.f32.mrf.mxu0
      %v5183 = vadd.f32 %v998, %v5182
      %v5184 = vpop.f32.mrf.mxu0
      %v5185 = vadd.f32 %v998, %v5184
      %5186 = vmatmul.bf16.gmra.mxu0 %v5118
      %v5187 = vpop.f32.mrf.mxu0
      %v5188 = vadd.f32 %v998, %v5187
      %v5189 = vpop.f32.mrf.mxu0
      %v5190 = vadd.f32 %v998, %v5189
      %5191 = vmatmul.bf16.gmra.mxu0 %v5119
      %v5192 = vpop.f32.mrf.mxu0
      %v5193 = vadd.f32 %v998, %v5192
      %v5194 = vpop.f32.mrf.mxu0
      %v5195 = vadd.f32 %v998, %v5194
      %5196 = vmatmul.bf16.gmra.mxu0 %v5120
      %v5197 = vpop.f32.mrf.mxu0
      %v5198 = vadd.f32 %v998, %v5197
      %v5199 = vpop.f32.mrf.mxu0
      %v5200 = vadd.f32 %v998, %v5199
      %5201 = vmatmul.bf16.gmra.mxu0 %v5121
      %v5202 = vpop.f32.mrf.mxu0
      %v5203 = vadd.f32 %v998, %v5202
      %v5204 = vpop.f32.mrf.mxu0
      %v5205 = vadd.f32 %v998, %v5204
      %5206 = vmatmul.bf16.gmra.mxu0 %v5122
      %v5207 = vpop.f32.mrf.mxu0
      %v5208 = vadd.f32 %v998, %v5207
      %v5209 = vpop.f32.mrf.mxu0
      %v5210 = vadd.f32 %v998, %v5209
      %5211 = vdwg.mxu0
      %v5212 = vmax.f32 %v5133, 0.0
      %v5213 = vmax.f32 %v5135, 0.0
      %v5214 = vmax.f32 %v5138, 0.0
      %v5215 = vmax.f32 %v5140, 0.0
      %v5216 = vmax.f32 %v5143, 0.0
      %v5217 = vmax.f32 %v5145, 0.0
      %v5218 = vmax.f32 %v5148, 0.0
      %v5219 = vmax.f32 %v5150, 0.0
      %v5220 = vmax.f32 %v5153, 0.0
      %v5221 = vmax.f32 %v5155, 0.0
      %v5222 = vmax.f32 %v5158, 0.0
      %v5223 = vmax.f32 %v5160, 0.0
      %v5224 = vmax.f32 %v5163, 0.0
      %v5225 = vmax.f32 %v5165, 0.0
      %v5226 = vmax.f32 %v5168, 0.0
      %v5227 = vmax.f32 %v5170, 0.0
      %v5228 = vmax.f32 %v5173, 0.0
      %v5229 = vmax.f32 %v5175, 0.0
      %v5230 = vmax.f32 %v5178, 0.0
      %v5231 = vmax.f32 %v5180, 0.0
      %v5232 = vmax.f32 %v5183, 0.0
      %v5233 = vmax.f32 %v5185, 0.0
      %v5234 = vmax.f32 %v5188, 0.0
      %v5235 = vmax.f32 %v5190, 0.0
      %v5236 = vmax.f32 %v5193, 0.0
      %v5237 = vmax.f32 %v5195, 0.0
      %v5238 = vmax.f32 %v5198, 0.0
      %v5239 = vmax.f32 %v5200, 0.0
      %v5240 = vmax.f32 %v5203, 0.0
      %v5241 = vmax.f32 %v5205, 0.0
      %v5242 = vmax.f32 %v5208, 0.0
      %v5243 = vmax.f32 %v5210, 0.0
      %v5244 = vmul.f32 %v5212, %v1169
      %v5245 = vmul.f32 %v5213, %v1169
      %v5246 = vmul.f32 %v5214, %v1169
      %v5247 = vmul.f32 %v5215, %v1169
      %v5248 = vmul.f32 %v5216, %v1169
      %v5249 = vmul.f32 %v5217, %v1169
      %v5250 = vmul.f32 %v5218, %v1169
      %v5251 = vmul.f32 %v5219, %v1169
      %v5252 = vmul.f32 %v5220, %v1169
      %v5253 = vmul.f32 %v5221, %v1169
      %v5254 = vmul.f32 %v5222, %v1169
      %v5255 = vmul.f32 %v5223, %v1169
      %v5256 = vmul.f32 %v5224, %v1169
      %v5257 = vmul.f32 %v5225, %v1169
      %v5258 = vmul.f32 %v5226, %v1169
      %v5259 = vmul.f32 %v5227, %v1169
      %v5260 = vmul.f32 %v5228, %v1169
      %v5261 = vmul.f32 %v5229, %v1169
      %v5262 = vmul.f32 %v5230, %v1169
      %v5263 = vmul.f32 %v5231, %v1169
      %v5264 = vmul.f32 %v5232, %v1169
      %v5265 = vmul.f32 %v5233, %v1169
      %v5266 = vmul.f32 %v5234, %v1169
      %v5267 = vmul.f32 %v5235, %v1169
      %v5268 = vmul.f32 %v5236, %v1169
      %v5269 = vmul.f32 %v5237, %v1169
      %v5270 = vmul.f32 %v5238, %v1169
      %v5271 = vmul.f32 %v5239, %v1169
      %v5272 = vmul.f32 %v5240, %v1169
      %v5273 = vmul.f32 %v5241, %v1169
      %v5274 = vmul.f32 %v5242, %v1169
      %v5275 = vmul.f32 %v5243, %v1169
      %5276 = vadd.xlane.f32.xlu0 %v5244
      %v5277 = vpop.xlane.xlu0 %5276
      %5278 = vadd.xlane.f32.xlu0 %v5245
      %v5279 = vpop.xlane.xlu0 %5278
      %5280 = vadd.xlane.f32.xlu0 %v5246
      %v5281 = vpop.xlane.xlu0 %5280
      %5282 = vadd.xlane.f32.xlu0 %v5247
      %v5283 = vpop.xlane.xlu0 %5282
      %5284 = vadd.xlane.f32.xlu0 %v5248
      %v5285 = vpop.xlane.xlu0 %5284
      %5286 = vadd.xlane.f32.xlu0 %v5249
      %v5287 = vpop.xlane.xlu0 %5286
      %5288 = vadd.xlane.f32.xlu0 %v5250
      %v5289 = vpop.xlane.xlu0 %5288
      %5290 = vadd.xlane.f32.xlu0 %v5251
      %v5291 = vpop.xlane.xlu0 %5290
      %5292 = vadd.xlane.f32.xlu0 %v5252
      %v5293 = vpop.xlane.xlu0 %5292
      %5294 = vadd.xlane.f32.xlu0 %v5253
      %v5295 = vpop.xlane.xlu0 %5294
      %5296 = vadd.xlane.f32.xlu0 %v5254
      %v5297 = vpop.xlane.xlu0 %5296
      %5298 = vadd.xlane.f32.xlu0 %v5255
      %v5299 = vpop.xlane.xlu0 %5298
      %5300 = vadd.xlane.f32.xlu0 %v5256
      %v5301 = vpop.xlane.xlu0 %5300
      %5302 = vadd.xlane.f32.xlu0 %v5257
      %v5303 = vpop.xlane.xlu0 %5302
      %5304 = vadd.xlane.f32.xlu0 %v5258
      %v5305 = vpop.xlane.xlu0 %5304
      %5306 = vadd.xlane.f32.xlu0 %v5259
      %v5307 = vpop.xlane.xlu0 %5306
      %5308 = vadd.xlane.f32.xlu0 %v5260
      %v5309 = vpop.xlane.xlu0 %5308
      %5310 = vadd.xlane.f32.xlu0 %v5261
      %v5311 = vpop.xlane.xlu0 %5310
      %5312 = vadd.xlane.f32.xlu0 %v5262
      %v5313 = vpop.xlane.xlu0 %5312
      %5314 = vadd.xlane.f32.xlu0 %v5263
      %v5315 = vpop.xlane.xlu0 %5314
      %5316 = vadd.xlane.f32.xlu0 %v5264
      %v5317 = vpop.xlane.xlu0 %5316
      %5318 = vadd.xlane.f32.xlu0 %v5265
      %v5319 = vpop.xlane.xlu0 %5318
      %5320 = vadd.xlane.f32.xlu0 %v5266
      %v5321 = vpop.xlane.xlu0 %5320
      %5322 = vadd.xlane.f32.xlu0 %v5267
      %v5323 = vpop.xlane.xlu0 %5322
      %5324 = vadd.xlane.f32.xlu0 %v5268
      %v5325 = vpop.xlane.xlu0 %5324
      %5326 = vadd.xlane.f32.xlu0 %v5269
      %v5327 = vpop.xlane.xlu0 %5326
      %5328 = vadd.xlane.f32.xlu0 %v5270
      %v5329 = vpop.xlane.xlu0 %5328
      %5330 = vadd.xlane.f32.xlu0 %v5271
      %v5331 = vpop.xlane.xlu0 %5330
      %5332 = vadd.xlane.f32.xlu0 %v5272
      %v5333 = vpop.xlane.xlu0 %5332
      %5334 = vadd.xlane.f32.xlu0 %v5273
      %v5335 = vpop.xlane.xlu0 %5334
      %5336 = vadd.xlane.f32.xlu0 %v5274
      %v5337 = vpop.xlane.xlu0 %5336
      %5338 = vadd.xlane.f32.xlu0 %v5275
      %v5339 = vpop.xlane.xlu0 %5338
      %v5340 = vmul.f32 %v5212, %v1266
      %v5341 = vmul.f32 %v5213, %v1266
      %v5342 = vmul.f32 %v5214, %v1266
      %v5343 = vmul.f32 %v5215, %v1266
      %v5344 = vmul.f32 %v5216, %v1266
      %v5345 = vmul.f32 %v5217, %v1266
      %v5346 = vmul.f32 %v5218, %v1266
      %v5347 = vmul.f32 %v5219, %v1266
      %v5348 = vmul.f32 %v5220, %v1266
      %v5349 = vmul.f32 %v5221, %v1266
      %v5350 = vmul.f32 %v5222, %v1266
      %v5351 = vmul.f32 %v5223, %v1266
      %v5352 = vmul.f32 %v5224, %v1266
      %v5353 = vmul.f32 %v5225, %v1266
      %v5354 = vmul.f32 %v5226, %v1266
      %v5355 = vmul.f32 %v5227, %v1266
      %v5356 = vmul.f32 %v5228, %v1266
      %v5357 = vmul.f32 %v5229, %v1266
      %v5358 = vmul.f32 %v5230, %v1266
      %v5359 = vmul.f32 %v5231, %v1266
      %v5360 = vmul.f32 %v5232, %v1266
      %v5361 = vmul.f32 %v5233, %v1266
      %v5362 = vmul.f32 %v5234, %v1266
      %v5363 = vmul.f32 %v5235, %v1266
      %v5364 = vmul.f32 %v5236, %v1266
      %v5365 = vmul.f32 %v5237, %v1266
      %v5366 = vmul.f32 %v5238, %v1266
      %v5367 = vmul.f32 %v5239, %v1266
      %v5368 = vmul.f32 %v5240, %v1266
      %v5369 = vmul.f32 %v5241, %v1266
      %v5370 = vmul.f32 %v5242, %v1266
      %v5371 = vmul.f32 %v5243, %v1266
      %5372 = vadd.xlane.f32.xlu0 %v5340
      %v5373 = vpop.xlane.xlu0 %5372
      %5374 = vadd.xlane.f32.xlu0 %v5341
      %v5375 = vpop.xlane.xlu0 %5374
      %5376 = vadd.xlane.f32.xlu0 %v5342
      %v5377 = vpop.xlane.xlu0 %5376
      %5378 = vadd.xlane.f32.xlu0 %v5343
      %v5379 = vpop.xlane.xlu0 %5378
      %5380 = vadd.xlane.f32.xlu0 %v5344
      %v5381 = vpop.xlane.xlu0 %5380
      %5382 = vadd.xlane.f32.xlu0 %v5345
      %v5383 = vpop.xlane.xlu0 %5382
      %5384 = vadd.xlane.f32.xlu0 %v5346
      %v5385 = vpop.xlane.xlu0 %5384
      %5386 = vadd.xlane.f32.xlu0 %v5347
      %v5387 = vpop.xlane.xlu0 %5386
      %5388 = vadd.xlane.f32.xlu0 %v5348
      %v5389 = vpop.xlane.xlu0 %5388
      %5390 = vadd.xlane.f32.xlu0 %v5349
      %v5391 = vpop.xlane.xlu0 %5390
      %5392 = vadd.xlane.f32.xlu0 %v5350
      %v5393 = vpop.xlane.xlu0 %5392
      %5394 = vadd.xlane.f32.xlu0 %v5351
      %v5395 = vpop.xlane.xlu0 %5394
      %5396 = vadd.xlane.f32.xlu0 %v5352
      %v5397 = vpop.xlane.xlu0 %5396
      %5398 = vadd.xlane.f32.xlu0 %v5353
      %v5399 = vpop.xlane.xlu0 %5398
      %5400 = vadd.xlane.f32.xlu0 %v5354
      %v5401 = vpop.xlane.xlu0 %5400
      %5402 = vadd.xlane.f32.xlu0 %v5355
      %v5403 = vpop.xlane.xlu0 %5402
      %5404 = vadd.xlane.f32.xlu0 %v5356
      %v5405 = vpop.xlane.xlu0 %5404
      %5406 = vadd.xlane.f32.xlu0 %v5357
      %v5407 = vpop.xlane.xlu0 %5406
      %5408 = vadd.xlane.f32.xlu0 %v5358
      %v5409 = vpop.xlane.xlu0 %5408
      %5410 = vadd.xlane.f32.xlu0 %v5359
      %v5411 = vpop.xlane.xlu0 %5410
      %5412 = vadd.xlane.f32.xlu0 %v5360
      %v5413 = vpop.xlane.xlu0 %5412
      %5414 = vadd.xlane.f32.xlu0 %v5361
      %v5415 = vpop.xlane.xlu0 %5414
      %5416 = vadd.xlane.f32.xlu0 %v5362
      %v5417 = vpop.xlane.xlu0 %5416
      %5418 = vadd.xlane.f32.xlu0 %v5363
      %v5419 = vpop.xlane.xlu0 %5418
      %5420 = vadd.xlane.f32.xlu0 %v5364
      %v5421 = vpop.xlane.xlu0 %5420
      %5422 = vadd.xlane.f32.xlu0 %v5365
      %v5423 = vpop.xlane.xlu0 %5422
      %5424 = vadd.xlane.f32.xlu0 %v5366
      %v5425 = vpop.xlane.xlu0 %5424
      %5426 = vadd.xlane.f32.xlu0 %v5367
      %v5427 = vpop.xlane.xlu0 %5426
      %5428 = vadd.xlane.f32.xlu0 %v5368
      %v5429 = vpop.xlane.xlu0 %5428
      %5430 = vadd.xlane.f32.xlu0 %v5369
      %v5431 = vpop.xlane.xlu0 %5430
      %5432 = vadd.xlane.f32.xlu0 %v5370
      %v5433 = vpop.xlane.xlu0 %5432
      %5434 = vadd.xlane.f32.xlu0 %v5371
      %v5435 = vpop.xlane.xlu0 %5434
      %v5436 = vmul.f32 %v5212, %v1363
      %v5437 = vmul.f32 %v5213, %v1363
      %v5438 = vmul.f32 %v5214, %v1363
      %v5439 = vmul.f32 %v5215, %v1363
      %v5440 = vmul.f32 %v5216, %v1363
      %v5441 = vmul.f32 %v5217, %v1363
      %v5442 = vmul.f32 %v5218, %v1363
      %v5443 = vmul.f32 %v5219, %v1363
      %v5444 = vmul.f32 %v5220, %v1363
      %v5445 = vmul.f32 %v5221, %v1363
      %v5446 = vmul.f32 %v5222, %v1363
      %v5447 = vmul.f32 %v5223, %v1363
      %v5448 = vmul.f32 %v5224, %v1363
      %v5449 = vmul.f32 %v5225, %v1363
      %v5450 = vmul.f32 %v5226, %v1363
      %v5451 = vmul.f32 %v5227, %v1363
      %v5452 = vmul.f32 %v5228, %v1363
      %v5453 = vmul.f32 %v5229, %v1363
      %v5454 = vmul.f32 %v5230, %v1363
      %v5455 = vmul.f32 %v5231, %v1363
      %v5456 = vmul.f32 %v5232, %v1363
      %v5457 = vmul.f32 %v5233, %v1363
      %v5458 = vmul.f32 %v5234, %v1363
      %v5459 = vmul.f32 %v5235, %v1363
      %v5460 = vmul.f32 %v5236, %v1363
      %v5461 = vmul.f32 %v5237, %v1363
      %v5462 = vmul.f32 %v5238, %v1363
      %v5463 = vmul.f32 %v5239, %v1363
      %v5464 = vmul.f32 %v5240, %v1363
      %v5465 = vmul.f32 %v5241, %v1363
      %v5466 = vmul.f32 %v5242, %v1363
      %v5467 = vmul.f32 %v5243, %v1363
      %5468 = vadd.xlane.f32.xlu0 %v5436
      %v5469 = vpop.xlane.xlu0 %5468
      %5470 = vadd.xlane.f32.xlu0 %v5437
      %v5471 = vpop.xlane.xlu0 %5470
      %5472 = vadd.xlane.f32.xlu0 %v5438
      %v5473 = vpop.xlane.xlu0 %5472
      %5474 = vadd.xlane.f32.xlu0 %v5439
      %v5475 = vpop.xlane.xlu0 %5474
      %5476 = vadd.xlane.f32.xlu0 %v5440
      %v5477 = vpop.xlane.xlu0 %5476
      %5478 = vadd.xlane.f32.xlu0 %v5441
      %v5479 = vpop.xlane.xlu0 %5478
      %5480 = vadd.xlane.f32.xlu0 %v5442
      %v5481 = vpop.xlane.xlu0 %5480
      %5482 = vadd.xlane.f32.xlu0 %v5443
      %v5483 = vpop.xlane.xlu0 %5482
      %5484 = vadd.xlane.f32.xlu0 %v5444
      %v5485 = vpop.xlane.xlu0 %5484
      %5486 = vadd.xlane.f32.xlu0 %v5445
      %v5487 = vpop.xlane.xlu0 %5486
      %5488 = vadd.xlane.f32.xlu0 %v5446
      %v5489 = vpop.xlane.xlu0 %5488
      %5490 = vadd.xlane.f32.xlu0 %v5447
      %v5491 = vpop.xlane.xlu0 %5490
      %5492 = vadd.xlane.f32.xlu0 %v5448
      %v5493 = vpop.xlane.xlu0 %5492
      %5494 = vadd.xlane.f32.xlu0 %v5449
      %v5495 = vpop.xlane.xlu0 %5494
      %5496 = vadd.xlane.f32.xlu0 %v5450
      %v5497 = vpop.xlane.xlu0 %5496
      %5498 = vadd.xlane.f32.xlu0 %v5451
      %v5499 = vpop.xlane.xlu0 %5498
      %5500 = vadd.xlane.f32.xlu0 %v5452
      %v5501 = vpop.xlane.xlu0 %5500
      %5502 = vadd.xlane.f32.xlu0 %v5453
      %v5503 = vpop.xlane.xlu0 %5502
      %5504 = vadd.xlane.f32.xlu0 %v5454
      %v5505 = vpop.xlane.xlu0 %5504
      %5506 = vadd.xlane.f32.xlu0 %v5455
      %v5507 = vpop.xlane.xlu0 %5506
      %5508 = vadd.xlane.f32.xlu0 %v5456
      %v5509 = vpop.xlane.xlu0 %5508
      %5510 = vadd.xlane.f32.xlu0 %v5457
      %v5511 = vpop.xlane.xlu0 %5510
      %5512 = vadd.xlane.f32.xlu0 %v5458
      %v5513 = vpop.xlane.xlu0 %5512
      %5514 = vadd.xlane.f32.xlu0 %v5459
      %v5515 = vpop.xlane.xlu0 %5514
      %5516 = vadd.xlane.f32.xlu0 %v5460
      %v5517 = vpop.xlane.xlu0 %5516
      %5518 = vadd.xlane.f32.xlu0 %v5461
      %v5519 = vpop.xlane.xlu0 %5518
      %5520 = vadd.xlane.f32.xlu0 %v5462
      %v5521 = vpop.xlane.xlu0 %5520
      %5522 = vadd.xlane.f32.xlu0 %v5463
      %v5523 = vpop.xlane.xlu0 %5522
      %5524 = vadd.xlane.f32.xlu0 %v5464
      %v5525 = vpop.xlane.xlu0 %5524
      %5526 = vadd.xlane.f32.xlu0 %v5465
      %v5527 = vpop.xlane.xlu0 %5526
      %5528 = vadd.xlane.f32.xlu0 %v5466
      %v5529 = vpop.xlane.xlu0 %5528
      %5530 = vadd.xlane.f32.xlu0 %v5467
      %v5531 = vpop.xlane.xlu0 %5530
      %v5532 = vmul.f32 %v5212, %v1460
      %v5533 = vmul.f32 %v5213, %v1460
      %v5534 = vmul.f32 %v5214, %v1460
      %v5535 = vmul.f32 %v5215, %v1460
      %v5536 = vmul.f32 %v5216, %v1460
      %v5537 = vmul.f32 %v5217, %v1460
      %v5538 = vmul.f32 %v5218, %v1460
      %v5539 = vmul.f32 %v5219, %v1460
      %v5540 = vmul.f32 %v5220, %v1460
      %v5541 = vmul.f32 %v5221, %v1460
      %v5542 = vmul.f32 %v5222, %v1460
      %v5543 = vmul.f32 %v5223, %v1460
      %v5544 = vmul.f32 %v5224, %v1460
      %v5545 = vmul.f32 %v5225, %v1460
      %v5546 = vmul.f32 %v5226, %v1460
      %v5547 = vmul.f32 %v5227, %v1460
      %v5548 = vmul.f32 %v5228, %v1460
      %v5549 = vmul.f32 %v5229, %v1460
      %v5550 = vmul.f32 %v5230, %v1460
      %v5551 = vmul.f32 %v5231, %v1460
      %v5552 = vmul.f32 %v5232, %v1460
      %v5553 = vmul.f32 %v5233, %v1460
      %v5554 = vmul.f32 %v5234, %v1460
      %v5555 = vmul.f32 %v5235, %v1460
      %v5556 = vmul.f32 %v5236, %v1460
      %v5557 = vmul.f32 %v5237, %v1460
      %v5558 = vmul.f32 %v5238, %v1460
      %v5559 = vmul.f32 %v5239, %v1460
      %v5560 = vmul.f32 %v5240, %v1460
      %v5561 = vmul.f32 %v5241, %v1460
      %v5562 = vmul.f32 %v5242, %v1460
      %v5563 = vmul.f32 %v5243, %v1460
      %5564 = vadd.xlane.f32.xlu0 %v5532
      %v5565 = vpop.xlane.xlu0 %5564
      %5566 = vadd.xlane.f32.xlu0 %v5533
      %v5567 = vpop.xlane.xlu0 %5566
      %5568 = vadd.xlane.f32.xlu0 %v5534
      %v5569 = vpop.xlane.xlu0 %5568
      %5570 = vadd.xlane.f32.xlu0 %v5535
      %v5571 = vpop.xlane.xlu0 %5570
      %5572 = vadd.xlane.f32.xlu0 %v5536
      %v5573 = vpop.xlane.xlu0 %5572
      %5574 = vadd.xlane.f32.xlu0 %v5537
      %v5575 = vpop.xlane.xlu0 %5574
      %5576 = vadd.xlane.f32.xlu0 %v5538
      %v5577 = vpop.xlane.xlu0 %5576
      %5578 = vadd.xlane.f32.xlu0 %v5539
      %v5579 = vpop.xlane.xlu0 %5578
      %5580 = vadd.xlane.f32.xlu0 %v5540
      %v5581 = vpop.xlane.xlu0 %5580
      %5582 = vadd.xlane.f32.xlu0 %v5541
      %v5583 = vpop.xlane.xlu0 %5582
      %5584 = vadd.xlane.f32.xlu0 %v5542
      %v5585 = vpop.xlane.xlu0 %5584
      %5586 = vadd.xlane.f32.xlu0 %v5543
      %v5587 = vpop.xlane.xlu0 %5586
      %5588 = vadd.xlane.f32.xlu0 %v5544
      %v5589 = vpop.xlane.xlu0 %5588
      %5590 = vadd.xlane.f32.xlu0 %v5545
      %v5591 = vpop.xlane.xlu0 %5590
      %5592 = vadd.xlane.f32.xlu0 %v5546
      %v5593 = vpop.xlane.xlu0 %5592
      %5594 = vadd.xlane.f32.xlu0 %v5547
      %v5595 = vpop.xlane.xlu0 %5594
      %5596 = vadd.xlane.f32.xlu0 %v5548
      %v5597 = vpop.xlane.xlu0 %5596
      %5598 = vadd.xlane.f32.xlu0 %v5549
      %v5599 = vpop.xlane.xlu0 %5598
      %5600 = vadd.xlane.f32.xlu0 %v5550
      %v5601 = vpop.xlane.xlu0 %5600
      %5602 = vadd.xlane.f32.xlu0 %v5551
      %v5603 = vpop.xlane.xlu0 %5602
      %5604 = vadd.xlane.f32.xlu0 %v5552
      %v5605 = vpop.xlane.xlu0 %5604
      %5606 = vadd.xlane.f32.xlu0 %v5553
      %v5607 = vpop.xlane.xlu0 %5606
      %5608 = vadd.xlane.f32.xlu0 %v5554
      %v5609 = vpop.xlane.xlu0 %5608
      %5610 = vadd.xlane.f32.xlu0 %v5555
      %v5611 = vpop.xlane.xlu0 %5610
      %5612 = vadd.xlane.f32.xlu0 %v5556
      %v5613 = vpop.xlane.xlu0 %5612
      %5614 = vadd.xlane.f32.xlu0 %v5557
      %v5615 = vpop.xlane.xlu0 %5614
      %5616 = vadd.xlane.f32.xlu0 %v5558
      %v5617 = vpop.xlane.xlu0 %5616
      %5618 = vadd.xlane.f32.xlu0 %v5559
      %v5619 = vpop.xlane.xlu0 %5618
      %5620 = vadd.xlane.f32.xlu0 %v5560
      %v5621 = vpop.xlane.xlu0 %5620
      %5622 = vadd.xlane.f32.xlu0 %v5561
      %v5623 = vpop.xlane.xlu0 %5622
      %5624 = vadd.xlane.f32.xlu0 %v5562
      %v5625 = vpop.xlane.xlu0 %5624
      %5626 = vadd.xlane.f32.xlu0 %v5563
      %v5627 = vpop.xlane.xlu0 %5626
      %v5628 = vsel %vm1557, %v5277, %v5373
      %v5629 = vsel %vm1557, %v5279, %v5375
      %v5630 = vsel %vm1557, %v5281, %v5377
      %v5631 = vsel %vm1557, %v5283, %v5379
      %v5632 = vsel %vm1557, %v5285, %v5381
      %v5633 = vsel %vm1557, %v5287, %v5383
      %v5634 = vsel %vm1557, %v5289, %v5385
      %v5635 = vsel %vm1557, %v5291, %v5387
      %v5636 = vsel %vm1557, %v5293, %v5389
      %v5637 = vsel %vm1557, %v5295, %v5391
      %v5638 = vsel %vm1557, %v5297, %v5393
      %v5639 = vsel %vm1557, %v5299, %v5395
      %v5640 = vsel %vm1557, %v5301, %v5397
      %v5641 = vsel %vm1557, %v5303, %v5399
      %v5642 = vsel %vm1557, %v5305, %v5401
      %v5643 = vsel %vm1557, %v5307, %v5403
      %v5644 = vsel %vm1557, %v5309, %v5405
      %v5645 = vsel %vm1557, %v5311, %v5407
      %v5646 = vsel %vm1557, %v5313, %v5409
      %v5647 = vsel %vm1557, %v5315, %v5411
      %v5648 = vsel %vm1557, %v5317, %v5413
      %v5649 = vsel %vm1557, %v5319, %v5415
      %v5650 = vsel %vm1557, %v5321, %v5417
      %v5651 = vsel %vm1557, %v5323, %v5419
      %v5652 = vsel %vm1557, %v5325, %v5421
      %v5653 = vsel %vm1557, %v5327, %v5423
      %v5654 = vsel %vm1557, %v5329, %v5425
      %v5655 = vsel %vm1557, %v5331, %v5427
      %v5656 = vsel %vm1557, %v5333, %v5429
      %v5657 = vsel %vm1557, %v5335, %v5431
      %v5658 = vsel %vm1557, %v5337, %v5433
      %v5659 = vsel %vm1557, %v5339, %v5435
      %v5660 = vsel %vm1590, %v5628, %v5469
      %v5661 = vsel %vm1590, %v5629, %v5471
      %v5662 = vsel %vm1590, %v5630, %v5473
      %v5663 = vsel %vm1590, %v5631, %v5475
      %v5664 = vsel %vm1590, %v5632, %v5477
      %v5665 = vsel %vm1590, %v5633, %v5479
      %v5666 = vsel %vm1590, %v5634, %v5481
      %v5667 = vsel %vm1590, %v5635, %v5483
      %v5668 = vsel %vm1590, %v5636, %v5485
      %v5669 = vsel %vm1590, %v5637, %v5487
      %v5670 = vsel %vm1590, %v5638, %v5489
      %v5671 = vsel %vm1590, %v5639, %v5491
      %v5672 = vsel %vm1590, %v5640, %v5493
      %v5673 = vsel %vm1590, %v5641, %v5495
      %v5674 = vsel %vm1590, %v5642, %v5497
      %v5675 = vsel %vm1590, %v5643, %v5499
      %v5676 = vsel %vm1590, %v5644, %v5501
      %v5677 = vsel %vm1590, %v5645, %v5503
      %v5678 = vsel %vm1590, %v5646, %v5505
      %v5679 = vsel %vm1590, %v5647, %v5507
      %v5680 = vsel %vm1590, %v5648, %v5509
      %v5681 = vsel %vm1590, %v5649, %v5511
      %v5682 = vsel %vm1590, %v5650, %v5513
      %v5683 = vsel %vm1590, %v5651, %v5515
      %v5684 = vsel %vm1590, %v5652, %v5517
      %v5685 = vsel %vm1590, %v5653, %v5519
      %v5686 = vsel %vm1590, %v5654, %v5521
      %v5687 = vsel %vm1590, %v5655, %v5523
      %v5688 = vsel %vm1590, %v5656, %v5525
      %v5689 = vsel %vm1590, %v5657, %v5527
      %v5690 = vsel %vm1590, %v5658, %v5529
      %v5691 = vsel %vm1590, %v5659, %v5531
      %v5692 = vsel %vm1623, %v5660, %v5565
      %v5693 = vsel %vm1623, %v5661, %v5567
      %v5694 = vsel %vm1623, %v5662, %v5569
      %v5695 = vsel %vm1623, %v5663, %v5571
      %v5696 = vsel %vm1623, %v5664, %v5573
      %v5697 = vsel %vm1623, %v5665, %v5575
      %v5698 = vsel %vm1623, %v5666, %v5577
      %v5699 = vsel %vm1623, %v5667, %v5579
      %v5700 = vsel %vm1623, %v5668, %v5581
      %v5701 = vsel %vm1623, %v5669, %v5583
      %v5702 = vsel %vm1623, %v5670, %v5585
      %v5703 = vsel %vm1623, %v5671, %v5587
      %v5704 = vsel %vm1623, %v5672, %v5589
      %v5705 = vsel %vm1623, %v5673, %v5591
      %v5706 = vsel %vm1623, %v5674, %v5593
      %v5707 = vsel %vm1623, %v5675, %v5595
      %v5708 = vsel %vm1623, %v5676, %v5597
      %v5709 = vsel %vm1623, %v5677, %v5599
      %v5710 = vsel %vm1623, %v5678, %v5601
      %v5711 = vsel %vm1623, %v5679, %v5603
      %v5712 = vsel %vm1623, %v5680, %v5605
      %v5713 = vsel %vm1623, %v5681, %v5607
      %v5714 = vsel %vm1623, %v5682, %v5609
      %v5715 = vsel %vm1623, %v5683, %v5611
      %v5716 = vsel %vm1623, %v5684, %v5613
      %v5717 = vsel %vm1623, %v5685, %v5615
      %v5718 = vsel %vm1623, %v5686, %v5617
      %v5719 = vsel %vm1623, %v5687, %v5619
      %v5720 = vsel %vm1623, %v5688, %v5621
      %v5721 = vsel %vm1623, %v5689, %v5623
      %v5722 = vsel %vm1623, %v5690, %v5625
      %v5723 = vsel %vm1623, %v5691, %v5627
      %v5724 = vadd.f32 %v5692, %v1657
      %v5725 = vadd.f32 %v5693, %v1657
      %v5726 = vadd.f32 %v5694, %v1657
      %v5727 = vadd.f32 %v5695, %v1657
      %v5728 = vadd.f32 %v5696, %v1657
      %v5729 = vadd.f32 %v5697, %v1657
      %v5730 = vadd.f32 %v5698, %v1657
      %v5731 = vadd.f32 %v5699, %v1657
      %v5732 = vadd.f32 %v5700, %v1657
      %v5733 = vadd.f32 %v5701, %v1657
      %v5734 = vadd.f32 %v5702, %v1657
      %v5735 = vadd.f32 %v5703, %v1657
      %v5736 = vadd.f32 %v5704, %v1657
      %v5737 = vadd.f32 %v5705, %v1657
      %v5738 = vadd.f32 %v5706, %v1657
      %v5739 = vadd.f32 %v5707, %v1657
      %v5740 = vadd.f32 %v5708, %v1657
      %v5741 = vadd.f32 %v5709, %v1657
      %v5742 = vadd.f32 %v5710, %v1657
      %v5743 = vadd.f32 %v5711, %v1657
      %v5744 = vadd.f32 %v5712, %v1657
      %v5745 = vadd.f32 %v5713, %v1657
      %v5746 = vadd.f32 %v5714, %v1657
      %v5747 = vadd.f32 %v5715, %v1657
      %v5748 = vadd.f32 %v5716, %v1657
      %v5749 = vadd.f32 %v5717, %v1657
      %v5750 = vadd.f32 %v5718, %v1657
      %v5751 = vadd.f32 %v5719, %v1657
      %v5752 = vadd.f32 %v5720, %v1657
      %v5753 = vadd.f32 %v5721, %v1657
      %v5754 = vadd.f32 %v5722, %v1657
      %v5755 = vadd.f32 %v5723, %v1657
      %s5756 = scalar_lea.vmem %s280, 768
      %5757 = vst.msk [vmem:[%s5756] sm:$0xff] %vm1691, %v5724
      %5758 = vst.msk [vmem:[%s5756 + $0x8] sm:$0xff] %vm1691, %v5725
      %5759 = vst.msk [vmem:[%s5756 + $0x10] sm:$0xff] %vm1691, %v5726
      %5760 = vst.msk [vmem:[%s5756 + $0x18] sm:$0xff] %vm1691, %v5727
      %5761 = vst.msk [vmem:[%s5756 + $0x20] sm:$0xff] %vm1691, %v5728
      %5762 = vst.msk [vmem:[%s5756 + $0x28] sm:$0xff] %vm1691, %v5729
      %5763 = vst.msk [vmem:[%s5756 + $0x30] sm:$0xff] %vm1691, %v5730
      %5764 = vst.msk [vmem:[%s5756 + $0x38] sm:$0xff] %vm1691, %v5731
      %5765 = vst.msk [vmem:[%s5756 + $0x40] sm:$0xff] %vm1691, %v5732
      %5766 = vst.msk [vmem:[%s5756 + $0x48] sm:$0xff] %vm1691, %v5733
      %5767 = vst.msk [vmem:[%s5756 + $0x50] sm:$0xff] %vm1691, %v5734
      %5768 = vst.msk [vmem:[%s5756 + $0x58] sm:$0xff] %vm1691, %v5735
      %5769 = vst.msk [vmem:[%s5756 + $0x60] sm:$0xff] %vm1691, %v5736
      %5770 = vst.msk [vmem:[%s5756 + $0x68] sm:$0xff] %vm1691, %v5737
      %5771 = vst.msk [vmem:[%s5756 + $0x70] sm:$0xff] %vm1691, %v5738
      %5772 = vst.msk [vmem:[%s5756 + $0x78] sm:$0xff] %vm1691, %v5739
      %5773 = vst.msk [vmem:[%s5756 + $0x80] sm:$0xff] %vm1691, %v5740
      %5774 = vst.msk [vmem:[%s5756 + $0x88] sm:$0xff] %vm1691, %v5741
      %5775 = vst.msk [vmem:[%s5756 + $0x90] sm:$0xff] %vm1691, %v5742
      %5776 = vst.msk [vmem:[%s5756 + $0x98] sm:$0xff] %vm1691, %v5743
      %5777 = vst.msk [vmem:[%s5756 + $0xa0] sm:$0xff] %vm1691, %v5744
      %5778 = vst.msk [vmem:[%s5756 + $0xa8] sm:$0xff] %vm1691, %v5745
      %5779 = vst.msk [vmem:[%s5756 + $0xb0] sm:$0xff] %vm1691, %v5746
      %5780 = vst.msk [vmem:[%s5756 + $0xb8] sm:$0xff] %vm1691, %v5747
      %5781 = vst.msk [vmem:[%s5756 + $0xc0] sm:$0xff] %vm1691, %v5748
      %5782 = vst.msk [vmem:[%s5756 + $0xc8] sm:$0xff] %vm1691, %v5749
      %5783 = vst.msk [vmem:[%s5756 + $0xd0] sm:$0xff] %vm1691, %v5750
      %5784 = vst.msk [vmem:[%s5756 + $0xd8] sm:$0xff] %vm1691, %v5751
      %5785 = vst.msk [vmem:[%s5756 + $0xe0] sm:$0xff] %vm1691, %v5752
      %5786 = vst.msk [vmem:[%s5756 + $0xe8] sm:$0xff] %vm1691, %v5753
      %5787 = vst.msk [vmem:[%s5756 + $0xf0] sm:$0xff] %vm1691, %v5754
      %5788 = vst.msk [vmem:[%s5756 + $0xf8] sm:$0xff] %vm1691, %v5755
      %s5789 = smul.u32 128, %s18
      %p5790 = scmp.lt.s32.totalorder %s5789, 255
      %s5791 = scalar_select %p5790, %s5789, 255
      %s5792 = smul.addr %s5791, 8
      %s5793 = scalar_lea.vmem %s7, %s5792
      // Predicated region
      $region49: #{tpu_custom_call.1} parent=47 // pred_check
        %p5794 = pneg %p188
      $region50: #{tpu_custom_call.1} parent=47 // pred_check_branch
        %5796 = sbr.rel (%p5794) target = $region52
      $region51: #{tpu_custom_call.1} parent=47 // pred_region
        %s5797 = smul.u32 128, %s18
      $region52: #{tpu_custom_call.1} parent=47 // pred_fallthru
        _
    $region48: #{tpu_custom_call.1} parent=5 // pred_fallthru
      _
    %p5798 = scmp.le.s32.totalorder 2, %s13
    // Predicated region
    $region53: #{tpu_custom_call.1} parent=5 // pred_check
      %p5799 = pneg %p5798
    $region54: #{tpu_custom_call.1} parent=5 // pred_check_branch
      %5801 = sbr.rel (%p5799) target = $region56
    $region55: #{tpu_custom_call.1} parent=5 // pred_region
      %s5802 = ssub.s32 %s13, 2
      // Predicated region
      $region57: #{tpu_custom_call.1} parent=55 // pred_check
        %p5803 = pneg %p194
      $region58: #{tpu_custom_call.1} parent=55 // pred_check_branch
        %5805 = sbr.rel (%p5803) target = $region60
      $region59: #{tpu_custom_call.1} parent=55 // pred_region
        %s5806 = smul.u32 128, %s19
        %p5807 = scmp.lt.s32.totalorder %s5806, 255
        %s5808 = scalar_select %p5807, %s5806, 255
        %s5809 = smul.addr %s5808, 8
        %s5810 = scalar_lea.vmem %s7, %s5809
      $region60: #{tpu_custom_call.1} parent=55 // pred_fallthru
        _
    $region56: #{tpu_custom_call.1} parent=5 // pred_fallthru
      _
  $region6: #{tpu_custom_call.1} parent=0 // loop_footer
    %s17 = sadd.s32 1, %s13
  $region7: #{tpu_custom_call.1} parent=0 // loop_footer_branch
    %12 = sbr.rel target = $region3
  $region8: #{tpu_custom_call.1} parent=0 // loop_exit
    _

</llo_original>
